<compile_context>
chip_gen: v7x
topology: tpu7x:2x2x1
jax: 0.10.0
libtpu: 0.0.40
codegen_flags: <defaults>
</compile_context>

<pallas_src>
import math
import functools

import numpy as np
import jax
import jax.numpy as jnp
from jax.experimental import pallas as pl
from jax.experimental.pallas import tpu as pltpu


# ----------------------------------------------------------------------------
# In-kernel helpers
# ----------------------------------------------------------------------------
def _layer_norm(x, g, b, eps=1e-5):
    mu = jnp.mean(x, axis=-1, keepdims=True)
    xc = x - mu
    var = jnp.mean(xc * xc, axis=-1, keepdims=True)
    return xc * jax.lax.rsqrt(var + eps) * g + b


# ----------------------------------------------------------------------------
# Fused kernel: grid=(3,) over modality branches ("parallel"); one branch per step
# ----------------------------------------------------------------------------
def _fused_kernel(H,
                  x_ref, pe_ref, mask_ref,
                  w_in_ref, b_in_ref,
                  wqkv_ref, bqkv_ref, wo_ref, bo_ref,
                  g1_ref, bt1_ref,
                  w1_ref, b1_ref, w2_ref, b2_ref, g2_ref, bt2_ref,
                  wsel_ref, bdec_ref, wmm_ref,
                  out_ref):
    f32 = jnp.float32
    TB = x_ref.shape[1]                      # T * B rows, lane-dense slab
    D = pe_ref.shape[1]
    dh = D // H

    # ---- input linear + positional encoding ----
    x = x_ref[0]                                                        # (TB, Fpad)
    y = (jnp.dot(x, w_in_ref[0], preferred_element_type=f32)
         + b_in_ref[0] + pe_ref[...])                                   # (TB, D)

    # ---- fused QKV projection (Q scale pre-folded into first D columns) ----
    qkv = jnp.dot(y, wqkv_ref[0], preferred_element_type=f32) + bqkv_ref[0]   # (TB, 3D)

    # ---- per-head 2-D masked attention over the (TB, TB) score matrix ----
    # mask is block-diagonal per frame (0 within a frame, -1e9 across frames), so this
    # reproduces attention over the batch axis independently per frame.
    mask = mask_ref[...]                                                 # (TB, TB), shared
    heads = []
    for h in range(H):                                                   # H small, static
        q = qkv[:, h * dh:(h + 1) * dh]                                  # (TB, dh)
        k = qkv[:, D + h * dh:D + (h + 1) * dh]
        v = qkv[:, 2 * D + h * dh:2 * D + (h + 1) * dh]
        s = jnp.dot(q, k.T, preferred_element_type=f32) + mask           # (TB, TB)
        s = s - jnp.max(s, axis=-1, keepdims=True)
        e = jnp.exp(s)                                                   # masked lanes -> 0
        p = e * pl.reciprocal(jnp.sum(e, axis=-1, keepdims=True), approx=True)
        heads.append(jnp.dot(p, v, preferred_element_type=f32))          # (TB, dh)
    a = jnp.concatenate(heads, axis=-1)                                  # (TB, D)
    attn = jnp.dot(a, wo_ref[0], preferred_element_type=f32) + bo_ref[0]

    # ---- residual + layernorm 1 ----
    z = _layer_norm(y + attn, g1_ref[0], bt1_ref[0])

    # ---- chunked feed-forward (bf16 weights, f32 accumulation) ----
    z_b = z.astype(jnp.bfloat16)
    n_chunks = w1_ref.shape[1]
    acc0 = jnp.zeros((TB, D), f32) + b2_ref[0]                           # hoisted broadcast

    def ff_body(i, acc):
        hdn = (jnp.dot(z_b, w1_ref[0, i], preferred_element_type=f32)
               + b1_ref[0, i])                                           # (TB, CH)
        hdn = jnp.maximum(hdn, 0.0)
        return acc + jnp.dot(hdn.astype(jnp.bfloat16), w2_ref[0, i],
                             preferred_element_type=f32)                 # (TB, D)

    ff = jax.lax.fori_loop(0, n_chunks, ff_body, acc0, unroll=True)
    z = _layer_norm(z + ff, g2_ref[0], bt2_ref[0])

    # ---- frame decoder Linear(T, 1) folded into a (B, TB) selection matmul ----
    dec = jnp.dot(wsel_ref[0], z, preferred_element_type=f32) + bdec_ref[0]   # (B, D)

    # ---- per-branch multimodal partial logit (sum + sigmoid done in the wrapper) ----
    out_ref[0] = jnp.dot(dec, wmm_ref[0], preferred_element_type=f32)         # (B, 1)


# ----------------------------------------------------------------------------
# BlockSpec helpers
# ----------------------------------------------------------------------------
def _spec_branch(arr):
    zeros = (0,) * (arr.ndim - 1)

    def imap(g):
        return (g,) + zeros

    return pl.BlockSpec((1,) + tuple(arr.shape[1:]), imap)


def _spec_shared(arr):
    zeros = (0,) * arr.ndim

    def imap(g):
        return zeros

    return pl.BlockSpec(tuple(arr.shape), imap)


# ----------------------------------------------------------------------------
# Parameter prep: stack / pad / fold Q scale / pre-chunk bf16 FF weights / build mask
# ----------------------------------------------------------------------------
def build_fused(params, T, B, nhead, ff_chunk=512):
    pe = params['pe']                      # (B, D)
    D = pe.shape[1]
    dh = D // nhead
    scale = 1.0 / math.sqrt(dh)
    branches = [params['m1'], params['m2'], params['m3']]

    Fpad = max(br['w_in'].shape[0] for br in branches)
    Fpad = int(np.ceil(Fpad / 8) * 8)

    FF = branches[0]['w1'].shape[1]
    CH = ff_chunk if FF % ff_chunk == 0 else FF
    n_chunks = FF // CH

    def stack(fn):
        return jnp.stack([fn(br) for br in branches], axis=0)

    def fold_q_scale(w):                   # scale the Q columns / Q bias (first D entries)
        return jnp.concatenate([w[..., :D] * scale, w[..., D:]], axis=-1)

    def sel_matrix(br):                    # Linear(T,1) over frames -> (B, T*B) selection
        wv = br['w_dec'][:, 0, 0]          # (T,)
        return (wv[None, :, None]
                * jnp.eye(B, dtype=jnp.float32)[:, None, :]).reshape(B, T * B)

    # block-diagonal per-frame attention mask on the (TB, TB) score matrix
    frame_id = jnp.arange(T * B, dtype=jnp.int32) // B
    attn_mask = jnp.where(frame_id[:, None] == frame_id[None, :],
                          0.0, -1e9).astype(jnp.float32)

    return dict(
        T=T, B=B, H=nhead, Fpad=Fpad,
        pe_full=jnp.tile(pe, (T, 1)),                                    # (T*B, D)
        attn_mask=attn_mask,                                             # (T*B, T*B)
        w_in=jnp.stack([jnp.pad(br['w_in'],
                                ((0, Fpad - br['w_in'].shape[0]), (0, 0)))
                        for br in branches]),
        b_in=stack(lambda br: br['b_in']),
        w_qkv=stack(lambda br: fold_q_scale(br['w_qkv'])),               # (3, D, 3D)
        b_qkv=stack(lambda br: fold_q_scale(br['b_qkv'])),               # (3, 1, 3D)
        w_o=stack(lambda br: br['w_o']),
        b_o=stack(lambda br: br['b_o']),
        g1=stack(lambda br: br['g1']), bt1=stack(lambda br: br['bt1']),
        # FF weights pre-chunked along the hidden dim; bf16 for HBM bytes
        w1=stack(lambda br: br['w1'].reshape(D, n_chunks, CH)
                 .transpose(1, 0, 2)).astype(jnp.bfloat16),              # (3, n_chunks, D, CH)
        b1=stack(lambda br: br['b1'].reshape(n_chunks, 1, CH)),          # (3, n_chunks, 1, CH)
        w2=stack(lambda br: br['w2'].reshape(n_chunks, CH, D)
                 ).astype(jnp.bfloat16),                                 # (3, n_chunks, CH, D)
        b2=stack(lambda br: br['b2']),
        g2=stack(lambda br: br['g2']), bt2=stack(lambda br: br['bt2']),
        w_sel=stack(sel_matrix),                                         # (3, B, T*B)
        b_dec=stack(lambda br: br['b_dec']),                             # (3, 1, 1)
        w_mm=params['w_mm'].reshape(3, D, 1),
        b_mm=params['b_mm'],                                             # (1, 1)
    )


def _stack_inputs(srcs, T, B, Fpad):
    slabs = []
    for s in srcs:
        f = s.shape[2]
        x = jnp.transpose(s, (1, 0, 2)).reshape(T * B, f)                # row n = t*B + b
        slabs.append(jnp.pad(x, ((0, 0), (0, Fpad - f))))
    return jnp.stack(slabs, axis=0)                                      # (3, T*B, Fpad)


# ----------------------------------------------------------------------------
# Forward wrapper: one fused pallas_call + trivial 3-way sum / sigmoid epilogue
# ----------------------------------------------------------------------------
def transformer_forward(fused, src1, src2, src3):
    T, B, H = fused['T'], fused['B'], fused['H']
    x_stack = _stack_inputs((src1, src2, src3), T, B, fused['Fpad'])

    args = (x_stack, fused['pe_full'], fused['attn_mask'],
            fused['w_in'], fused['b_in'],
            fused['w_qkv'], fused['b_qkv'], fused['w_o'], fused['b_o'],
            fused['g1'], fused['bt1'],
            fused['w1'], fused['b1'], fused['w2'], fused['b2'],
            fused['g2'], fused['bt2'],
            fused['w_sel'], fused['b_dec'], fused['w_mm'])
    shared_idx = (1, 2)                       # pe_full, attn_mask (constant index_map)
    in_specs = [_spec_shared(a) if i in shared_idx else _spec_branch(a)
                for i, a in enumerate(args)]

    branch_logits = pl.pallas_call(
        functools.partial(_fused_kernel, H),
        out_shape=jax.ShapeDtypeStruct((3, B, 1), jnp.float32),
        grid_spec=pltpu.PrefetchScalarGridSpec(
            num_scalar_prefetch=0,
            grid=(3,),
            in_specs=in_specs,
            out_specs=pl.BlockSpec((1, B, 1), lambda g: (g, 0, 0)),
        ),
        # "parallel": branches are independent -> shardable across the two TCs on v7x.
        compiler_params=pltpu.CompilerParams(dimension_semantics=("parallel",)),
    )(*args)

    logits = jnp.sum(branch_logits[:, :, 0], axis=0) + fused['b_mm'][0, 0]
    return jax.nn.sigmoid(logits)                                        # (B,)


# ----------------------------------------------------------------------------
# Deterministic parameter init (shapes follow the PyTorch module; values synthetic)
# ----------------------------------------------------------------------------
def init_branch_params(key, F, D, T, FF):
    ks = jax.random.split(key, 10)
    u = lambda k, shape, s=0.1: jax.random.uniform(k, shape, jnp.float32, -s, s)
    return dict(
        w_in=u(ks[0], (F, D)),               # m*_input_linear.weight.T (uniform(-0.1,0.1))
        b_in=jnp.zeros((1, D), jnp.float32),
        w_qkv=u(ks[1], (D, 3 * D)),          # MHA in_proj_weight.T
        b_qkv=u(ks[2], (1, 3 * D), 0.05),
        w_o=u(ks[3], (D, D)),                # MHA out_proj.weight.T
        b_o=u(ks[4], (1, D), 0.05),
        g1=jnp.ones((1, D), jnp.float32), bt1=jnp.zeros((1, D), jnp.float32),
        w1=u(ks[5], (D, FF), 0.05), b1=u(ks[6], (1, FF), 0.05),
        w2=u(ks[7], (FF, D), 0.05), b2=u(ks[8], (1, D), 0.05),
        g2=jnp.ones((1, D), jnp.float32), bt2=jnp.zeros((1, D), jnp.float32),
        w_dec=u(ks[9], (T, 1, 1)),           # m*_decoder.weight
        b_dec=jnp.zeros((1, 1), jnp.float32),
    )


def build_positional_encoding(B, D):
    # PositionalEncoding (even d_model branch); only the first B rows are used (pe[:x.size(0)]).
    pos = jnp.arange(B, dtype=jnp.float32)[:, None]
    div = jnp.exp(jnp.arange(0, D, 2, dtype=jnp.float32) * (-math.log(10000.0) / D))
    pe = jnp.zeros((B, D), jnp.float32)
    pe = pe.at[:, 0::2].set(jnp.sin(pos * div))
    pe = pe.at[:, 1::2].set(jnp.cos(pos * div))
    return pe


# ----------------------------------------------------------------------------
# Pure-JAX reference (mirrors the PyTorch forward in (B, T, D) layout) for checking
# ----------------------------------------------------------------------------
def _ref_branch(src, pe, p, nhead):
    B, T, F = src.shape
    D = pe.shape[1]
    dh = D // nhead
    x = src @ p['w_in'] + p['b_in']
    x = x + pe[:, None, :]
    qkv = x @ p['w_qkv'] + p['b_qkv']
    q = qkv[..., :D] / math.sqrt(dh)
    k = qkv[..., D:2 * D]
    v = qkv[..., 2 * D:]
    qh = q.reshape(B, T, nhead, dh)
    kh = k.reshape(B, T, nhead, dh)
    vh = v.reshape(B, T, nhead, dh)
    s = jnp.einsum('bthd,cthd->thbc', qh, kh)          # attention over batch dim, per frame/head
    pa = jax.nn.softmax(s, axis=-1)
    a = jnp.einsum('thbc,cthd->bthd', pa, vh).reshape(B, T, D)
    a = a @ p['w_o'] + p['b_o']

    def ln(u, g, b):
        mu = u.mean(-1, keepdims=True)
        var = ((u - mu) ** 2).mean(-1, keepdims=True)
        return (u - mu) / jnp.sqrt(var + 1e-5) * g + b

    z = ln(x + a, p['g1'], p['bt1'])
    ff = jnp.maximum(z @ p['w1'] + p['b1'], 0.0) @ p['w2'] + p['b2']
    z = ln(z + ff, p['g2'], p['bt2'])
    return jnp.einsum('btd,t->bd', z, p['w_dec'][:, 0, 0]) + p['b_dec'][0, 0]


def reference_forward(params, src1, src2, src3, nhead):
    pe = params['pe']
    o1 = _ref_branch(src1, pe, params['m1'], nhead)
    o2 = _ref_branch(src2, pe, params['m2'], nhead)
    o3 = _ref_branch(src3, pe, params['m3'], nhead)
    cat = jnp.concatenate([o1, o2, o3], axis=1)
    out = cat @ params['w_mm'] + params['b_mm']
    return jax.nn.sigmoid(out[:, 0])


# ----------------------------------------------------------------------------
if __name__ == "__main__":
    # Small, module-consistent shapes
    B = 4                 # batch
    T = 10                # x_frames (sequence / frame axis)
    F1, F2, F3 = 6, 5, 4  # m1/m2/m3 input feature sizes
    D = 16                # Transformer_feature_size
    NHEAD = 2
    FF = 2048             # nn.TransformerEncoderLayer default dim_feedforward

    key = jax.random.PRNGKey(0)
    k_in, k1, k2, k3, k_mm, k_mmb = jax.random.split(key, 6)
    ks1, ks2, ks3 = jax.random.split(k_in, 3)

    src1 = jax.random.normal(ks1, (B, T, F1), jnp.float32)
    src2 = jax.random.normal(ks2, (B, T, F2), jnp.float32)
    src3 = jax.random.normal(ks3, (B, T, F3), jnp.float32)

    params = dict(
        pe=build_positional_encoding(B, D),
        m1=init_branch_params(k1, F1, D, T, FF),
        m2=init_branch_params(k2, F2, D, T, FF),
        m3=init_branch_params(k3, F3, D, T, FF),
        w_mm=jax.random.uniform(k_mm, (3 * D, 1), jnp.float32, -0.1, 0.1),
        b_mm=jax.random.uniform(k_mmb, (1, 1), jnp.float32, -0.1, 0.1),
    )

    fused = build_fused(params, T, B, NHEAD)

    out = transformer_forward(fused, src1, src2, src3)
    out = jax.block_until_ready(out)

    ref = jax.block_until_ready(reference_forward(params, src1, src2, src3, NHEAD))
    assert out.shape == (B,)
    np.testing.assert_allclose(np.asarray(out), np.asarray(ref), rtol=5e-3, atol=5e-3)

    print("KERNEL_OK")
</pallas_src>

<mosaic_0001>
module attributes {stable_mosaic.version = 11 : i64} {
  func.func @_fused_kernel(%arg0: i32, %arg1: memref<1x40x8xf32, #tpu.memory_space<vmem>>, %arg2: memref<40x16xf32, #tpu.memory_space<vmem>>, %arg3: memref<40x40xf32, #tpu.memory_space<vmem>>, %arg4: memref<1x8x16xf32, #tpu.memory_space<vmem>>, %arg5: memref<1x1x16xf32, #tpu.memory_space<vmem>>, %arg6: memref<1x16x48xf32, #tpu.memory_space<vmem>>, %arg7: memref<1x1x48xf32, #tpu.memory_space<vmem>>, %arg8: memref<1x16x16xf32, #tpu.memory_space<vmem>>, %arg9: memref<1x1x16xf32, #tpu.memory_space<vmem>>, %arg10: memref<1x1x16xf32, #tpu.memory_space<vmem>>, %arg11: memref<1x1x16xf32, #tpu.memory_space<vmem>>, %arg12: memref<1x4x16x512xbf16, #tpu.memory_space<vmem>>, %arg13: memref<1x4x1x512xf32, #tpu.memory_space<vmem>>, %arg14: memref<1x4x512x16xbf16, #tpu.memory_space<vmem>>, %arg15: memref<1x1x16xf32, #tpu.memory_space<vmem>>, %arg16: memref<1x1x16xf32, #tpu.memory_space<vmem>>, %arg17: memref<1x1x16xf32, #tpu.memory_space<vmem>>, %arg18: memref<1x4x40xf32, #tpu.memory_space<vmem>>, %arg19: memref<1x1x1xf32, #tpu.memory_space<vmem>>, %arg20: memref<1x16x1xf32, #tpu.memory_space<vmem>>, %arg21: memref<1x4x1xf32, #tpu.memory_space<vmem>>) attributes {dimension_semantics = [#tpu.dimension_semantics<parallel>], iteration_bounds = array<i64: 3>, scalar_prefetch = 0 : i64, scratch_operands = 0 : i64, tpu.core_type = #tpu.core_type<tc>, window_params = [{transform_indices = @transform_0, window_bounds = array<i64: 1, 40, 8>}, {pipeline_mode = #tpu.pipeline_mode<synchronous>, transform_indices = @transform_1, window_bounds = array<i64: 40, 16>}, {pipeline_mode = #tpu.pipeline_mode<synchronous>, transform_indices = @transform_2, window_bounds = array<i64: 40, 40>}, {transform_indices = @transform_3, window_bounds = array<i64: 1, 8, 16>}, {transform_indices = @transform_4, window_bounds = array<i64: 1, 1, 16>}, {transform_indices = @transform_5, window_bounds = array<i64: 1, 16, 48>}, {transform_indices = @transform_6, window_bounds = array<i64: 1, 1, 48>}, {transform_indices = @transform_7, window_bounds = array<i64: 1, 16, 16>}, {transform_indices = @transform_8, window_bounds = array<i64: 1, 1, 16>}, {transform_indices = @transform_9, window_bounds = array<i64: 1, 1, 16>}, {transform_indices = @transform_10, window_bounds = array<i64: 1, 1, 16>}, {transform_indices = @transform_11, window_bounds = array<i64: 1, 4, 16, 512>}, {transform_indices = @transform_12, window_bounds = array<i64: 1, 4, 1, 512>}, {transform_indices = @transform_13, window_bounds = array<i64: 1, 4, 512, 16>}, {transform_indices = @transform_14, window_bounds = array<i64: 1, 1, 16>}, {transform_indices = @transform_15, window_bounds = array<i64: 1, 1, 16>}, {transform_indices = @transform_16, window_bounds = array<i64: 1, 1, 16>}, {transform_indices = @transform_17, window_bounds = array<i64: 1, 4, 40>}, {transform_indices = @transform_18, window_bounds = array<i64: 1, 1, 1>}, {transform_indices = @transform_19, window_bounds = array<i64: 1, 16, 1>}, {transform_indices = @transform_20, window_bounds = array<i64: 1, 4, 1>}]} {
    %c0 = arith.constant 0 : index
    %c0_0 = arith.constant 0 : index
    %c0_1 = arith.constant 0 : index
    %0 = vector.load %arg1[%c0, %c0_0, %c0_1] : memref<1x40x8xf32, #tpu.memory_space<vmem>>, vector<1x40x8xf32>
    %1 = vector.shape_cast %0 : vector<1x40x8xf32> to vector<40x8xf32>
    %c0_2 = arith.constant 0 : index
    %c0_3 = arith.constant 0 : index
    %c0_4 = arith.constant 0 : index
    %2 = vector.load %arg4[%c0_2, %c0_3, %c0_4] : memref<1x8x16xf32, #tpu.memory_space<vmem>>, vector<1x8x16xf32>
    %3 = vector.shape_cast %2 : vector<1x8x16xf32> to vector<8x16xf32>
    %cst = arith.constant dense<0.000000e+00> : vector<40x16xf32>
    %4 = tpu.matmul %1, %3, %cst {dimension_numbers = #tpu.dot_dimension_numbers<[1], [0], [0], [1], [0, 0, 1, 1], [], []>} : vector<40x8xf32>, vector<8x16xf32>, vector<40x16xf32> -> vector<40x16xf32>
    %c0_5 = arith.constant 0 : index
    %c0_6 = arith.constant 0 : index
    %c0_7 = arith.constant 0 : index
    %5 = vector.load %arg5[%c0_5, %c0_6, %c0_7] : memref<1x1x16xf32, #tpu.memory_space<vmem>>, vector<1x1x16xf32>
    %6 = vector.shape_cast %5 : vector<1x1x16xf32> to vector<1x16xf32>
    %7 = vector.broadcast %6 : vector<1x16xf32> to vector<40x16xf32>
    %8 = arith.addf %4, %7 : vector<40x16xf32>
    %c0_8 = arith.constant 0 : index
    %c0_9 = arith.constant 0 : index
    %9 = vector.load %arg2[%c0_8, %c0_9] : memref<40x16xf32, #tpu.memory_space<vmem>>, vector<40x16xf32>
    %10 = arith.addf %8, %9 : vector<40x16xf32>
    %c0_10 = arith.constant 0 : index
    %c0_11 = arith.constant 0 : index
    %c0_12 = arith.constant 0 : index
    %11 = vector.load %arg6[%c0_10, %c0_11, %c0_12] : memref<1x16x48xf32, #tpu.memory_space<vmem>>, vector<1x16x48xf32>
    %12 = vector.shape_cast %11 : vector<1x16x48xf32> to vector<16x48xf32>
    %cst_13 = arith.constant dense<0.000000e+00> : vector<40x48xf32>
    %13 = tpu.matmul %10, %12, %cst_13 {dimension_numbers = #tpu.dot_dimension_numbers<[1], [0], [0], [1], [0, 0, 1, 1], [], []>} : vector<40x16xf32>, vector<16x48xf32>, vector<40x48xf32> -> vector<40x48xf32>
    %c0_14 = arith.constant 0 : index
    %c0_15 = arith.constant 0 : index
    %c0_16 = arith.constant 0 : index
    %14 = vector.load %arg7[%c0_14, %c0_15, %c0_16] : memref<1x1x48xf32, #tpu.memory_space<vmem>>, vector<1x1x48xf32>
    %15 = vector.shape_cast %14 : vector<1x1x48xf32> to vector<1x48xf32>
    %16 = vector.broadcast %15 : vector<1x48xf32> to vector<40x48xf32>
    %17 = arith.addf %13, %16 : vector<40x48xf32>
    %c0_17 = arith.constant 0 : index
    %c0_18 = arith.constant 0 : index
    %18 = vector.load %arg3[%c0_17, %c0_18] : memref<40x40xf32, #tpu.memory_space<vmem>>, vector<40x40xf32>
    %19 = vector.extract_strided_slice %17 {offsets = [0, 0], sizes = [40, 8], strides = [1, 1]} : vector<40x48xf32> to vector<40x8xf32>
    %20 = vector.extract_strided_slice %17 {offsets = [0, 16], sizes = [40, 8], strides = [1, 1]} : vector<40x48xf32> to vector<40x8xf32>
    %21 = vector.extract_strided_slice %17 {offsets = [0, 32], sizes = [40, 8], strides = [1, 1]} : vector<40x48xf32> to vector<40x8xf32>
    %22 = tpu.transpose %20, [1, 0] : vector<40x8xf32> -> vector<8x40xf32>
    %cst_19 = arith.constant dense<0.000000e+00> : vector<40x40xf32>
    %23 = tpu.matmul %19, %22, %cst_19 {dimension_numbers = #tpu.dot_dimension_numbers<[1], [0], [0], [1], [0, 0, 1, 1], [], []>} : vector<40x8xf32>, vector<8x40xf32>, vector<40x40xf32> -> vector<40x40xf32>
    %24 = arith.addf %23, %18 : vector<40x40xf32>
    %cst_20 = arith.constant dense<0xFF800000> : vector<40xf32>
    %25 = vector.multi_reduction <maximumf>, %24, %cst_20 [1] : vector<40x40xf32> to vector<40xf32>
    %26 = vector.shape_cast %25 : vector<40xf32> to vector<40x1xf32>
    %27 = vector.broadcast %26 : vector<40x1xf32> to vector<40x40xf32>
    %28 = arith.subf %24, %27 : vector<40x40xf32>
    %29 = math.exp %28 : vector<40x40xf32>
    %cst_21 = arith.constant dense<0.000000e+00> : vector<40xf32>
    %30 = vector.multi_reduction <add>, %29, %cst_21 [1] : vector<40x40xf32> to vector<40xf32>
    %31 = vector.shape_cast %30 : vector<40xf32> to vector<40x1xf32>
    %32 = tpu.reciprocal %31 {approx = true} : vector<40x1xf32> -> vector<40x1xf32>
    %33 = vector.broadcast %32 : vector<40x1xf32> to vector<40x40xf32>
    %34 = arith.mulf %29, %33 : vector<40x40xf32>
    %cst_22 = arith.constant dense<0.000000e+00> : vector<40x8xf32>
    %35 = tpu.matmul %34, %21, %cst_22 {dimension_numbers = #tpu.dot_dimension_numbers<[1], [0], [0], [1], [0, 0, 1, 1], [], []>} : vector<40x40xf32>, vector<40x8xf32>, vector<40x8xf32> -> vector<40x8xf32>
    %36 = vector.extract_strided_slice %17 {offsets = [0, 8], sizes = [40, 8], strides = [1, 1]} : vector<40x48xf32> to vector<40x8xf32>
    %37 = vector.extract_strided_slice %17 {offsets = [0, 24], sizes = [40, 8], strides = [1, 1]} : vector<40x48xf32> to vector<40x8xf32>
    %38 = vector.extract_strided_slice %17 {offsets = [0, 40], sizes = [40, 8], strides = [1, 1]} : vector<40x48xf32> to vector<40x8xf32>
    %39 = tpu.transpose %37, [1, 0] : vector<40x8xf32> -> vector<8x40xf32>
    %cst_23 = arith.constant dense<0.000000e+00> : vector<40x40xf32>
    %40 = tpu.matmul %36, %39, %cst_23 {dimension_numbers = #tpu.dot_dimension_numbers<[1], [0], [0], [1], [0, 0, 1, 1], [], []>} : vector<40x8xf32>, vector<8x40xf32>, vector<40x40xf32> -> vector<40x40xf32>
    %41 = arith.addf %40, %18 : vector<40x40xf32>
    %cst_24 = arith.constant dense<0xFF800000> : vector<40xf32>
    %42 = vector.multi_reduction <maximumf>, %41, %cst_24 [1] : vector<40x40xf32> to vector<40xf32>
    %43 = vector.shape_cast %42 : vector<40xf32> to vector<40x1xf32>
    %44 = vector.broadcast %43 : vector<40x1xf32> to vector<40x40xf32>
    %45 = arith.subf %41, %44 : vector<40x40xf32>
    %46 = math.exp %45 : vector<40x40xf32>
    %cst_25 = arith.constant dense<0.000000e+00> : vector<40xf32>
    %47 = vector.multi_reduction <add>, %46, %cst_25 [1] : vector<40x40xf32> to vector<40xf32>
    %48 = vector.shape_cast %47 : vector<40xf32> to vector<40x1xf32>
    %49 = tpu.reciprocal %48 {approx = true} : vector<40x1xf32> -> vector<40x1xf32>
    %50 = vector.broadcast %49 : vector<40x1xf32> to vector<40x40xf32>
    %51 = arith.mulf %46, %50 : vector<40x40xf32>
    %cst_26 = arith.constant dense<0.000000e+00> : vector<40x8xf32>
    %52 = tpu.matmul %51, %38, %cst_26 {dimension_numbers = #tpu.dot_dimension_numbers<[1], [0], [0], [1], [0, 0, 1, 1], [], []>} : vector<40x40xf32>, vector<40x8xf32>, vector<40x8xf32> -> vector<40x8xf32>
    %53 = tpu.concatenate %35, %52 in 1 : vector<40x8xf32>, vector<40x8xf32> -> vector<40x16xf32>
    %c0_27 = arith.constant 0 : index
    %c0_28 = arith.constant 0 : index
    %c0_29 = arith.constant 0 : index
    %54 = vector.load %arg8[%c0_27, %c0_28, %c0_29] : memref<1x16x16xf32, #tpu.memory_space<vmem>>, vector<1x16x16xf32>
    %55 = vector.shape_cast %54 : vector<1x16x16xf32> to vector<16x16xf32>
    %cst_30 = arith.constant dense<0.000000e+00> : vector<40x16xf32>
    %56 = tpu.matmul %53, %55, %cst_30 {dimension_numbers = #tpu.dot_dimension_numbers<[1], [0], [0], [1], [0, 0, 1, 1], [], []>} : vector<40x16xf32>, vector<16x16xf32>, vector<40x16xf32> -> vector<40x16xf32>
    %c0_31 = arith.constant 0 : index
    %c0_32 = arith.constant 0 : index
    %c0_33 = arith.constant 0 : index
    %57 = vector.load %arg9[%c0_31, %c0_32, %c0_33] : memref<1x1x16xf32, #tpu.memory_space<vmem>>, vector<1x1x16xf32>
    %58 = vector.shape_cast %57 : vector<1x1x16xf32> to vector<1x16xf32>
    %59 = vector.broadcast %58 : vector<1x16xf32> to vector<40x16xf32>
    %60 = arith.addf %56, %59 : vector<40x16xf32>
    %61 = arith.addf %10, %60 : vector<40x16xf32>
    %c0_34 = arith.constant 0 : index
    %c0_35 = arith.constant 0 : index
    %c0_36 = arith.constant 0 : index
    %62 = vector.load %arg10[%c0_34, %c0_35, %c0_36] : memref<1x1x16xf32, #tpu.memory_space<vmem>>, vector<1x1x16xf32>
    %63 = vector.shape_cast %62 : vector<1x1x16xf32> to vector<1x16xf32>
    %c0_37 = arith.constant 0 : index
    %c0_38 = arith.constant 0 : index
    %c0_39 = arith.constant 0 : index
    %64 = vector.load %arg11[%c0_37, %c0_38, %c0_39] : memref<1x1x16xf32, #tpu.memory_space<vmem>>, vector<1x1x16xf32>
    %65 = vector.shape_cast %64 : vector<1x1x16xf32> to vector<1x16xf32>
    %cst_40 = arith.constant dense<0.000000e+00> : vector<40xf32>
    %66 = vector.multi_reduction <add>, %61, %cst_40 [1] : vector<40x16xf32> to vector<40xf32>
    %67 = vector.shape_cast %66 : vector<40xf32> to vector<40x1xf32>
    %cst_41 = arith.constant 1.600000e+01 : f32
    %68 = vector.broadcast %cst_41 : f32 to vector<40x1xf32>
    %69 = arith.divf %67, %68 : vector<40x1xf32>
    %70 = vector.broadcast %69 : vector<40x1xf32> to vector<40x16xf32>
    %71 = arith.subf %61, %70 : vector<40x16xf32>
    %72 = arith.mulf %71, %71 : vector<40x16xf32>
    %cst_42 = arith.constant dense<0.000000e+00> : vector<40xf32>
    %73 = vector.multi_reduction <add>, %72, %cst_42 [1] : vector<40x16xf32> to vector<40xf32>
    %74 = vector.shape_cast %73 : vector<40xf32> to vector<40x1xf32>
    %cst_43 = arith.constant 1.600000e+01 : f32
    %75 = vector.broadcast %cst_43 : f32 to vector<40x1xf32>
    %76 = arith.divf %74, %75 : vector<40x1xf32>
    %cst_44 = arith.constant 9.99999974E-6 : f32
    %77 = vector.broadcast %cst_44 : f32 to vector<40x1xf32>
    %78 = arith.addf %76, %77 : vector<40x1xf32>
    %79 = math.rsqrt %78 : vector<40x1xf32>
    %80 = vector.broadcast %79 : vector<40x1xf32> to vector<40x16xf32>
    %81 = arith.mulf %71, %80 : vector<40x16xf32>
    %82 = vector.broadcast %63 : vector<1x16xf32> to vector<40x16xf32>
    %83 = arith.mulf %81, %82 : vector<40x16xf32>
    %84 = vector.broadcast %65 : vector<1x16xf32> to vector<40x16xf32>
    %85 = arith.addf %83, %84 : vector<40x16xf32>
    %86 = arith.truncf %85 : vector<40x16xf32> to vector<40x16xbf16>
    %cst_45 = arith.constant 0.000000e+00 : f32
    %87 = vector.broadcast %cst_45 : f32 to vector<40x16xf32>
    %c0_46 = arith.constant 0 : index
    %c0_47 = arith.constant 0 : index
    %c0_48 = arith.constant 0 : index
    %88 = vector.load %arg15[%c0_46, %c0_47, %c0_48] : memref<1x1x16xf32, #tpu.memory_space<vmem>>, vector<1x1x16xf32>
    %89 = vector.shape_cast %88 : vector<1x1x16xf32> to vector<1x16xf32>
    %90 = vector.broadcast %89 : vector<1x16xf32> to vector<40x16xf32>
    %91 = arith.addf %87, %90 : vector<40x16xf32>
    %c0_i32 = arith.constant 0 : i32
    %c0_49 = arith.constant 0 : index
    %92 = arith.index_cast %c0_i32 : i32 to index
    %c0_50 = arith.constant 0 : index
    %c0_51 = arith.constant 0 : index
    %93 = vector.load %arg12[%c0_49, %92, %c0_50, %c0_51] : memref<1x4x16x512xbf16, #tpu.memory_space<vmem>>, vector<1x1x16x512xbf16>
    %94 = vector.shape_cast %93 : vector<1x1x16x512xbf16> to vector<16x512xbf16>
    %cst_52 = arith.constant dense<0.000000e+00> : vector<40x512xf32>
    %95 = tpu.matmul %86, %94, %cst_52 {dimension_numbers = #tpu.dot_dimension_numbers<[1], [0], [0], [1], [0, 0, 1, 1], [], []>} : vector<40x16xbf16>, vector<16x512xbf16>, vector<40x512xf32> -> vector<40x512xf32>
    %c0_53 = arith.constant 0 : index
    %96 = arith.index_cast %c0_i32 : i32 to index
    %c0_54 = arith.constant 0 : index
    %c0_55 = arith.constant 0 : index
    %97 = vector.load %arg13[%c0_53, %96, %c0_54, %c0_55] : memref<1x4x1x512xf32, #tpu.memory_space<vmem>>, vector<1x1x1x512xf32>
    %98 = vector.shape_cast %97 : vector<1x1x1x512xf32> to vector<1x512xf32>
    %99 = vector.broadcast %98 : vector<1x512xf32> to vector<40x512xf32>
    %100 = arith.addf %95, %99 : vector<40x512xf32>
    %cst_56 = arith.constant 0.000000e+00 : f32
    %101 = vector.broadcast %cst_56 : f32 to vector<40x512xf32>
    %102 = arith.maximumf %100, %101 : vector<40x512xf32>
    %103 = arith.truncf %102 : vector<40x512xf32> to vector<40x512xbf16>
    %c0_57 = arith.constant 0 : index
    %104 = arith.index_cast %c0_i32 : i32 to index
    %c0_58 = arith.constant 0 : index
    %c0_59 = arith.constant 0 : index
    %105 = vector.load %arg14[%c0_57, %104, %c0_58, %c0_59] : memref<1x4x512x16xbf16, #tpu.memory_space<vmem>>, vector<1x1x512x16xbf16>
    %106 = vector.shape_cast %105 : vector<1x1x512x16xbf16> to vector<512x16xbf16>
    %cst_60 = arith.constant dense<0.000000e+00> : vector<40x16xf32>
    %107 = tpu.matmul %103, %106, %cst_60 {dimension_numbers = #tpu.dot_dimension_numbers<[1], [0], [0], [1], [0, 0, 1, 1], [], []>} : vector<40x512xbf16>, vector<512x16xbf16>, vector<40x16xf32> -> vector<40x16xf32>
    %108 = arith.addf %91, %107 : vector<40x16xf32>
    %c1_i32 = arith.constant 1 : i32
    %c0_61 = arith.constant 0 : index
    %109 = arith.index_cast %c1_i32 : i32 to index
    %c0_62 = arith.constant 0 : index
    %c0_63 = arith.constant 0 : index
    %110 = vector.load %arg12[%c0_61, %109, %c0_62, %c0_63] : memref<1x4x16x512xbf16, #tpu.memory_space<vmem>>, vector<1x1x16x512xbf16>
    %111 = vector.shape_cast %110 : vector<1x1x16x512xbf16> to vector<16x512xbf16>
    %cst_64 = arith.constant dense<0.000000e+00> : vector<40x512xf32>
    %112 = tpu.matmul %86, %111, %cst_64 {dimension_numbers = #tpu.dot_dimension_numbers<[1], [0], [0], [1], [0, 0, 1, 1], [], []>} : vector<40x16xbf16>, vector<16x512xbf16>, vector<40x512xf32> -> vector<40x512xf32>
    %c0_65 = arith.constant 0 : index
    %113 = arith.index_cast %c1_i32 : i32 to index
    %c0_66 = arith.constant 0 : index
    %c0_67 = arith.constant 0 : index
    %114 = vector.load %arg13[%c0_65, %113, %c0_66, %c0_67] : memref<1x4x1x512xf32, #tpu.memory_space<vmem>>, vector<1x1x1x512xf32>
    %115 = vector.shape_cast %114 : vector<1x1x1x512xf32> to vector<1x512xf32>
    %116 = vector.broadcast %115 : vector<1x512xf32> to vector<40x512xf32>
    %117 = arith.addf %112, %116 : vector<40x512xf32>
    %cst_68 = arith.constant 0.000000e+00 : f32
    %118 = vector.broadcast %cst_68 : f32 to vector<40x512xf32>
    %119 = arith.maximumf %117, %118 : vector<40x512xf32>
    %120 = arith.truncf %119 : vector<40x512xf32> to vector<40x512xbf16>
    %c0_69 = arith.constant 0 : index
    %121 = arith.index_cast %c1_i32 : i32 to index
    %c0_70 = arith.constant 0 : index
    %c0_71 = arith.constant 0 : index
    %122 = vector.load %arg14[%c0_69, %121, %c0_70, %c0_71] : memref<1x4x512x16xbf16, #tpu.memory_space<vmem>>, vector<1x1x512x16xbf16>
    %123 = vector.shape_cast %122 : vector<1x1x512x16xbf16> to vector<512x16xbf16>
    %cst_72 = arith.constant dense<0.000000e+00> : vector<40x16xf32>
    %124 = tpu.matmul %120, %123, %cst_72 {dimension_numbers = #tpu.dot_dimension_numbers<[1], [0], [0], [1], [0, 0, 1, 1], [], []>} : vector<40x512xbf16>, vector<512x16xbf16>, vector<40x16xf32> -> vector<40x16xf32>
    %125 = arith.addf %108, %124 : vector<40x16xf32>
    %c2_i32 = arith.constant 2 : i32
    %c0_73 = arith.constant 0 : index
    %126 = arith.index_cast %c2_i32 : i32 to index
    %c0_74 = arith.constant 0 : index
    %c0_75 = arith.constant 0 : index
    %127 = vector.load %arg12[%c0_73, %126, %c0_74, %c0_75] : memref<1x4x16x512xbf16, #tpu.memory_space<vmem>>, vector<1x1x16x512xbf16>
    %128 = vector.shape_cast %127 : vector<1x1x16x512xbf16> to vector<16x512xbf16>
    %cst_76 = arith.constant dense<0.000000e+00> : vector<40x512xf32>
    %129 = tpu.matmul %86, %128, %cst_76 {dimension_numbers = #tpu.dot_dimension_numbers<[1], [0], [0], [1], [0, 0, 1, 1], [], []>} : vector<40x16xbf16>, vector<16x512xbf16>, vector<40x512xf32> -> vector<40x512xf32>
    %c0_77 = arith.constant 0 : index
    %130 = arith.index_cast %c2_i32 : i32 to index
    %c0_78 = arith.constant 0 : index
    %c0_79 = arith.constant 0 : index
    %131 = vector.load %arg13[%c0_77, %130, %c0_78, %c0_79] : memref<1x4x1x512xf32, #tpu.memory_space<vmem>>, vector<1x1x1x512xf32>
    %132 = vector.shape_cast %131 : vector<1x1x1x512xf32> to vector<1x512xf32>
    %133 = vector.broadcast %132 : vector<1x512xf32> to vector<40x512xf32>
    %134 = arith.addf %129, %133 : vector<40x512xf32>
    %cst_80 = arith.constant 0.000000e+00 : f32
    %135 = vector.broadcast %cst_80 : f32 to vector<40x512xf32>
    %136 = arith.maximumf %134, %135 : vector<40x512xf32>
    %137 = arith.truncf %136 : vector<40x512xf32> to vector<40x512xbf16>
    %c0_81 = arith.constant 0 : index
    %138 = arith.index_cast %c2_i32 : i32 to index
    %c0_82 = arith.constant 0 : index
    %c0_83 = arith.constant 0 : index
    %139 = vector.load %arg14[%c0_81, %138, %c0_82, %c0_83] : memref<1x4x512x16xbf16, #tpu.memory_space<vmem>>, vector<1x1x512x16xbf16>
    %140 = vector.shape_cast %139 : vector<1x1x512x16xbf16> to vector<512x16xbf16>
    %cst_84 = arith.constant dense<0.000000e+00> : vector<40x16xf32>
    %141 = tpu.matmul %137, %140, %cst_84 {dimension_numbers = #tpu.dot_dimension_numbers<[1], [0], [0], [1], [0, 0, 1, 1], [], []>} : vector<40x512xbf16>, vector<512x16xbf16>, vector<40x16xf32> -> vector<40x16xf32>
    %142 = arith.addf %125, %141 : vector<40x16xf32>
    %c3_i32 = arith.constant 3 : i32
    %c0_85 = arith.constant 0 : index
    %143 = arith.index_cast %c3_i32 : i32 to index
    %c0_86 = arith.constant 0 : index
    %c0_87 = arith.constant 0 : index
    %144 = vector.load %arg12[%c0_85, %143, %c0_86, %c0_87] : memref<1x4x16x512xbf16, #tpu.memory_space<vmem>>, vector<1x1x16x512xbf16>
    %145 = vector.shape_cast %144 : vector<1x1x16x512xbf16> to vector<16x512xbf16>
    %cst_88 = arith.constant dense<0.000000e+00> : vector<40x512xf32>
    %146 = tpu.matmul %86, %145, %cst_88 {dimension_numbers = #tpu.dot_dimension_numbers<[1], [0], [0], [1], [0, 0, 1, 1], [], []>} : vector<40x16xbf16>, vector<16x512xbf16>, vector<40x512xf32> -> vector<40x512xf32>
    %c0_89 = arith.constant 0 : index
    %147 = arith.index_cast %c3_i32 : i32 to index
    %c0_90 = arith.constant 0 : index
    %c0_91 = arith.constant 0 : index
    %148 = vector.load %arg13[%c0_89, %147, %c0_90, %c0_91] : memref<1x4x1x512xf32, #tpu.memory_space<vmem>>, vector<1x1x1x512xf32>
    %149 = vector.shape_cast %148 : vector<1x1x1x512xf32> to vector<1x512xf32>
    %150 = vector.broadcast %149 : vector<1x512xf32> to vector<40x512xf32>
    %151 = arith.addf %146, %150 : vector<40x512xf32>
    %cst_92 = arith.constant 0.000000e+00 : f32
    %152 = vector.broadcast %cst_92 : f32 to vector<40x512xf32>
    %153 = arith.maximumf %151, %152 : vector<40x512xf32>
    %154 = arith.truncf %153 : vector<40x512xf32> to vector<40x512xbf16>
    %c0_93 = arith.constant 0 : index
    %155 = arith.index_cast %c3_i32 : i32 to index
    %c0_94 = arith.constant 0 : index
    %c0_95 = arith.constant 0 : index
    %156 = vector.load %arg14[%c0_93, %155, %c0_94, %c0_95] : memref<1x4x512x16xbf16, #tpu.memory_space<vmem>>, vector<1x1x512x16xbf16>
    %157 = vector.shape_cast %156 : vector<1x1x512x16xbf16> to vector<512x16xbf16>
    %cst_96 = arith.constant dense<0.000000e+00> : vector<40x16xf32>
    %158 = tpu.matmul %154, %157, %cst_96 {dimension_numbers = #tpu.dot_dimension_numbers<[1], [0], [0], [1], [0, 0, 1, 1], [], []>} : vector<40x512xbf16>, vector<512x16xbf16>, vector<40x16xf32> -> vector<40x16xf32>
    %159 = arith.addf %142, %158 : vector<40x16xf32>
    %c4_i32 = arith.constant 4 : i32
    %160 = arith.addf %85, %159 : vector<40x16xf32>
    %c0_97 = arith.constant 0 : index
    %c0_98 = arith.constant 0 : index
    %c0_99 = arith.constant 0 : index
    %161 = vector.load %arg16[%c0_97, %c0_98, %c0_99] : memref<1x1x16xf32, #tpu.memory_space<vmem>>, vector<1x1x16xf32>
    %162 = vector.shape_cast %161 : vector<1x1x16xf32> to vector<1x16xf32>
    %c0_100 = arith.constant 0 : index
    %c0_101 = arith.constant 0 : index
    %c0_102 = arith.constant 0 : index
    %163 = vector.load %arg17[%c0_100, %c0_101, %c0_102] : memref<1x1x16xf32, #tpu.memory_space<vmem>>, vector<1x1x16xf32>
    %164 = vector.shape_cast %163 : vector<1x1x16xf32> to vector<1x16xf32>
    %cst_103 = arith.constant dense<0.000000e+00> : vector<40xf32>
    %165 = vector.multi_reduction <add>, %160, %cst_103 [1] : vector<40x16xf32> to vector<40xf32>
    %166 = vector.shape_cast %165 : vector<40xf32> to vector<40x1xf32>
    %cst_104 = arith.constant 1.600000e+01 : f32
    %167 = vector.broadcast %cst_104 : f32 to vector<40x1xf32>
    %168 = arith.divf %166, %167 : vector<40x1xf32>
    %169 = vector.broadcast %168 : vector<40x1xf32> to vector<40x16xf32>
    %170 = arith.subf %160, %169 : vector<40x16xf32>
    %171 = arith.mulf %170, %170 : vector<40x16xf32>
    %cst_105 = arith.constant dense<0.000000e+00> : vector<40xf32>
    %172 = vector.multi_reduction <add>, %171, %cst_105 [1] : vector<40x16xf32> to vector<40xf32>
    %173 = vector.shape_cast %172 : vector<40xf32> to vector<40x1xf32>
    %cst_106 = arith.constant 1.600000e+01 : f32
    %174 = vector.broadcast %cst_106 : f32 to vector<40x1xf32>
    %175 = arith.divf %173, %174 : vector<40x1xf32>
    %cst_107 = arith.constant 9.99999974E-6 : f32
    %176 = vector.broadcast %cst_107 : f32 to vector<40x1xf32>
    %177 = arith.addf %175, %176 : vector<40x1xf32>
    %178 = math.rsqrt %177 : vector<40x1xf32>
    %179 = vector.broadcast %178 : vector<40x1xf32> to vector<40x16xf32>
    %180 = arith.mulf %170, %179 : vector<40x16xf32>
    %181 = vector.broadcast %162 : vector<1x16xf32> to vector<40x16xf32>
    %182 = arith.mulf %180, %181 : vector<40x16xf32>
    %183 = vector.broadcast %164 : vector<1x16xf32> to vector<40x16xf32>
    %184 = arith.addf %182, %183 : vector<40x16xf32>
    %c0_108 = arith.constant 0 : index
    %c0_109 = arith.constant 0 : index
    %c0_110 = arith.constant 0 : index
    %185 = vector.load %arg18[%c0_108, %c0_109, %c0_110] : memref<1x4x40xf32, #tpu.memory_space<vmem>>, vector<1x4x40xf32>
    %186 = vector.shape_cast %185 : vector<1x4x40xf32> to vector<4x40xf32>
    %cst_111 = arith.constant dense<0.000000e+00> : vector<4x16xf32>
    %187 = tpu.matmul %186, %184, %cst_111 {dimension_numbers = #tpu.dot_dimension_numbers<[1], [0], [0], [1], [0, 0, 1, 1], [], []>} : vector<4x40xf32>, vector<40x16xf32>, vector<4x16xf32> -> vector<4x16xf32>
    %c0_112 = arith.constant 0 : index
    %c0_113 = arith.constant 0 : index
    %c0_114 = arith.constant 0 : index
    %188 = vector.load %arg19[%c0_112, %c0_113, %c0_114] : memref<1x1x1xf32, #tpu.memory_space<vmem>>, vector<1x1x1xf32>
    %189 = vector.shape_cast %188 : vector<1x1x1xf32> to vector<1x1xf32>
    %190 = vector.broadcast %189 : vector<1x1xf32> to vector<4x16xf32>
    %191 = arith.addf %187, %190 : vector<4x16xf32>
    %c0_115 = arith.constant 0 : index
    %c0_116 = arith.constant 0 : index
    %c0_117 = arith.constant 0 : index
    %192 = vector.load %arg20[%c0_115, %c0_116, %c0_117] : memref<1x16x1xf32, #tpu.memory_space<vmem>>, vector<1x16x1xf32>
    %193 = vector.shape_cast %192 : vector<1x16x1xf32> to vector<16x1xf32>
    %cst_118 = arith.constant dense<0.000000e+00> : vector<4x1xf32>
    %194 = tpu.matmul %191, %193, %cst_118 {dimension_numbers = #tpu.dot_dimension_numbers<[1], [0], [0], [1], [0, 0, 1, 1], [], []>} : vector<4x16xf32>, vector<16x1xf32>, vector<4x1xf32> -> vector<4x1xf32>
    %c0_119 = arith.constant 0 : index
    %c0_120 = arith.constant 0 : index
    %c0_121 = arith.constant 0 : index
    %195 = vector.load %arg21[%c0_119, %c0_120, %c0_121] : memref<1x4x1xf32, #tpu.memory_space<vmem>>, vector<1x4x1xf32>
    %196 = vector.shape_cast %195 : vector<1x4x1xf32> to vector<4x1xf32>
    %197 = vector.shape_cast %194 : vector<4x1xf32> to vector<1x4x1xf32>
    tpu.vector_store %arg21[%c0_119, %c0_120, %c0_121], %197 {strides = array<i32>} : memref<1x4x1xf32, #tpu.memory_space<vmem>>, vector<1x4x1xf32>,
    return
  }
  func.func @transform_0(%arg0: i32) -> (i32, i32, i32) {
    %c0_i32 = arith.constant 0 : i32
    %c0_i32_0 = arith.constant 0 : i32
    %c0_i32_1 = arith.constant 0 : i32
    return %arg0, %c0_i32, %c0_i32_0 : i32, i32, i32
  }
  func.func @transform_1(%arg0: i32) -> (i32, i32) {
    %c0_i32 = arith.constant 0 : i32
    %c0_i32_0 = arith.constant 0 : i32
    %c0_i32_1 = arith.constant 0 : i32
    return %c0_i32, %c0_i32_0 : i32, i32
  }
  func.func @transform_2(%arg0: i32) -> (i32, i32) {
    %c0_i32 = arith.constant 0 : i32
    %c0_i32_0 = arith.constant 0 : i32
    %c0_i32_1 = arith.constant 0 : i32
    return %c0_i32, %c0_i32_0 : i32, i32
  }
  func.func @transform_3(%arg0: i32) -> (i32, i32, i32) {
    %c0_i32 = arith.constant 0 : i32
    %c0_i32_0 = arith.constant 0 : i32
    %c0_i32_1 = arith.constant 0 : i32
    return %arg0, %c0_i32, %c0_i32_0 : i32, i32, i32
  }
  func.func @transform_4(%arg0: i32) -> (i32, i32, i32) {
    %c0_i32 = arith.constant 0 : i32
    %c0_i32_0 = arith.constant 0 : i32
    %c0_i32_1 = arith.constant 0 : i32
    return %arg0, %c0_i32, %c0_i32_0 : i32, i32, i32
  }
  func.func @transform_5(%arg0: i32) -> (i32, i32, i32) {
    %c0_i32 = arith.constant 0 : i32
    %c0_i32_0 = arith.constant 0 : i32
    %c0_i32_1 = arith.constant 0 : i32
    return %arg0, %c0_i32, %c0_i32_0 : i32, i32, i32
  }
  func.func @transform_6(%arg0: i32) -> (i32, i32, i32) {
    %c0_i32 = arith.constant 0 : i32
    %c0_i32_0 = arith.constant 0 : i32
    %c0_i32_1 = arith.constant 0 : i32
    return %arg0, %c0_i32, %c0_i32_0 : i32, i32, i32
  }
  func.func @transform_7(%arg0: i32) -> (i32, i32, i32) {
    %c0_i32 = arith.constant 0 : i32
    %c0_i32_0 = arith.constant 0 : i32
    %c0_i32_1 = arith.constant 0 : i32
    return %arg0, %c0_i32, %c0_i32_0 : i32, i32, i32
  }
  func.func @transform_8(%arg0: i32) -> (i32, i32, i32) {
    %c0_i32 = arith.constant 0 : i32
    %c0_i32_0 = arith.constant 0 : i32
    %c0_i32_1 = arith.constant 0 : i32
    return %arg0, %c0_i32, %c0_i32_0 : i32, i32, i32
  }
  func.func @transform_9(%arg0: i32) -> (i32, i32, i32) {
    %c0_i32 = arith.constant 0 : i32
    %c0_i32_0 = arith.constant 0 : i32
    %c0_i32_1 = arith.constant 0 : i32
    return %arg0, %c0_i32, %c0_i32_0 : i32, i32, i32
  }
  func.func @transform_10(%arg0: i32) -> (i32, i32, i32) {
    %c0_i32 = arith.constant 0 : i32
    %c0_i32_0 = arith.constant 0 : i32
    %c0_i32_1 = arith.constant 0 : i32
    return %arg0, %c0_i32, %c0_i32_0 : i32, i32, i32
  }
  func.func @transform_11(%arg0: i32) -> (i32, i32, i32, i32) {
    %c0_i32 = arith.constant 0 : i32
    %c0_i32_0 = arith.constant 0 : i32
    %c0_i32_1 = arith.constant 0 : i32
    %c0_i32_2 = arith.constant 0 : i32
    return %arg0, %c0_i32, %c0_i32_0, %c0_i32_1 : i32, i32, i32, i32
  }
  func.func @transform_12(%arg0: i32) -> (i32, i32, i32, i32) {
    %c0_i32 = arith.constant 0 : i32
    %c0_i32_0 = arith.constant 0 : i32
    %c0_i32_1 = arith.constant 0 : i32
    %c0_i32_2 = arith.constant 0 : i32
    return %arg0, %c0_i32, %c0_i32_0, %c0_i32_1 : i32, i32, i32, i32
  }
  func.func @transform_13(%arg0: i32) -> (i32, i32, i32, i32) {
    %c0_i32 = arith.constant 0 : i32
    %c0_i32_0 = arith.constant 0 : i32
    %c0_i32_1 = arith.constant 0 : i32
    %c0_i32_2 = arith.constant 0 : i32
    return %arg0, %c0_i32, %c0_i32_0, %c0_i32_1 : i32, i32, i32, i32
  }
  func.func @transform_14(%arg0: i32) -> (i32, i32, i32) {
    %c0_i32 = arith.constant 0 : i32
    %c0_i32_0 = arith.constant 0 : i32
    %c0_i32_1 = arith.constant 0 : i32
    return %arg0, %c0_i32, %c0_i32_0 : i32, i32, i32
  }
  func.func @transform_15(%arg0: i32) -> (i32, i32, i32) {
    %c0_i32 = arith.constant 0 : i32
    %c0_i32_0 = arith.constant 0 : i32
    %c0_i32_1 = arith.constant 0 : i32
    return %arg0, %c0_i32, %c0_i32_0 : i32, i32, i32
  }
  func.func @transform_16(%arg0: i32) -> (i32, i32, i32) {
    %c0_i32 = arith.constant 0 : i32
    %c0_i32_0 = arith.constant 0 : i32
    %c0_i32_1 = arith.constant 0 : i32
    return %arg0, %c0_i32, %c0_i32_0 : i32, i32, i32
  }
  func.func @transform_17(%arg0: i32) -> (i32, i32, i32) {
    %c0_i32 = arith.constant 0 : i32
    %c0_i32_0 = arith.constant 0 : i32
    %c0_i32_1 = arith.constant 0 : i32
    return %arg0, %c0_i32, %c0_i32_0 : i32, i32, i32
  }
  func.func @transform_18(%arg0: i32) -> (i32, i32, i32) {
    %c0_i32 = arith.constant 0 : i32
    %c0_i32_0 = arith.constant 0 : i32
    %c0_i32_1 = arith.constant 0 : i32
    return %arg0, %c0_i32, %c0_i32_0 : i32, i32, i32
  }
  func.func @transform_19(%arg0: i32) -> (i32, i32, i32) {
    %c0_i32 = arith.constant 0 : i32
    %c0_i32_0 = arith.constant 0 : i32
    %c0_i32_1 = arith.constant 0 : i32
    return %arg0, %c0_i32, %c0_i32_0 : i32, i32, i32
  }
  func.func @transform_20(%arg0: i32) -> (i32, i32, i32) {
    %c0_i32 = arith.constant 0 : i32
    %c0_i32_0 = arith.constant 0 : i32
    %c0_i32_1 = arith.constant 0 : i32
    return %arg0, %c0_i32, %c0_i32_0 : i32, i32, i32
  }
}

</mosaic_0001>

<llo_original>
// kernel: tpu_custom_call.1
$region0: #{tpu_custom_call.1}
  #allocation0 [shape = 'u32[]', space=smem, size = 0x4, offset = 0x4, fixed_abs, tag = 'smem constant byte address 0x4 - core index']
  #allocation1 [shape = 'u32[144,128]{1,0:T(1,128)}', space=vmem, size = 0x12000, scoped, tag = 'internal scratch']
  %s0 = inlined_call_operand.vmem [shape: f32[3,40,8], index: 0, kind: input, shape index: {}]
  %s1 = inlined_call_operand.vmem [shape: f32[40,16], index: 1, kind: input, shape index: {}]
  %s2 = inlined_call_operand.vmem [shape: f32[40,40], index: 2, kind: input, shape index: {}]
  %s3 = inlined_call_operand.vmem [shape: f32[3,8,16], index: 3, kind: input, shape index: {}]
  %s4 = inlined_call_operand.vmem [shape: f32[3,1,16], index: 4, kind: input, shape index: {}]
  %s5 = inlined_call_operand.vmem [shape: f32[3,16,48], index: 5, kind: input, shape index: {}]
  %s6 = inlined_call_operand.vmem [shape: f32[3,1,48], index: 6, kind: input, shape index: {}]
  %s7 = inlined_call_operand.vmem [shape: f32[3,16,16], index: 7, kind: input, shape index: {}]
  %s8 = inlined_call_operand.vmem [shape: f32[3,1,16], index: 8, kind: input, shape index: {}]
  %s9 = inlined_call_operand.vmem [shape: f32[3,1,16], index: 9, kind: input, shape index: {}]
  %s10 = inlined_call_operand.vmem [shape: f32[3,1,16], index: 10, kind: input, shape index: {}]
  %s11 = inlined_call_operand.vmem [shape: bf16[3,4,16,512], index: 11, kind: input, shape index: {}]
  %s12 = inlined_call_operand.vmem [shape: f32[3,4,1,512], index: 12, kind: input, shape index: {}]
  %s13 = inlined_call_operand.vmem [shape: bf16[3,4,512,16], index: 13, kind: input, shape index: {}]
  %s14 = inlined_call_operand.vmem [shape: f32[3,1,16], index: 14, kind: input, shape index: {}]
  %s15 = inlined_call_operand.vmem [shape: f32[3,1,16], index: 15, kind: input, shape index: {}]
  %s16 = inlined_call_operand.vmem [shape: f32[3,1,16], index: 16, kind: input, shape index: {}]
  %s17 = inlined_call_operand.vmem [shape: f32[3,4,40], index: 17, kind: input, shape index: {}]
  %s18 = inlined_call_operand.vmem [shape: f32[3,1,1], index: 18, kind: input, shape index: {}]
  %s19 = inlined_call_operand.vmem [shape: f32[3,16,1], index: 19, kind: input, shape index: {}]
  %s20 = inlined_call_operand.vmem [shape: f32[3,4,1], index: 20, kind: output, shape index: {}]
  %s21 = sld [smem:[#allocation0]]
  $region113: #{tpu_custom_call.1} parent=0
    _
  %s23 = ssub.s32 1, %s21
  %s24 = scalar_select 0, %s23, %s21
  loop: start=0, step=1, limit=5
  $region2: #{tpu_custom_call.1} parent=0 // loop_pre_header
    _
  $region3: #{tpu_custom_call.1} parent=0 // loop_header
    %s26 = sphi 0, %s30
    %p27 = scmp.ge.s32.totalorder %s26, 5
    %s36 = sphi 0, %s38
    %s39 = sphi 0, %s36
    %s40 = sphi 0, %s39
    %s56 = sphi 0, %s40
    %s60 = sphi 0, %s60
    %s62 = sphi 0, %s60
    %s63 = sphi 0, %s62
    %s77 = sphi 0, %s63
    %s81 = sphi 0, %s81
    %s83 = sphi 0, %s81
    %s84 = sphi 0, %s83
    %s98 = sphi 0, %s84
    %s104 = sphi 0, %s106
    %s107 = sphi 0, %s104
    %s108 = sphi 0, %s107
    %s124 = sphi 0, %s108
    %s130 = sphi 0, %s132
    %s133 = sphi 0, %s130
    %s134 = sphi 0, %s133
    %s150 = sphi 0, %s134
    %s156 = sphi 0, %s158
    %s159 = sphi 0, %s156
    %s160 = sphi 0, %s159
    %s176 = sphi 0, %s160
    %s182 = sphi 0, %s184
    %s185 = sphi 0, %s182
    %s186 = sphi 0, %s185
    %s202 = sphi 0, %s186
    %s208 = sphi 0, %s210
    %s211 = sphi 0, %s208
    %s212 = sphi 0, %s211
    %s228 = sphi 0, %s212
    %s234 = sphi 0, %s236
    %s237 = sphi 0, %s234
    %s238 = sphi 0, %s237
    %s254 = sphi 0, %s238
    %s260 = sphi 0, %s262
    %s263 = sphi 0, %s260
    %s264 = sphi 0, %s263
    %s280 = sphi 0, %s264
    %s286 = sphi 0, %s288
    %s289 = sphi 0, %s286
    %s290 = sphi 0, %s289
    %s306 = sphi 0, %s290
    %s312 = sphi 0, %s314
    %s315 = sphi 0, %s312
    %s316 = sphi 0, %s315
    %s332 = sphi 0, %s316
    %s338 = sphi 0, %s340
    %s341 = sphi 0, %s338
    %s342 = sphi 0, %s341
    %s358 = sphi 0, %s342
    %s364 = sphi 0, %s366
    %s367 = sphi 0, %s364
    %s368 = sphi 0, %s367
    %s384 = sphi 0, %s368
    %s390 = sphi 0, %s392
    %s393 = sphi 0, %s390
    %s394 = sphi 0, %s393
    %s410 = sphi 0, %s394
    %s416 = sphi 0, %s418
    %s419 = sphi 0, %s416
    %s420 = sphi 0, %s419
    %s436 = sphi 0, %s420
    %s442 = sphi 0, %s444
    %s445 = sphi 0, %s442
    %s446 = sphi 0, %s445
    %s462 = sphi 0, %s446
    %s468 = sphi 0, %s470
    %s471 = sphi 0, %s468
    %s472 = sphi 0, %s471
    %s488 = sphi 0, %s472
    %s494 = sphi 0, %s496
    %s497 = sphi 0, %s494
    %s498 = sphi 0, %s497
    %s514 = sphi 0, %s498
    %s520 = sphi 0, %s522
    %s523 = sphi 0, %s520
    %s524 = sphi 0, %s523
    %s540 = sphi 0, %s524
    %s546 = sphi 0, %s548
    %s549 = sphi 0, %s546
    %s550 = sphi 0, %s549
    %s566 = sphi 0, %s550
  $region4: #{tpu_custom_call.1} parent=0 // loop_header_branch
    %29 = sbr.rel (%p27) target = $region8
  $region5: #{tpu_custom_call.1} parent=0 // loop_body
    %s31 = ssub.s32 %s26, 1
    %s32 = ssub.s32 %s26, 2
    %s33 = sadd.s32 %s26, 1
    %s34 = ssub.s32 %s26, %s33
    %p35 = scmp.eq.s32.totalorder %s34, 0
    %s37 = sadd.s32 %s36, 1
    %s38 = scalar_select %p35, %s36, %s37
    %p41 = pneg %p35
    %p42 = scmp.eq.s32.totalorder %s26, 2
    %p43 = por %p41, %p42
    %p44 = scmp.ne.s32.totalorder %s36, %s39
    %p45 = scmp.eq.s32.totalorder %s26, 0
    %p46 = por %p44, %p45
    %p47 = scmp.ne.s32.totalorder %s36, %s39
    %p48 = scmp.eq.s32.totalorder %s31, 2
    %p49 = por %p47, %p48
    %p50 = scmp.ne.s32.totalorder %s39, %s40
    %p51 = scmp.eq.s32.totalorder %s31, 0
    %p52 = por %p50, %p51
    %p53 = scmp.ne.s32.totalorder %s39, %s40
    %p54 = scmp.eq.s32.totalorder %s32, 2
    %p55 = por %p53, %p54
    %p57 = scmp.ne.s32.totalorder %s40, %s56
    %p58 = scmp.eq.s32.totalorder %s32, 0
    %p59 = por %p57, %p58
    %s61 = sadd.s32 %s60, 1
    %p64 = scmp.eq.s32.totalorder %s26, 2
    %p65 = scmp.ne.s32.totalorder %s60, %s62
    %p66 = scmp.eq.s32.totalorder %s26, 0
    %p67 = por %p65, %p66
    %p68 = scmp.ne.s32.totalorder %s60, %s62
    %p69 = scmp.eq.s32.totalorder %s31, 2
    %p70 = por %p68, %p69
    %p71 = scmp.ne.s32.totalorder %s62, %s63
    %p72 = scmp.eq.s32.totalorder %s31, 0
    %p73 = por %p71, %p72
    %p74 = scmp.ne.s32.totalorder %s62, %s63
    %p75 = scmp.eq.s32.totalorder %s32, 2
    %p76 = por %p74, %p75
    %p78 = scmp.ne.s32.totalorder %s63, %s77
    %p79 = scmp.eq.s32.totalorder %s32, 0
    %p80 = por %p78, %p79
    %s82 = sadd.s32 %s81, 1
    %p85 = scmp.eq.s32.totalorder %s26, 2
    %p86 = scmp.ne.s32.totalorder %s81, %s83
    %p87 = scmp.eq.s32.totalorder %s26, 0
    %p88 = por %p86, %p87
    %p89 = scmp.ne.s32.totalorder %s81, %s83
    %p90 = scmp.eq.s32.totalorder %s31, 2
    %p91 = por %p89, %p90
    %p92 = scmp.ne.s32.totalorder %s83, %s84
    %p93 = scmp.eq.s32.totalorder %s31, 0
    %p94 = por %p92, %p93
    %p95 = scmp.ne.s32.totalorder %s83, %s84
    %p96 = scmp.eq.s32.totalorder %s32, 2
    %p97 = por %p95, %p96
    %p99 = scmp.ne.s32.totalorder %s84, %s98
    %p100 = scmp.eq.s32.totalorder %s32, 0
    %p101 = por %p99, %p100
    %s102 = ssub.s32 %s26, %s33
    %p103 = scmp.eq.s32.totalorder %s102, 0
    %s105 = sadd.s32 %s104, 1
    %s106 = scalar_select %p103, %s104, %s105
    %p109 = pneg %p103
    %p110 = scmp.eq.s32.totalorder %s26, 2
    %p111 = por %p109, %p110
    %p112 = scmp.ne.s32.totalorder %s104, %s107
    %p113 = scmp.eq.s32.totalorder %s26, 0
    %p114 = por %p112, %p113
    %p115 = scmp.ne.s32.totalorder %s104, %s107
    %p116 = scmp.eq.s32.totalorder %s31, 2
    %p117 = por %p115, %p116
    %p118 = scmp.ne.s32.totalorder %s107, %s108
    %p119 = scmp.eq.s32.totalorder %s31, 0
    %p120 = por %p118, %p119
    %p121 = scmp.ne.s32.totalorder %s107, %s108
    %p122 = scmp.eq.s32.totalorder %s32, 2
    %p123 = por %p121, %p122
    %p125 = scmp.ne.s32.totalorder %s108, %s124
    %p126 = scmp.eq.s32.totalorder %s32, 0
    %p127 = por %p125, %p126
    %s128 = ssub.s32 %s26, %s33
    %p129 = scmp.eq.s32.totalorder %s128, 0
    %s131 = sadd.s32 %s130, 1
    %s132 = scalar_select %p129, %s130, %s131
    %p135 = pneg %p129
    %p136 = scmp.eq.s32.totalorder %s26, 2
    %p137 = por %p135, %p136
    %p138 = scmp.ne.s32.totalorder %s130, %s133
    %p139 = scmp.eq.s32.totalorder %s26, 0
    %p140 = por %p138, %p139
    %p141 = scmp.ne.s32.totalorder %s130, %s133
    %p142 = scmp.eq.s32.totalorder %s31, 2
    %p143 = por %p141, %p142
    %p144 = scmp.ne.s32.totalorder %s133, %s134
    %p145 = scmp.eq.s32.totalorder %s31, 0
    %p146 = por %p144, %p145
    %p147 = scmp.ne.s32.totalorder %s133, %s134
    %p148 = scmp.eq.s32.totalorder %s32, 2
    %p149 = por %p147, %p148
    %p151 = scmp.ne.s32.totalorder %s134, %s150
    %p152 = scmp.eq.s32.totalorder %s32, 0
    %p153 = por %p151, %p152
    %s154 = ssub.s32 %s26, %s33
    %p155 = scmp.eq.s32.totalorder %s154, 0
    %s157 = sadd.s32 %s156, 1
    %s158 = scalar_select %p155, %s156, %s157
    %p161 = pneg %p155
    %p162 = scmp.eq.s32.totalorder %s26, 2
    %p163 = por %p161, %p162
    %p164 = scmp.ne.s32.totalorder %s156, %s159
    %p165 = scmp.eq.s32.totalorder %s26, 0
    %p166 = por %p164, %p165
    %p167 = scmp.ne.s32.totalorder %s156, %s159
    %p168 = scmp.eq.s32.totalorder %s31, 2
    %p169 = por %p167, %p168
    %p170 = scmp.ne.s32.totalorder %s159, %s160
    %p171 = scmp.eq.s32.totalorder %s31, 0
    %p172 = por %p170, %p171
    %p173 = scmp.ne.s32.totalorder %s159, %s160
    %p174 = scmp.eq.s32.totalorder %s32, 2
    %p175 = por %p173, %p174
    %p177 = scmp.ne.s32.totalorder %s160, %s176
    %p178 = scmp.eq.s32.totalorder %s32, 0
    %p179 = por %p177, %p178
    %s180 = ssub.s32 %s26, %s33
    %p181 = scmp.eq.s32.totalorder %s180, 0
    %s183 = sadd.s32 %s182, 1
    %s184 = scalar_select %p181, %s182, %s183
    %p187 = pneg %p181
    %p188 = scmp.eq.s32.totalorder %s26, 2
    %p189 = por %p187, %p188
    %p190 = scmp.ne.s32.totalorder %s182, %s185
    %p191 = scmp.eq.s32.totalorder %s26, 0
    %p192 = por %p190, %p191
    %p193 = scmp.ne.s32.totalorder %s182, %s185
    %p194 = scmp.eq.s32.totalorder %s31, 2
    %p195 = por %p193, %p194
    %p196 = scmp.ne.s32.totalorder %s185, %s186
    %p197 = scmp.eq.s32.totalorder %s31, 0
    %p198 = por %p196, %p197
    %p199 = scmp.ne.s32.totalorder %s185, %s186
    %p200 = scmp.eq.s32.totalorder %s32, 2
    %p201 = por %p199, %p200
    %p203 = scmp.ne.s32.totalorder %s186, %s202
    %p204 = scmp.eq.s32.totalorder %s32, 0
    %p205 = por %p203, %p204
    %s206 = ssub.s32 %s26, %s33
    %p207 = scmp.eq.s32.totalorder %s206, 0
    %s209 = sadd.s32 %s208, 1
    %s210 = scalar_select %p207, %s208, %s209
    %p213 = pneg %p207
    %p214 = scmp.eq.s32.totalorder %s26, 2
    %p215 = por %p213, %p214
    %p216 = scmp.ne.s32.totalorder %s208, %s211
    %p217 = scmp.eq.s32.totalorder %s26, 0
    %p218 = por %p216, %p217
    %p219 = scmp.ne.s32.totalorder %s208, %s211
    %p220 = scmp.eq.s32.totalorder %s31, 2
    %p221 = por %p219, %p220
    %p222 = scmp.ne.s32.totalorder %s211, %s212
    %p223 = scmp.eq.s32.totalorder %s31, 0
    %p224 = por %p222, %p223
    %p225 = scmp.ne.s32.totalorder %s211, %s212
    %p226 = scmp.eq.s32.totalorder %s32, 2
    %p227 = por %p225, %p226
    %p229 = scmp.ne.s32.totalorder %s212, %s228
    %p230 = scmp.eq.s32.totalorder %s32, 0
    %p231 = por %p229, %p230
    %s232 = ssub.s32 %s26, %s33
    %p233 = scmp.eq.s32.totalorder %s232, 0
    %s235 = sadd.s32 %s234, 1
    %s236 = scalar_select %p233, %s234, %s235
    %p239 = pneg %p233
    %p240 = scmp.eq.s32.totalorder %s26, 2
    %p241 = por %p239, %p240
    %p242 = scmp.ne.s32.totalorder %s234, %s237
    %p243 = scmp.eq.s32.totalorder %s26, 0
    %p244 = por %p242, %p243
    %p245 = scmp.ne.s32.totalorder %s234, %s237
    %p246 = scmp.eq.s32.totalorder %s31, 2
    %p247 = por %p245, %p246
    %p248 = scmp.ne.s32.totalorder %s237, %s238
    %p249 = scmp.eq.s32.totalorder %s31, 0
    %p250 = por %p248, %p249
    %p251 = scmp.ne.s32.totalorder %s237, %s238
    %p252 = scmp.eq.s32.totalorder %s32, 2
    %p253 = por %p251, %p252
    %p255 = scmp.ne.s32.totalorder %s238, %s254
    %p256 = scmp.eq.s32.totalorder %s32, 0
    %p257 = por %p255, %p256
    %s258 = ssub.s32 %s26, %s33
    %p259 = scmp.eq.s32.totalorder %s258, 0
    %s261 = sadd.s32 %s260, 1
    %s262 = scalar_select %p259, %s260, %s261
    %p265 = pneg %p259
    %p266 = scmp.eq.s32.totalorder %s26, 2
    %p267 = por %p265, %p266
    %p268 = scmp.ne.s32.totalorder %s260, %s263
    %p269 = scmp.eq.s32.totalorder %s26, 0
    %p270 = por %p268, %p269
    %p271 = scmp.ne.s32.totalorder %s260, %s263
    %p272 = scmp.eq.s32.totalorder %s31, 2
    %p273 = por %p271, %p272
    %p274 = scmp.ne.s32.totalorder %s263, %s264
    %p275 = scmp.eq.s32.totalorder %s31, 0
    %p276 = por %p274, %p275
    %p277 = scmp.ne.s32.totalorder %s263, %s264
    %p278 = scmp.eq.s32.totalorder %s32, 2
    %p279 = por %p277, %p278
    %p281 = scmp.ne.s32.totalorder %s264, %s280
    %p282 = scmp.eq.s32.totalorder %s32, 0
    %p283 = por %p281, %p282
    %s284 = ssub.s32 %s26, %s33
    %p285 = scmp.eq.s32.totalorder %s284, 0
    %s287 = sadd.s32 %s286, 1
    %s288 = scalar_select %p285, %s286, %s287
    %p291 = pneg %p285
    %p292 = scmp.eq.s32.totalorder %s26, 2
    %p293 = por %p291, %p292
    %p294 = scmp.ne.s32.totalorder %s286, %s289
    %p295 = scmp.eq.s32.totalorder %s26, 0
    %p296 = por %p294, %p295
    %p297 = scmp.ne.s32.totalorder %s286, %s289
    %p298 = scmp.eq.s32.totalorder %s31, 2
    %p299 = por %p297, %p298
    %p300 = scmp.ne.s32.totalorder %s289, %s290
    %p301 = scmp.eq.s32.totalorder %s31, 0
    %p302 = por %p300, %p301
    %p303 = scmp.ne.s32.totalorder %s289, %s290
    %p304 = scmp.eq.s32.totalorder %s32, 2
    %p305 = por %p303, %p304
    %p307 = scmp.ne.s32.totalorder %s290, %s306
    %p308 = scmp.eq.s32.totalorder %s32, 0
    %p309 = por %p307, %p308
    %s310 = ssub.s32 %s26, %s33
    %p311 = scmp.eq.s32.totalorder %s310, 0
    %s313 = sadd.s32 %s312, 1
    %s314 = scalar_select %p311, %s312, %s313
    %p317 = pneg %p311
    %p318 = scmp.eq.s32.totalorder %s26, 2
    %p319 = por %p317, %p318
    %p320 = scmp.ne.s32.totalorder %s312, %s315
    %p321 = scmp.eq.s32.totalorder %s26, 0
    %p322 = por %p320, %p321
    %p323 = scmp.ne.s32.totalorder %s312, %s315
    %p324 = scmp.eq.s32.totalorder %s31, 2
    %p325 = por %p323, %p324
    %p326 = scmp.ne.s32.totalorder %s315, %s316
    %p327 = scmp.eq.s32.totalorder %s31, 0
    %p328 = por %p326, %p327
    %p329 = scmp.ne.s32.totalorder %s315, %s316
    %p330 = scmp.eq.s32.totalorder %s32, 2
    %p331 = por %p329, %p330
    %p333 = scmp.ne.s32.totalorder %s316, %s332
    %p334 = scmp.eq.s32.totalorder %s32, 0
    %p335 = por %p333, %p334
    %s336 = ssub.s32 %s26, %s33
    %p337 = scmp.eq.s32.totalorder %s336, 0
    %s339 = sadd.s32 %s338, 1
    %s340 = scalar_select %p337, %s338, %s339
    %p343 = pneg %p337
    %p344 = scmp.eq.s32.totalorder %s26, 2
    %p345 = por %p343, %p344
    %p346 = scmp.ne.s32.totalorder %s338, %s341
    %p347 = scmp.eq.s32.totalorder %s26, 0
    %p348 = por %p346, %p347
    %p349 = scmp.ne.s32.totalorder %s338, %s341
    %p350 = scmp.eq.s32.totalorder %s31, 2
    %p351 = por %p349, %p350
    %p352 = scmp.ne.s32.totalorder %s341, %s342
    %p353 = scmp.eq.s32.totalorder %s31, 0
    %p354 = por %p352, %p353
    %p355 = scmp.ne.s32.totalorder %s341, %s342
    %p356 = scmp.eq.s32.totalorder %s32, 2
    %p357 = por %p355, %p356
    %p359 = scmp.ne.s32.totalorder %s342, %s358
    %p360 = scmp.eq.s32.totalorder %s32, 0
    %p361 = por %p359, %p360
    %s362 = ssub.s32 %s26, %s33
    %p363 = scmp.eq.s32.totalorder %s362, 0
    %s365 = sadd.s32 %s364, 1
    %s366 = scalar_select %p363, %s364, %s365
    %p369 = pneg %p363
    %p370 = scmp.eq.s32.totalorder %s26, 2
    %p371 = por %p369, %p370
    %p372 = scmp.ne.s32.totalorder %s364, %s367
    %p373 = scmp.eq.s32.totalorder %s26, 0
    %p374 = por %p372, %p373
    %p375 = scmp.ne.s32.totalorder %s364, %s367
    %p376 = scmp.eq.s32.totalorder %s31, 2
    %p377 = por %p375, %p376
    %p378 = scmp.ne.s32.totalorder %s367, %s368
    %p379 = scmp.eq.s32.totalorder %s31, 0
    %p380 = por %p378, %p379
    %p381 = scmp.ne.s32.totalorder %s367, %s368
    %p382 = scmp.eq.s32.totalorder %s32, 2
    %p383 = por %p381, %p382
    %p385 = scmp.ne.s32.totalorder %s368, %s384
    %p386 = scmp.eq.s32.totalorder %s32, 0
    %p387 = por %p385, %p386
    %s388 = ssub.s32 %s26, %s33
    %p389 = scmp.eq.s32.totalorder %s388, 0
    %s391 = sadd.s32 %s390, 1
    %s392 = scalar_select %p389, %s390, %s391
    %p395 = pneg %p389
    %p396 = scmp.eq.s32.totalorder %s26, 2
    %p397 = por %p395, %p396
    %p398 = scmp.ne.s32.totalorder %s390, %s393
    %p399 = scmp.eq.s32.totalorder %s26, 0
    %p400 = por %p398, %p399
    %p401 = scmp.ne.s32.totalorder %s390, %s393
    %p402 = scmp.eq.s32.totalorder %s31, 2
    %p403 = por %p401, %p402
    %p404 = scmp.ne.s32.totalorder %s393, %s394
    %p405 = scmp.eq.s32.totalorder %s31, 0
    %p406 = por %p404, %p405
    %p407 = scmp.ne.s32.totalorder %s393, %s394
    %p408 = scmp.eq.s32.totalorder %s32, 2
    %p409 = por %p407, %p408
    %p411 = scmp.ne.s32.totalorder %s394, %s410
    %p412 = scmp.eq.s32.totalorder %s32, 0
    %p413 = por %p411, %p412
    %s414 = ssub.s32 %s26, %s33
    %p415 = scmp.eq.s32.totalorder %s414, 0
    %s417 = sadd.s32 %s416, 1
    %s418 = scalar_select %p415, %s416, %s417
    %p421 = pneg %p415
    %p422 = scmp.eq.s32.totalorder %s26, 2
    %p423 = por %p421, %p422
    %p424 = scmp.ne.s32.totalorder %s416, %s419
    %p425 = scmp.eq.s32.totalorder %s26, 0
    %p426 = por %p424, %p425
    %p427 = scmp.ne.s32.totalorder %s416, %s419
    %p428 = scmp.eq.s32.totalorder %s31, 2
    %p429 = por %p427, %p428
    %p430 = scmp.ne.s32.totalorder %s419, %s420
    %p431 = scmp.eq.s32.totalorder %s31, 0
    %p432 = por %p430, %p431
    %p433 = scmp.ne.s32.totalorder %s419, %s420
    %p434 = scmp.eq.s32.totalorder %s32, 2
    %p435 = por %p433, %p434
    %p437 = scmp.ne.s32.totalorder %s420, %s436
    %p438 = scmp.eq.s32.totalorder %s32, 0
    %p439 = por %p437, %p438
    %s440 = ssub.s32 %s26, %s33
    %p441 = scmp.eq.s32.totalorder %s440, 0
    %s443 = sadd.s32 %s442, 1
    %s444 = scalar_select %p441, %s442, %s443
    %p447 = pneg %p441
    %p448 = scmp.eq.s32.totalorder %s26, 2
    %p449 = por %p447, %p448
    %p450 = scmp.ne.s32.totalorder %s442, %s445
    %p451 = scmp.eq.s32.totalorder %s26, 0
    %p452 = por %p450, %p451
    %p453 = scmp.ne.s32.totalorder %s442, %s445
    %p454 = scmp.eq.s32.totalorder %s31, 2
    %p455 = por %p453, %p454
    %p456 = scmp.ne.s32.totalorder %s445, %s446
    %p457 = scmp.eq.s32.totalorder %s31, 0
    %p458 = por %p456, %p457
    %p459 = scmp.ne.s32.totalorder %s445, %s446
    %p460 = scmp.eq.s32.totalorder %s32, 2
    %p461 = por %p459, %p460
    %p463 = scmp.ne.s32.totalorder %s446, %s462
    %p464 = scmp.eq.s32.totalorder %s32, 0
    %p465 = por %p463, %p464
    %s466 = ssub.s32 %s26, %s33
    %p467 = scmp.eq.s32.totalorder %s466, 0
    %s469 = sadd.s32 %s468, 1
    %s470 = scalar_select %p467, %s468, %s469
    %p473 = pneg %p467
    %p474 = scmp.eq.s32.totalorder %s26, 2
    %p475 = por %p473, %p474
    %p476 = scmp.ne.s32.totalorder %s468, %s471
    %p477 = scmp.eq.s32.totalorder %s26, 0
    %p478 = por %p476, %p477
    %p479 = scmp.ne.s32.totalorder %s468, %s471
    %p480 = scmp.eq.s32.totalorder %s31, 2
    %p481 = por %p479, %p480
    %p482 = scmp.ne.s32.totalorder %s471, %s472
    %p483 = scmp.eq.s32.totalorder %s31, 0
    %p484 = por %p482, %p483
    %p485 = scmp.ne.s32.totalorder %s471, %s472
    %p486 = scmp.eq.s32.totalorder %s32, 2
    %p487 = por %p485, %p486
    %p489 = scmp.ne.s32.totalorder %s472, %s488
    %p490 = scmp.eq.s32.totalorder %s32, 0
    %p491 = por %p489, %p490
    %s492 = ssub.s32 %s26, %s33
    %p493 = scmp.eq.s32.totalorder %s492, 0
    %s495 = sadd.s32 %s494, 1
    %s496 = scalar_select %p493, %s494, %s495
    %p499 = pneg %p493
    %p500 = scmp.eq.s32.totalorder %s26, 2
    %p501 = por %p499, %p500
    %p502 = scmp.ne.s32.totalorder %s494, %s497
    %p503 = scmp.eq.s32.totalorder %s26, 0
    %p504 = por %p502, %p503
    %p505 = scmp.ne.s32.totalorder %s494, %s497
    %p506 = scmp.eq.s32.totalorder %s31, 2
    %p507 = por %p505, %p506
    %p508 = scmp.ne.s32.totalorder %s497, %s498
    %p509 = scmp.eq.s32.totalorder %s31, 0
    %p510 = por %p508, %p509
    %p511 = scmp.ne.s32.totalorder %s497, %s498
    %p512 = scmp.eq.s32.totalorder %s32, 2
    %p513 = por %p511, %p512
    %p515 = scmp.ne.s32.totalorder %s498, %s514
    %p516 = scmp.eq.s32.totalorder %s32, 0
    %p517 = por %p515, %p516
    %s518 = ssub.s32 %s26, %s33
    %p519 = scmp.eq.s32.totalorder %s518, 0
    %s521 = sadd.s32 %s520, 1
    %s522 = scalar_select %p519, %s520, %s521
    %p525 = pneg %p519
    %p526 = scmp.eq.s32.totalorder %s26, 2
    %p527 = por %p525, %p526
    %p528 = scmp.ne.s32.totalorder %s520, %s523
    %p529 = scmp.eq.s32.totalorder %s26, 0
    %p530 = por %p528, %p529
    %p531 = scmp.ne.s32.totalorder %s520, %s523
    %p532 = scmp.eq.s32.totalorder %s31, 2
    %p533 = por %p531, %p532
    %p534 = scmp.ne.s32.totalorder %s523, %s524
    %p535 = scmp.eq.s32.totalorder %s31, 0
    %p536 = por %p534, %p535
    %p537 = scmp.ne.s32.totalorder %s523, %s524
    %p538 = scmp.eq.s32.totalorder %s32, 2
    %p539 = por %p537, %p538
    %p541 = scmp.ne.s32.totalorder %s524, %s540
    %p542 = scmp.eq.s32.totalorder %s32, 0
    %p543 = por %p541, %p542
    %s544 = ssub.s32 %s26, %s33
    %p545 = scmp.eq.s32.totalorder %s544, 0
    %s547 = sadd.s32 %s546, 1
    %s548 = scalar_select %p545, %s546, %s547
    %p551 = pneg %p545
    %p552 = scmp.eq.s32.totalorder %s26, 2
    %p553 = por %p551, %p552
    %p554 = scmp.ne.s32.totalorder %s546, %s549
    %p555 = scmp.eq.s32.totalorder %s26, 0
    %p556 = por %p554, %p555
    %p557 = scmp.ne.s32.totalorder %s546, %s549
    %p558 = scmp.eq.s32.totalorder %s31, 2
    %p559 = por %p557, %p558
    %p560 = scmp.ne.s32.totalorder %s549, %s550
    %p561 = scmp.eq.s32.totalorder %s31, 0
    %p562 = por %p560, %p561
    %p563 = scmp.ne.s32.totalorder %s549, %s550
    %p564 = scmp.eq.s32.totalorder %s32, 2
    %p565 = por %p563, %p564
    %p567 = scmp.ne.s32.totalorder %s550, %s566
    %p568 = scmp.eq.s32.totalorder %s32, 0
    %p569 = por %p567, %p568
    %p570 = scmp.le.s32.totalorder 1, %s26
    %p571 = scmp.lt.s32.totalorder %s26, 4
    %p572 = pnand %p570, %p571
    %p573 = pneg %p572
    // Predicated region
    $region9: #{tpu_custom_call.1} parent=5 // pred_check
      _
    $region10: #{tpu_custom_call.1} parent=5 // pred_check_branch
      %575 = sbr.rel (%p572) target = $region12
    $region11: #{tpu_custom_call.1} parent=5 // pred_region
      %s576 = ssub.s32 %s26, 1
      // Predicated region
      $region13: #{tpu_custom_call.1} parent=11 // pred_check
        %p577 = pneg %p73
      $region14: #{tpu_custom_call.1} parent=11 // pred_check_branch
        %579 = sbr.rel (%p577) target = $region16
      $region15: #{tpu_custom_call.1} parent=11 // pred_region
        _
      $region16: #{tpu_custom_call.1} parent=11 // pred_fallthru
        _
      // Predicated region
      $region17: #{tpu_custom_call.1} parent=11 // pred_check
        %p580 = pneg %p94
      $region18: #{tpu_custom_call.1} parent=11 // pred_check_branch
        %582 = sbr.rel (%p580) target = $region20
      $region19: #{tpu_custom_call.1} parent=11 // pred_region
        _
      $region20: #{tpu_custom_call.1} parent=11 // pred_fallthru
        _
    $region12: #{tpu_custom_call.1} parent=5 // pred_fallthru
      _
    %p583 = scmp.lt.s32.totalorder %s26, 3
    // Predicated region
    $region21: #{tpu_custom_call.1} parent=5 // pred_check
      %p584 = pneg %p583
    $region22: #{tpu_custom_call.1} parent=5 // pred_check_branch
      %586 = sbr.rel (%p584) target = $region24
    $region23: #{tpu_custom_call.1} parent=5 // pred_region
      // Predicated region
      $region25: #{tpu_custom_call.1} parent=23 // pred_check
        %p587 = pneg %p46
      $region26: #{tpu_custom_call.1} parent=23 // pred_check_branch
        %589 = sbr.rel (%p587) target = $region28
      $region27: #{tpu_custom_call.1} parent=23 // pred_region
        %p590 = scmp.lt.s32.totalorder %s26, 2
        %s591 = scalar_select %p590, %s26, 2
        %s592 = smul.addr %s591, 5
        %s593 = smul.addr %s592, 8
        %s594 = scalar_lea.vmem %s0, %s593
      $region28: #{tpu_custom_call.1} parent=23 // pred_fallthru
        _
      // Predicated region
      $region29: #{tpu_custom_call.1} parent=23 // pred_check
        %p595 = pneg %p114
      $region30: #{tpu_custom_call.1} parent=23 // pred_check_branch
        %597 = sbr.rel (%p595) target = $region32
      $region31: #{tpu_custom_call.1} parent=23 // pred_region
        %p598 = scmp.lt.s32.totalorder %s26, 2
        %s599 = scalar_select %p598, %s26, 2
        %s600 = smul.addr %s599, 8
        %s601 = scalar_lea.vmem %s3, %s600
      $region32: #{tpu_custom_call.1} parent=23 // pred_fallthru
        _
      // Predicated region
      $region33: #{tpu_custom_call.1} parent=23 // pred_check
        %p602 = pneg %p140
      $region34: #{tpu_custom_call.1} parent=23 // pred_check_branch
        %604 = sbr.rel (%p602) target = $region36
      $region35: #{tpu_custom_call.1} parent=23 // pred_region
        %p605 = scmp.lt.s32.totalorder %s26, 2
        %s606 = scalar_select %p605, %s26, 2
        %s607 = scalar_lea.vmem %s4, %s606
      $region36: #{tpu_custom_call.1} parent=23 // pred_fallthru
        _
      // Predicated region
      $region37: #{tpu_custom_call.1} parent=23 // pred_check
        %p608 = pneg %p166
      $region38: #{tpu_custom_call.1} parent=23 // pred_check_branch
        %610 = sbr.rel (%p608) target = $region40
      $region39: #{tpu_custom_call.1} parent=23 // pred_region
        %p611 = scmp.lt.s32.totalorder %s26, 2
        %s612 = scalar_select %p611, %s26, 2
        %s613 = smul.addr %s612, 2
        %s614 = smul.addr %s613, 8
        %s615 = scalar_lea.vmem %s5, %s614
      $region40: #{tpu_custom_call.1} parent=23 // pred_fallthru
        _
      // Predicated region
      $region41: #{tpu_custom_call.1} parent=23 // pred_check
        %p616 = pneg %p192
      $region42: #{tpu_custom_call.1} parent=23 // pred_check_branch
        %618 = sbr.rel (%p616) target = $region44
      $region43: #{tpu_custom_call.1} parent=23 // pred_region
        %p619 = scmp.lt.s32.totalorder %s26, 2
        %s620 = scalar_select %p619, %s26, 2
        %s621 = scalar_lea.vmem %s6, %s620
      $region44: #{tpu_custom_call.1} parent=23 // pred_fallthru
        _
      // Predicated region
      $region45: #{tpu_custom_call.1} parent=23 // pred_check
        %p622 = pneg %p218
      $region46: #{tpu_custom_call.1} parent=23 // pred_check_branch
        %624 = sbr.rel (%p622) target = $region48
      $region47: #{tpu_custom_call.1} parent=23 // pred_region
        %p625 = scmp.lt.s32.totalorder %s26, 2
        %s626 = scalar_select %p625, %s26, 2
        %s627 = smul.addr %s626, 2
        %s628 = smul.addr %s627, 8
        %s629 = scalar_lea.vmem %s7, %s628
      $region48: #{tpu_custom_call.1} parent=23 // pred_fallthru
        _
      // Predicated region
      $region49: #{tpu_custom_call.1} parent=23 // pred_check
        %p630 = pneg %p244
      $region50: #{tpu_custom_call.1} parent=23 // pred_check_branch
        %632 = sbr.rel (%p630) target = $region52
      $region51: #{tpu_custom_call.1} parent=23 // pred_region
        %p633 = scmp.lt.s32.totalorder %s26, 2
        %s634 = scalar_select %p633, %s26, 2
        %s635 = scalar_lea.vmem %s8, %s634
      $region52: #{tpu_custom_call.1} parent=23 // pred_fallthru
        _
      // Predicated region
      $region53: #{tpu_custom_call.1} parent=23 // pred_check
        %p636 = pneg %p270
      $region54: #{tpu_custom_call.1} parent=23 // pred_check_branch
        %638 = sbr.rel (%p636) target = $region56
      $region55: #{tpu_custom_call.1} parent=23 // pred_region
        %p639 = scmp.lt.s32.totalorder %s26, 2
        %s640 = scalar_select %p639, %s26, 2
        %s641 = scalar_lea.vmem %s9, %s640
      $region56: #{tpu_custom_call.1} parent=23 // pred_fallthru
        _
      // Predicated region
      $region57: #{tpu_custom_call.1} parent=23 // pred_check
        %p642 = pneg %p296
      $region58: #{tpu_custom_call.1} parent=23 // pred_check_branch
        %644 = sbr.rel (%p642) target = $region60
      $region59: #{tpu_custom_call.1} parent=23 // pred_region
        %p645 = scmp.lt.s32.totalorder %s26, 2
        %s646 = scalar_select %p645, %s26, 2
        %s647 = scalar_lea.vmem %s10, %s646
      $region60: #{tpu_custom_call.1} parent=23 // pred_fallthru
        _
      // Predicated region
      $region61: #{tpu_custom_call.1} parent=23 // pred_check
        %p648 = pneg %p322
      $region62: #{tpu_custom_call.1} parent=23 // pred_check_branch
        %650 = sbr.rel (%p648) target = $region64
      $region63: #{tpu_custom_call.1} parent=23 // pred_region
        %p651 = scmp.lt.s32.totalorder %s26, 2
        %s652 = scalar_select %p651, %s26, 2
        %s653 = smul.addr %s652, 32
        %s654 = smul.addr %s653, 4
        %s655 = scalar_lea.vmem %s11, %s654
      $region64: #{tpu_custom_call.1} parent=23 // pred_fallthru
        _
      // Predicated region
      $region65: #{tpu_custom_call.1} parent=23 // pred_check
        %p656 = pneg %p348
      $region66: #{tpu_custom_call.1} parent=23 // pred_check_branch
        %658 = sbr.rel (%p656) target = $region68
      $region67: #{tpu_custom_call.1} parent=23 // pred_region
        %p659 = scmp.lt.s32.totalorder %s26, 2
        %s660 = scalar_select %p659, %s26, 2
        %s661 = smul.addr %s660, 16
        %s662 = scalar_lea.vmem %s12, %s661
      $region68: #{tpu_custom_call.1} parent=23 // pred_fallthru
        _
      // Predicated region
      $region69: #{tpu_custom_call.1} parent=23 // pred_check
        %p663 = pneg %p374
      $region70: #{tpu_custom_call.1} parent=23 // pred_check_branch
        %665 = sbr.rel (%p663) target = $region72
      $region71: #{tpu_custom_call.1} parent=23 // pred_region
        %p666 = scmp.lt.s32.totalorder %s26, 2
        %s667 = scalar_select %p666, %s26, 2
        %s668 = smul.addr %s667, 256
        %s669 = smul.addr %s668, 4
        %s670 = scalar_lea.vmem %s13, %s669
      $region72: #{tpu_custom_call.1} parent=23 // pred_fallthru
        _
      // Predicated region
      $region73: #{tpu_custom_call.1} parent=23 // pred_check
        %p671 = pneg %p400
      $region74: #{tpu_custom_call.1} parent=23 // pred_check_branch
        %673 = sbr.rel (%p671) target = $region76
      $region75: #{tpu_custom_call.1} parent=23 // pred_region
        %p674 = scmp.lt.s32.totalorder %s26, 2
        %s675 = scalar_select %p674, %s26, 2
        %s676 = scalar_lea.vmem %s14, %s675
      $region76: #{tpu_custom_call.1} parent=23 // pred_fallthru
        _
      // Predicated region
      $region77: #{tpu_custom_call.1} parent=23 // pred_check
        %p677 = pneg %p426
      $region78: #{tpu_custom_call.1} parent=23 // pred_check_branch
        %679 = sbr.rel (%p677) target = $region80
      $region79: #{tpu_custom_call.1} parent=23 // pred_region
        %p680 = scmp.lt.s32.totalorder %s26, 2
        %s681 = scalar_select %p680, %s26, 2
        %s682 = scalar_lea.vmem %s15, %s681
      $region80: #{tpu_custom_call.1} parent=23 // pred_fallthru
        _
      // Predicated region
      $region81: #{tpu_custom_call.1} parent=23 // pred_check
        %p683 = pneg %p452
      $region82: #{tpu_custom_call.1} parent=23 // pred_check_branch
        %685 = sbr.rel (%p683) target = $region84
      $region83: #{tpu_custom_call.1} parent=23 // pred_region
        %p686 = scmp.lt.s32.totalorder %s26, 2
        %s687 = scalar_select %p686, %s26, 2
        %s688 = scalar_lea.vmem %s16, %s687
      $region84: #{tpu_custom_call.1} parent=23 // pred_fallthru
        _
      // Predicated region
      $region85: #{tpu_custom_call.1} parent=23 // pred_check
        %p689 = pneg %p478
      $region86: #{tpu_custom_call.1} parent=23 // pred_check_branch
        %691 = sbr.rel (%p689) target = $region88
      $region87: #{tpu_custom_call.1} parent=23 // pred_region
        %p692 = scmp.lt.s32.totalorder %s26, 2
        %s693 = scalar_select %p692, %s26, 2
        %s694 = smul.addr %s693, 4
        %s695 = scalar_lea.vmem %s17, %s694
      $region88: #{tpu_custom_call.1} parent=23 // pred_fallthru
        _
      // Predicated region
      $region89: #{tpu_custom_call.1} parent=23 // pred_check
        %p696 = pneg %p504
      $region90: #{tpu_custom_call.1} parent=23 // pred_check_branch
        %698 = sbr.rel (%p696) target = $region92
      $region91: #{tpu_custom_call.1} parent=23 // pred_region
        %p699 = scmp.lt.s32.totalorder %s26, 2
        %s700 = scalar_select %p699, %s26, 2
        %s701 = scalar_lea.vmem %s18, %s700
      $region92: #{tpu_custom_call.1} parent=23 // pred_fallthru
        _
      // Predicated region
      $region93: #{tpu_custom_call.1} parent=23 // pred_check
        %p702 = pneg %p530
      $region94: #{tpu_custom_call.1} parent=23 // pred_check_branch
        %704 = sbr.rel (%p702) target = $region96
      $region95: #{tpu_custom_call.1} parent=23 // pred_region
        %p705 = scmp.lt.s32.totalorder %s26, 2
        %s706 = scalar_select %p705, %s26, 2
        %s707 = smul.addr %s706, 2
        %s708 = smul.addr %s707, 8
        %s709 = scalar_lea.vmem %s19, %s708
      $region96: #{tpu_custom_call.1} parent=23 // pred_fallthru
        _
    $region24: #{tpu_custom_call.1} parent=5 // pred_fallthru
      _
    %p710 = scmp.le.s32.totalorder 1, %s26
    %p711 = scmp.lt.s32.totalorder %s26, 4
    %p712 = pnand %p710, %p711
    %p713 = pneg %p712
    // Predicated region
    $region97: #{tpu_custom_call.1} parent=5 // pred_check
      _
    $region98: #{tpu_custom_call.1} parent=5 // pred_check_branch
      %715 = sbr.rel (%p712) target = $region100
    $region99: #{tpu_custom_call.1} parent=5 // pred_region
      %s716 = ssub.s32 %s26, 1
      %p717 = scmp.lt.s32.totalorder %s31, 2
      %s718 = scalar_select %p717, %s31, 2
      %s719 = smul.addr %s718, 5
      %s720 = smul.addr %s719, 8
      %s721 = scalar_lea.vmem %s0, %s720
      %p722 = pneg %p52
      %p723 = pneg %p49
      %p724 = pneg %p73
      %p725 = pneg %p70
      %p726 = pneg %p94
      %p727 = pneg %p91
      %p728 = scmp.lt.s32.totalorder %s31, 2
      %s729 = scalar_select %p728, %s31, 2
      %s730 = smul.addr %s729, 8
      %s731 = scalar_lea.vmem %s3, %s730
      %p732 = pneg %p120
      %p733 = pneg %p117
      %p734 = scmp.lt.s32.totalorder %s31, 2
      %s735 = scalar_select %p734, %s31, 2
      %s736 = scalar_lea.vmem %s4, %s735
      %p737 = pneg %p146
      %p738 = pneg %p143
      %p739 = scmp.lt.s32.totalorder %s31, 2
      %s740 = scalar_select %p739, %s31, 2
      %s741 = smul.addr %s740, 2
      %s742 = smul.addr %s741, 8
      %s743 = scalar_lea.vmem %s5, %s742
      %p744 = pneg %p172
      %p745 = pneg %p169
      %p746 = scmp.lt.s32.totalorder %s31, 2
      %s747 = scalar_select %p746, %s31, 2
      %s748 = scalar_lea.vmem %s6, %s747
      %p749 = pneg %p198
      %p750 = pneg %p195
      %p751 = scmp.lt.s32.totalorder %s31, 2
      %s752 = scalar_select %p751, %s31, 2
      %s753 = smul.addr %s752, 2
      %s754 = smul.addr %s753, 8
      %s755 = scalar_lea.vmem %s7, %s754
      %p756 = pneg %p224
      %p757 = pneg %p221
      %p758 = scmp.lt.s32.totalorder %s31, 2
      %s759 = scalar_select %p758, %s31, 2
      %s760 = scalar_lea.vmem %s8, %s759
      %p761 = pneg %p250
      %p762 = pneg %p247
      %p763 = scmp.lt.s32.totalorder %s31, 2
      %s764 = scalar_select %p763, %s31, 2
      %s765 = scalar_lea.vmem %s9, %s764
      %p766 = pneg %p276
      %p767 = pneg %p273
      %p768 = scmp.lt.s32.totalorder %s31, 2
      %s769 = scalar_select %p768, %s31, 2
      %s770 = scalar_lea.vmem %s10, %s769
      %p771 = pneg %p302
      %p772 = pneg %p299
      %p773 = scmp.lt.s32.totalorder %s31, 2
      %s774 = scalar_select %p773, %s31, 2
      %s775 = smul.addr %s774, 32
      %s776 = smul.addr %s775, 4
      %s777 = scalar_lea.vmem %s11, %s776
      %p778 = pneg %p328
      %p779 = pneg %p325
      %p780 = scmp.lt.s32.totalorder %s31, 2
      %s781 = scalar_select %p780, %s31, 2
      %s782 = smul.addr %s781, 16
      %s783 = scalar_lea.vmem %s12, %s782
      %p784 = pneg %p354
      %p785 = pneg %p351
      %p786 = scmp.lt.s32.totalorder %s31, 2
      %s787 = scalar_select %p786, %s31, 2
      %s788 = smul.addr %s787, 256
      %s789 = smul.addr %s788, 4
      %s790 = scalar_lea.vmem %s13, %s789
      %p791 = pneg %p380
      %p792 = pneg %p377
      %p793 = scmp.lt.s32.totalorder %s31, 2
      %s794 = scalar_select %p793, %s31, 2
      %s795 = scalar_lea.vmem %s14, %s794
      %p796 = pneg %p406
      %p797 = pneg %p403
      %p798 = scmp.lt.s32.totalorder %s31, 2
      %s799 = scalar_select %p798, %s31, 2
      %s800 = scalar_lea.vmem %s15, %s799
      %p801 = pneg %p432
      %p802 = pneg %p429
      %p803 = scmp.lt.s32.totalorder %s31, 2
      %s804 = scalar_select %p803, %s31, 2
      %s805 = scalar_lea.vmem %s16, %s804
      %p806 = pneg %p458
      %p807 = pneg %p455
      %p808 = scmp.lt.s32.totalorder %s31, 2
      %s809 = scalar_select %p808, %s31, 2
      %s810 = smul.addr %s809, 4
      %s811 = scalar_lea.vmem %s17, %s810
      %p812 = pneg %p484
      %p813 = pneg %p481
      %p814 = scmp.lt.s32.totalorder %s31, 2
      %s815 = scalar_select %p814, %s31, 2
      %s816 = scalar_lea.vmem %s18, %s815
      %p817 = pneg %p510
      %p818 = pneg %p507
      %p819 = scmp.lt.s32.totalorder %s31, 2
      %s820 = scalar_select %p819, %s31, 2
      %s821 = smul.addr %s820, 2
      %s822 = smul.addr %s821, 8
      %s823 = scalar_lea.vmem %s19, %s822
      %p824 = pneg %p536
      %p825 = pneg %p533
      %p826 = pneg %p562
      %p827 = pneg %p559
      %p828 = scmp.lt.s32.totalorder %s31, 2
      %s829 = scalar_select %p828, %s31, 2
      %s830 = smul.addr %s829, 4
      %s831 = scalar_lea.vmem %s20, %s830
      %p832 = scmp.lt.s32.totalorder %s31, 2
      %s833 = scalar_select %p832, %s31, 2
      %s834 = smul.addr %s833, 5
      %s835 = smul.addr %s834, 8
      %s836 = scalar_lea.vmem %s0, %s835
      %p837 = scmp.lt.s32.totalorder %s31, 2
      %s838 = scalar_select %p837, %s31, 2
      %s839 = smul.addr %s838, 8
      %s840 = scalar_lea.vmem %s3, %s839
      %p841 = scmp.lt.s32.totalorder %s31, 2
      %s842 = scalar_select %p841, %s31, 2
      %s843 = scalar_lea.vmem %s4, %s842
      %p844 = scmp.lt.s32.totalorder %s31, 2
      %s845 = scalar_select %p844, %s31, 2
      %s846 = smul.addr %s845, 2
      %s847 = smul.addr %s846, 8
      %s848 = scalar_lea.vmem %s5, %s847
      %p849 = scmp.lt.s32.totalorder %s31, 2
      %s850 = scalar_select %p849, %s31, 2
      %s851 = scalar_lea.vmem %s6, %s850
      %p852 = scmp.lt.s32.totalorder %s31, 2
      %s853 = scalar_select %p852, %s31, 2
      %s854 = smul.addr %s853, 2
      %s855 = smul.addr %s854, 8
      %s856 = scalar_lea.vmem %s7, %s855
      %p857 = scmp.lt.s32.totalorder %s31, 2
      %s858 = scalar_select %p857, %s31, 2
      %s859 = scalar_lea.vmem %s8, %s858
      %p860 = scmp.lt.s32.totalorder %s31, 2
      %s861 = scalar_select %p860, %s31, 2
      %s862 = scalar_lea.vmem %s9, %s861
      %p863 = scmp.lt.s32.totalorder %s31, 2
      %s864 = scalar_select %p863, %s31, 2
      %s865 = scalar_lea.vmem %s10, %s864
      %p866 = scmp.lt.s32.totalorder %s31, 2
      %s867 = scalar_select %p866, %s31, 2
      %s868 = smul.addr %s867, 32
      %s869 = smul.addr %s868, 4
      %s870 = scalar_lea.vmem %s11, %s869
      %p871 = scmp.lt.s32.totalorder %s31, 2
      %s872 = scalar_select %p871, %s31, 2
      %s873 = smul.addr %s872, 16
      %s874 = scalar_lea.vmem %s12, %s873
      %p875 = scmp.lt.s32.totalorder %s31, 2
      %s876 = scalar_select %p875, %s31, 2
      %s877 = smul.addr %s876, 256
      %s878 = smul.addr %s877, 4
      %s879 = scalar_lea.vmem %s13, %s878
      %p880 = scmp.lt.s32.totalorder %s31, 2
      %s881 = scalar_select %p880, %s31, 2
      %s882 = scalar_lea.vmem %s14, %s881
      %p883 = scmp.lt.s32.totalorder %s31, 2
      %s884 = scalar_select %p883, %s31, 2
      %s885 = scalar_lea.vmem %s15, %s884
      %p886 = scmp.lt.s32.totalorder %s31, 2
      %s887 = scalar_select %p886, %s31, 2
      %s888 = scalar_lea.vmem %s16, %s887
      %p889 = scmp.lt.s32.totalorder %s31, 2
      %s890 = scalar_select %p889, %s31, 2
      %s891 = smul.addr %s890, 4
      %s892 = scalar_lea.vmem %s17, %s891
      %p893 = scmp.lt.s32.totalorder %s31, 2
      %s894 = scalar_select %p893, %s31, 2
      %s895 = scalar_lea.vmem %s18, %s894
      %p896 = scmp.lt.s32.totalorder %s31, 2
      %s897 = scalar_select %p896, %s31, 2
      %s898 = smul.addr %s897, 2
      %s899 = smul.addr %s898, 8
      %s900 = scalar_lea.vmem %s19, %s899
      %p901 = scmp.lt.s32.totalorder %s31, 2
      %s902 = scalar_select %p901, %s31, 2
      %s903 = smul.addr %s902, 4
      %s904 = scalar_lea.vmem %s20, %s903
      %v906 = vld [vmem:[%s836] sm:$0xff]
      %v907 = vld [vmem:[%s836 + $0x8] sm:$0xff]
      %v908 = vld [vmem:[%s836 + $0x10] sm:$0xff]
      %v909 = vld [vmem:[%s836 + $0x18] sm:$0xff]
      %v910 = vld [vmem:[%s836 + $0x20] sm:$0xff]
      %v911 = vld [vmem:[%s840] sm:$0xff]
      %v912 = vld [vmem:[%s843] sm:$0x1]
      %v914 = vlaneseq
      %v915 = vshrl.u32 %v914, 7
      %v916 = vsub.s32 0, %v915
      %v917 = vrot.slane %v912, %v916
      %vm919 = vcmask 64512
      %v921 = vsel %vm919, %v906, 0
      %v924 = vsel %vm919, %v907, 0
      %v927 = vsel %vm919, %v908, 0
      %v930 = vsel %vm919, %v909, 0
      %v933 = vsel %vm919, %v910, 0
      %935 = vmatprep.subr.mxu0 0.0
      %936 = vmatpush1.msra.mxu0 %v911
      %937 = vmatprep.subr.mxu0 0.0
      %938 = vmatpush1.msra.mxu0 0.0
      %939 = vmatprep.subr.mxu0 0.0
      %940 = vmatpush1.msra.mxu0 0.0
      %941 = vmatprep.subr.mxu0 0.0
      %942 = vmatpush1.msra.mxu0 0.0
      %943 = vmatprep.subr.mxu0 0.0
      %944 = vmatpush1.msra.mxu0 0.0
      %945 = vmatprep.subr.mxu0 0.0
      %946 = vmatpush1.msra.mxu0 0.0
      %947 = vmatprep.subr.mxu0 0.0
      %948 = vmatpush1.msra.mxu0 0.0
      %949 = vmatprep.subr.mxu0 0.0
      %950 = vmatpush1.msra.mxu0 0.0
      %951 = vmatprep.subr.mxu0 0.0
      %952 = vmatpush1.msra.mxu0 0.0
      %953 = vmatprep.subr.mxu0 0.0
      %954 = vmatpush1.msra.mxu0 0.0
      %955 = vmatprep.subr.mxu0 0.0
      %956 = vmatpush1.msra.mxu0 0.0
      %957 = vmatprep.subr.mxu0 0.0
      %958 = vmatpush1.msra.mxu0 0.0
      %959 = vmatprep.subr.mxu0 0.0
      %960 = vmatpush1.msra.mxu0 0.0
      %961 = vmatprep.subr.mxu0 0.0
      %962 = vmatpush1.msra.mxu0 0.0
      %963 = vmatprep.subr.mxu0 0.0
      %964 = vmatpush1.msra.mxu0 0.0
      %965 = vmatprep.subr.mxu0 0.0
      %966 = vmatpush1.msra.mxu0 0.0
      %967 = vmatprep.subr.mxu0 0.0
      %968 = vmatpush1.msra.mxu0 0.0
      %969 = vmatprep.subr.mxu0 0.0
      %970 = vmatpush1.msra.mxu0 0.0
      %971 = vmatprep.subr.mxu0 0.0
      %972 = vmatpush1.msra.mxu0 0.0
      %973 = vmatprep.subr.mxu0 0.0
      %974 = vmatpush1.msra.mxu0 0.0
      %975 = vmatprep.subr.mxu0 0.0
      %976 = vmatpush1.msra.mxu0 0.0
      %977 = vmatprep.subr.mxu0 0.0
      %978 = vmatpush1.msra.mxu0 0.0
      %979 = vmatprep.subr.mxu0 0.0
      %980 = vmatpush1.msra.mxu0 0.0
      %981 = vmatprep.subr.mxu0 0.0
      %982 = vmatpush1.msra.mxu0 0.0
      %983 = vmatprep.subr.mxu0 0.0
      %984 = vmatpush1.msra.mxu0 0.0
      %985 = vmatprep.subr.mxu0 0.0
      %986 = vmatpush1.msra.mxu0 0.0
      %987 = vmatprep.subr.mxu0 0.0
      %988 = vmatpush1.msra.mxu0 0.0
      %989 = vmatprep.subr.mxu0 0.0
      %990 = vmatpush1.msra.mxu0 0.0
      %991 = vmatprep.subr.mxu0 0.0
      %992 = vmatpush1.msra.mxu0 0.0
      %993 = vmatprep.subr.mxu0 0.0
      %994 = vmatpush1.msra.mxu0 0.0
      %995 = vmatprep.subr.mxu0 0.0
      %996 = vmatpush1.msra.mxu0 0.0
      %997 = vmatprep.subr.mxu0 0.0
      %998 = vmatpush1.msra.mxu0 0.0
      %999 = vmatprep.mubr.f32.mxu0 0.0
      %1000 = vmatmul.mubr.f32.gmra.mrb[0].mxu0 %v921
      %v1001 = vpop.f32.mrb[0].mxu0
      %v1002 = vadd.f32 %v917, %v1001
      %v1003 = vpop.f32.mrb[0].mxu0
      %1004 = vmatprep.mubr.f32.mxu0 0.0
      %1005 = vmatmul.mubr.f32.gmra.mrb[0].mxu0 %v924
      %v1006 = vpop.f32.mrb[0].mxu0
      %v1007 = vadd.f32 %v917, %v1006
      %v1008 = vpop.f32.mrb[0].mxu0
      %1009 = vmatprep.mubr.f32.mxu0 0.0
      %1010 = vmatmul.mubr.f32.gmra.mrb[0].mxu0 %v927
      %v1011 = vpop.f32.mrb[0].mxu0
      %v1012 = vadd.f32 %v917, %v1011
      %v1013 = vpop.f32.mrb[0].mxu0
      %1014 = vmatprep.mubr.f32.mxu0 0.0
      %1015 = vmatmul.mubr.f32.gmra.mrb[0].mxu0 %v930
      %v1016 = vpop.f32.mrb[0].mxu0
      %v1017 = vadd.f32 %v917, %v1016
      %v1018 = vpop.f32.mrb[0].mxu0
      %1019 = vmatprep.mubr.f32.mxu0 0.0
      %1020 = vmatmul.mubr.f32.gmra.mrb[0].mxu0 %v933
      %v1021 = vpop.f32.mrb[0].mxu0
      %v1022 = vadd.f32 %v917, %v1021
      %v1023 = vpop.f32.mrb[0].mxu0
      %1024 = vdwg.mxu0
      %v1025 = vld [vmem:[%s1] sm:$0xff]
      %v1026 = vld [vmem:[%s1 + $0x8] sm:$0xff]
      %v1027 = vld [vmem:[%s1 + $0x10] sm:$0xff]
      %v1028 = vld [vmem:[%s1 + $0x18] sm:$0xff]
      %v1029 = vld [vmem:[%s1 + $0x20] sm:$0xff]
      %v1030 = vadd.f32 %v1002, %v1025
      %v1031 = vadd.f32 %v1007, %v1026
      %v1032 = vadd.f32 %v1012, %v1027
      %v1033 = vadd.f32 %v1017, %v1028
      %v1034 = vadd.f32 %v1022, %v1029
      %v1035 = vld [vmem:[%s848] sm:$0xff]
      %v1036 = vld [vmem:[%s848 + $0x8] sm:$0xff]
      %v1037 = vld [vmem:[%s851] sm:$0x1]
      %v1039 = vlaneseq
      %v1040 = vshrl.u32 %v1039, 7
      %v1041 = vsub.s32 0, %v1040
      %v1042 = vrot.slane %v1037, %v1041
      %vm1044 = vcmask 130048
      %v1046 = vsel %vm1044, %v1030, 0
      %v1049 = vsel %vm1044, %v1031, 0
      %v1052 = vsel %vm1044, %v1032, 0
      %v1055 = vsel %vm1044, %v1033, 0
      %v1058 = vsel %vm1044, %v1034, 0
      %1060 = vmatprep.subr.mxu0 0.0
      %1061 = vmatpush1.msra.mxu0 %v1035
      %1062 = vmatprep.subr.mxu0 0.0
      %1063 = vmatpush1.msra.mxu0 %v1036
      %1064 = vmatprep.subr.mxu0 0.0
      %1065 = vmatpush1.msra.mxu0 0.0
      %1066 = vmatprep.subr.mxu0 0.0
      %1067 = vmatpush1.msra.mxu0 0.0
      %1068 = vmatprep.subr.mxu0 0.0
      %1069 = vmatpush1.msra.mxu0 0.0
      %1070 = vmatprep.subr.mxu0 0.0
      %1071 = vmatpush1.msra.mxu0 0.0
      %1072 = vmatprep.subr.mxu0 0.0
      %1073 = vmatpush1.msra.mxu0 0.0
      %1074 = vmatprep.subr.mxu0 0.0
      %1075 = vmatpush1.msra.mxu0 0.0
      %1076 = vmatprep.subr.mxu0 0.0
      %1077 = vmatpush1.msra.mxu0 0.0
      %1078 = vmatprep.subr.mxu0 0.0
      %1079 = vmatpush1.msra.mxu0 0.0
      %1080 = vmatprep.subr.mxu0 0.0
      %1081 = vmatpush1.msra.mxu0 0.0
      %1082 = vmatprep.subr.mxu0 0.0
      %1083 = vmatpush1.msra.mxu0 0.0
      %1084 = vmatprep.subr.mxu0 0.0
      %1085 = vmatpush1.msra.mxu0 0.0
      %1086 = vmatprep.subr.mxu0 0.0
      %1087 = vmatpush1.msra.mxu0 0.0
      %1088 = vmatprep.subr.mxu0 0.0
      %1089 = vmatpush1.msra.mxu0 0.0
      %1090 = vmatprep.subr.mxu0 0.0
      %1091 = vmatpush1.msra.mxu0 0.0
      %1092 = vmatprep.subr.mxu0 0.0
      %1093 = vmatpush1.msra.mxu0 0.0
      %1094 = vmatprep.subr.mxu0 0.0
      %1095 = vmatpush1.msra.mxu0 0.0
      %1096 = vmatprep.subr.mxu0 0.0
      %1097 = vmatpush1.msra.mxu0 0.0
      %1098 = vmatprep.subr.mxu0 0.0
      %1099 = vmatpush1.msra.mxu0 0.0
      %1100 = vmatprep.subr.mxu0 0.0
      %1101 = vmatpush1.msra.mxu0 0.0
      %1102 = vmatprep.subr.mxu0 0.0
      %1103 = vmatpush1.msra.mxu0 0.0
      %1104 = vmatprep.subr.mxu0 0.0
      %1105 = vmatpush1.msra.mxu0 0.0
      %1106 = vmatprep.subr.mxu0 0.0
      %1107 = vmatpush1.msra.mxu0 0.0
      %1108 = vmatprep.subr.mxu0 0.0
      %1109 = vmatpush1.msra.mxu0 0.0
      %1110 = vmatprep.subr.mxu0 0.0
      %1111 = vmatpush1.msra.mxu0 0.0
      %1112 = vmatprep.subr.mxu0 0.0
      %1113 = vmatpush1.msra.mxu0 0.0
      %1114 = vmatprep.subr.mxu0 0.0
      %1115 = vmatpush1.msra.mxu0 0.0
      %1116 = vmatprep.subr.mxu0 0.0
      %1117 = vmatpush1.msra.mxu0 0.0
      %1118 = vmatprep.subr.mxu0 0.0
      %1119 = vmatpush1.msra.mxu0 0.0
      %1120 = vmatprep.subr.mxu0 0.0
      %1121 = vmatpush1.msra.mxu0 0.0
      %1122 = vmatprep.subr.mxu0 0.0
      %1123 = vmatpush1.msra.mxu0 0.0
      %1124 = vmatprep.mubr.f32.mxu0 0.0
      %1125 = vmatmul.mubr.f32.gmra.mrb[0].mxu0 %v1046
      %v1126 = vpop.f32.mrb[0].mxu0
      %v1127 = vadd.f32 %v1042, %v1126
      %v1128 = vpop.f32.mrb[0].mxu0
      %1129 = vmatprep.mubr.f32.mxu0 0.0
      %1130 = vmatmul.mubr.f32.gmra.mrb[0].mxu0 %v1049
      %v1131 = vpop.f32.mrb[0].mxu0
      %v1132 = vadd.f32 %v1042, %v1131
      %v1133 = vpop.f32.mrb[0].mxu0
      %1134 = vmatprep.mubr.f32.mxu0 0.0
      %1135 = vmatmul.mubr.f32.gmra.mrb[0].mxu0 %v1052
      %v1136 = vpop.f32.mrb[0].mxu0
      %v1137 = vadd.f32 %v1042, %v1136
      %v1138 = vpop.f32.mrb[0].mxu0
      %1139 = vmatprep.mubr.f32.mxu0 0.0
      %1140 = vmatmul.mubr.f32.gmra.mrb[0].mxu0 %v1055
      %v1141 = vpop.f32.mrb[0].mxu0
      %v1142 = vadd.f32 %v1042, %v1141
      %v1143 = vpop.f32.mrb[0].mxu0
      %1144 = vmatprep.mubr.f32.mxu0 0.0
      %1145 = vmatmul.mubr.f32.gmra.mrb[0].mxu0 %v1058
      %v1146 = vpop.f32.mrb[0].mxu0
      %v1147 = vadd.f32 %v1042, %v1146
      %v1148 = vpop.f32.mrb[0].mxu0
      %1149 = vdwg.mxu0
      %v1150 = vld [vmem:[%s2] sm:$0xff]
      %v1151 = vld [vmem:[%s2 + $0x8] sm:$0xff]
      %v1152 = vld [vmem:[%s2 + $0x10] sm:$0xff]
      %v1153 = vld [vmem:[%s2 + $0x18] sm:$0xff]
      %v1154 = vld [vmem:[%s2 + $0x20] sm:$0xff]
      %1160 = vrot.lane.b32.xlu0 %v1127, 112
      %v1161 = vpop.permute.xlu0 %1160
      %1162 = vrot.lane.b32.xlu0 %v1132, 112
      %v1163 = vpop.permute.xlu0 %1162
      %1164 = vrot.lane.b32.xlu0 %v1137, 112
      %v1165 = vpop.permute.xlu0 %1164
      %1166 = vrot.lane.b32.xlu0 %v1142, 112
      %v1167 = vpop.permute.xlu0 %1166
      %1168 = vrot.lane.b32.xlu0 %v1147, 112
      %v1169 = vpop.permute.xlu0 %1168
      %v1170 = vsel %vm919, %v1127, 0
      %v1172 = vsel %vm919, %v1132, 0
      %v1174 = vsel %vm919, %v1137, 0
      %v1176 = vsel %vm919, %v1142, 0
      %v1178 = vsel %vm919, %v1147, 0
      %v1180 = vsel %vm919, %v1161, 0
      %v1182 = vsel %vm919, %v1163, 0
      %v1184 = vsel %vm919, %v1165, 0
      %v1186 = vsel %vm919, %v1167, 0
      %v1188 = vsel %vm919, %v1169, 0
      %1190 = vmatprep.subr.mxu0 0.0
      %1191 = vmatpush1.xpose.msra.mxu0 %v1180
      %1192 = vmatprep.subr.mxu0 0.0
      %1193 = vmatpush1.xpose.msra.mxu0 %v1182
      %1194 = vmatprep.subr.mxu0 0.0
      %1195 = vmatpush1.xpose.msra.mxu0 %v1184
      %1196 = vmatprep.subr.mxu0 0.0
      %1197 = vmatpush1.xpose.msra.mxu0 %v1186
      %1198 = vmatprep.subr.mxu0 0.0
      %1199 = vmatpush1.xpose.msra.mxu0 %v1188
      %1200 = vmatprep.subr.mxu0 0.0
      %1201 = vmatpush1.xpose.msra.mxu0 0.0
      %1202 = vmatprep.subr.mxu0 0.0
      %1203 = vmatpush1.xpose.msra.mxu0 0.0
      %1204 = vmatprep.subr.mxu0 0.0
      %1205 = vmatpush1.xpose.msra.mxu0 0.0
      %1206 = vmatprep.subr.mxu0 0.0
      %1207 = vmatpush1.xpose.msra.mxu0 0.0
      %1208 = vmatprep.subr.mxu0 0.0
      %1209 = vmatpush1.xpose.msra.mxu0 0.0
      %1210 = vmatprep.subr.mxu0 0.0
      %1211 = vmatpush1.xpose.msra.mxu0 0.0
      %1212 = vmatprep.subr.mxu0 0.0
      %1213 = vmatpush1.xpose.msra.mxu0 0.0
      %1214 = vmatprep.subr.mxu0 0.0
      %1215 = vmatpush1.xpose.msra.mxu0 0.0
      %1216 = vmatprep.subr.mxu0 0.0
      %1217 = vmatpush1.xpose.msra.mxu0 0.0
      %1218 = vmatprep.subr.mxu0 0.0
      %1219 = vmatpush1.xpose.msra.mxu0 0.0
      %1220 = vmatprep.subr.mxu0 0.0
      %1221 = vmatpush1.xpose.msra.mxu0 0.0
      %1222 = vmatprep.subr.mxu0 0.0
      %1223 = vmatpush1.xpose.msra.mxu0 0.0
      %1224 = vmatprep.subr.mxu0 0.0
      %1225 = vmatpush1.xpose.msra.mxu0 0.0
      %1226 = vmatprep.subr.mxu0 0.0
      %1227 = vmatpush1.xpose.msra.mxu0 0.0
      %1228 = vmatprep.subr.mxu0 0.0
      %1229 = vmatpush1.xpose.msra.mxu0 0.0
      %1230 = vmatprep.subr.mxu0 0.0
      %1231 = vmatpush1.xpose.msra.mxu0 0.0
      %1232 = vmatprep.subr.mxu0 0.0
      %1233 = vmatpush1.xpose.msra.mxu0 0.0
      %1234 = vmatprep.subr.mxu0 0.0
      %1235 = vmatpush1.xpose.msra.mxu0 0.0
      %1236 = vmatprep.subr.mxu0 0.0
      %1237 = vmatpush1.xpose.msra.mxu0 0.0
      %1238 = vmatprep.subr.mxu0 0.0
      %1239 = vmatpush1.xpose.msra.mxu0 0.0
      %1240 = vmatprep.subr.mxu0 0.0
      %1241 = vmatpush1.xpose.msra.mxu0 0.0
      %1242 = vmatprep.subr.mxu0 0.0
      %1243 = vmatpush1.xpose.msra.mxu0 0.0
      %1244 = vmatprep.subr.mxu0 0.0
      %1245 = vmatpush1.xpose.msra.mxu0 0.0
      %1246 = vmatprep.subr.mxu0 0.0
      %1247 = vmatpush1.xpose.msra.mxu0 0.0
      %1248 = vmatprep.subr.mxu0 0.0
      %1249 = vmatpush1.xpose.msra.mxu0 0.0
      %1250 = vmatprep.subr.mxu0 0.0
      %1251 = vmatpush1.xpose.msra.mxu0 0.0
      %1252 = vmatprep.subr.mxu0 0.0
      %1253 = vmatpush1.xpose.msra.mxu0 0.0
      %1254 = vmatprep.mubr.f32.mxu0 0.0
      %1255 = vmatmul.mubr.f32.gmra.mrb[0].mxu0 %v1170
      %v1256 = vpop.f32.mrb[0].mxu0
      %v1257 = vadd.f32 %v1150, %v1256
      %v1258 = vpop.f32.mrb[0].mxu0
      %1259 = vmatprep.mubr.f32.mxu0 0.0
      %1260 = vmatmul.mubr.f32.gmra.mrb[0].mxu0 %v1172
      %v1261 = vpop.f32.mrb[0].mxu0
      %v1262 = vadd.f32 %v1151, %v1261
      %v1263 = vpop.f32.mrb[0].mxu0
      %1264 = vmatprep.mubr.f32.mxu0 0.0
      %1265 = vmatmul.mubr.f32.gmra.mrb[0].mxu0 %v1174
      %v1266 = vpop.f32.mrb[0].mxu0
      %v1267 = vadd.f32 %v1152, %v1266
      %v1268 = vpop.f32.mrb[0].mxu0
      %1269 = vmatprep.mubr.f32.mxu0 0.0
      %1270 = vmatmul.mubr.f32.gmra.mrb[0].mxu0 %v1176
      %v1271 = vpop.f32.mrb[0].mxu0
      %v1272 = vadd.f32 %v1153, %v1271
      %v1273 = vpop.f32.mrb[0].mxu0
      %1274 = vmatprep.mubr.f32.mxu0 0.0
      %1275 = vmatmul.mubr.f32.gmra.mrb[0].mxu0 %v1178
      %v1276 = vpop.f32.mrb[0].mxu0
      %v1277 = vadd.f32 %v1154, %v1276
      %v1278 = vpop.f32.mrb[0].mxu0
      %1279 = vdwg.mxu0
      %vm1280 = vcmask 326656
      %v1281 = vsel %vm1280, %v1257, -inf
      %1282 = vmax.xlane.f32.xlu0 %v1281
      %v1283 = vpop.xlane.xlu0 %1282
      %v1284 = vsel %vm1280, %v1262, -inf
      %1285 = vmax.xlane.f32.xlu0 %v1284
      %v1286 = vpop.xlane.xlu0 %1285
      %v1287 = vsel %vm1280, %v1267, -inf
      %1288 = vmax.xlane.f32.xlu0 %v1287
      %v1289 = vpop.xlane.xlu0 %1288
      %v1290 = vsel %vm1280, %v1272, -inf
      %1291 = vmax.xlane.f32.xlu0 %v1290
      %v1292 = vpop.xlane.xlu0 %1291
      %v1293 = vsel %vm1280, %v1277, -inf
      %1294 = vmax.xlane.f32.xlu0 %v1293
      %v1295 = vpop.xlane.xlu0 %1294
      %v1296 = vsub.f32 %v1257, %v1283
      %v1297 = vsub.f32 %v1262, %v1286
      %v1298 = vsub.f32 %v1267, %v1289
      %v1299 = vsub.f32 %v1272, %v1292
      %v1300 = vsub.f32 %v1277, %v1295
      %v1301 = vmul.f32 %v1296, 1.442695
      %v1302 = vpow.pop %v1301
      %v1303 = vmul.f32 %v1297, 1.442695
      %v1304 = vpow.pop %v1303
      %v1305 = vmul.f32 %v1298, 1.442695
      %v1306 = vpow.pop %v1305
      %v1307 = vmul.f32 %v1299, 1.442695
      %v1308 = vpow.pop %v1307
      %v1309 = vmul.f32 %v1300, 1.442695
      %v1310 = vpow.pop %v1309
      %v1311 = vsel %vm1280, %v1302, 0.0
      %1312 = vadd.xlane.f32.xlu0 %v1311
      %v1313 = vpop.xlane.xlu0 %1312
      %v1314 = vsel %vm1280, %v1304, 0.0
      %1315 = vadd.xlane.f32.xlu0 %v1314
      %v1316 = vpop.xlane.xlu0 %1315
      %v1317 = vsel %vm1280, %v1306, 0.0
      %1318 = vadd.xlane.f32.xlu0 %v1317
      %v1319 = vpop.xlane.xlu0 %1318
      %v1320 = vsel %vm1280, %v1308, 0.0
      %1321 = vadd.xlane.f32.xlu0 %v1320
      %v1322 = vpop.xlane.xlu0 %1321
      %v1323 = vsel %vm1280, %v1310, 0.0
      %1324 = vadd.xlane.f32.xlu0 %v1323
      %v1325 = vpop.xlane.xlu0 %1324
      %v1326 = vrcp.pop %v1313
      %v1327 = vrcp.pop %v1316
      %v1328 = vrcp.pop %v1319
      %v1329 = vrcp.pop %v1322
      %v1330 = vrcp.pop %v1325
      %v1331 = vmul.f32 %v1302, %v1326
      %v1332 = vmul.f32 %v1304, %v1327
      %v1333 = vmul.f32 %v1306, %v1328
      %v1334 = vmul.f32 %v1308, %v1329
      %v1335 = vmul.f32 %v1310, %v1330
      %1336 = vrot.lane.b32.xlu0 %v1127, 96
      %v1337 = vpop.permute.xlu0 %1336
      %1338 = vrot.lane.b32.xlu0 %v1132, 96
      %v1339 = vpop.permute.xlu0 %1338
      %1340 = vrot.lane.b32.xlu0 %v1137, 96
      %v1341 = vpop.permute.xlu0 %1340
      %1342 = vrot.lane.b32.xlu0 %v1142, 96
      %v1343 = vpop.permute.xlu0 %1342
      %1344 = vrot.lane.b32.xlu0 %v1147, 96
      %v1345 = vpop.permute.xlu0 %1344
      %v1352 = vsel %vm1280, %v1331, 0
      %v1355 = vsel %vm1280, %v1332, 0
      %v1358 = vsel %vm1280, %v1333, 0
      %v1361 = vsel %vm1280, %v1334, 0
      %v1364 = vsel %vm1280, %v1335, 0
      %1366 = vmatprep.subr.mxu0 0.0
      %1367 = vmatpush1.msra.mxu0 %v1337
      %1368 = vmatprep.subr.mxu0 0.0
      %1369 = vmatpush1.msra.mxu0 %v1339
      %1370 = vmatprep.subr.mxu0 0.0
      %1371 = vmatpush1.msra.mxu0 %v1341
      %1372 = vmatprep.subr.mxu0 0.0
      %1373 = vmatpush1.msra.mxu0 %v1343
      %1374 = vmatprep.subr.mxu0 0.0
      %1375 = vmatpush1.msra.mxu0 %v1345
      %1376 = vmatprep.subr.mxu0 0.0
      %1377 = vmatpush1.msra.mxu0 0.0
      %1378 = vmatprep.subr.mxu0 0.0
      %1379 = vmatpush1.msra.mxu0 0.0
      %1380 = vmatprep.subr.mxu0 0.0
      %1381 = vmatpush1.msra.mxu0 0.0
      %1382 = vmatprep.subr.mxu0 0.0
      %1383 = vmatpush1.msra.mxu0 0.0
      %1384 = vmatprep.subr.mxu0 0.0
      %1385 = vmatpush1.msra.mxu0 0.0
      %1386 = vmatprep.subr.mxu0 0.0
      %1387 = vmatpush1.msra.mxu0 0.0
      %1388 = vmatprep.subr.mxu0 0.0
      %1389 = vmatpush1.msra.mxu0 0.0
      %1390 = vmatprep.subr.mxu0 0.0
      %1391 = vmatpush1.msra.mxu0 0.0
      %1392 = vmatprep.subr.mxu0 0.0
      %1393 = vmatpush1.msra.mxu0 0.0
      %1394 = vmatprep.subr.mxu0 0.0
      %1395 = vmatpush1.msra.mxu0 0.0
      %1396 = vmatprep.subr.mxu0 0.0
      %1397 = vmatpush1.msra.mxu0 0.0
      %1398 = vmatprep.subr.mxu0 0.0
      %1399 = vmatpush1.msra.mxu0 0.0
      %1400 = vmatprep.subr.mxu0 0.0
      %1401 = vmatpush1.msra.mxu0 0.0
      %1402 = vmatprep.subr.mxu0 0.0
      %1403 = vmatpush1.msra.mxu0 0.0
      %1404 = vmatprep.subr.mxu0 0.0
      %1405 = vmatpush1.msra.mxu0 0.0
      %1406 = vmatprep.subr.mxu0 0.0
      %1407 = vmatpush1.msra.mxu0 0.0
      %1408 = vmatprep.subr.mxu0 0.0
      %1409 = vmatpush1.msra.mxu0 0.0
      %1410 = vmatprep.subr.mxu0 0.0
      %1411 = vmatpush1.msra.mxu0 0.0
      %1412 = vmatprep.subr.mxu0 0.0
      %1413 = vmatpush1.msra.mxu0 0.0
      %1414 = vmatprep.subr.mxu0 0.0
      %1415 = vmatpush1.msra.mxu0 0.0
      %1416 = vmatprep.subr.mxu0 0.0
      %1417 = vmatpush1.msra.mxu0 0.0
      %1418 = vmatprep.subr.mxu0 0.0
      %1419 = vmatpush1.msra.mxu0 0.0
      %1420 = vmatprep.subr.mxu0 0.0
      %1421 = vmatpush1.msra.mxu0 0.0
      %1422 = vmatprep.subr.mxu0 0.0
      %1423 = vmatpush1.msra.mxu0 0.0
      %1424 = vmatprep.subr.mxu0 0.0
      %1425 = vmatpush1.msra.mxu0 0.0
      %1426 = vmatprep.subr.mxu0 0.0
      %1427 = vmatpush1.msra.mxu0 0.0
      %1428 = vmatprep.subr.mxu0 0.0
      %1429 = vmatpush1.msra.mxu0 0.0
      %1430 = vmatprep.mubr.f32.mxu0 0.0
      %1431 = vmatmul.mubr.f32.gmra.mrb[0].mxu0 %v1352
      %v1432 = vpop.f32.mrb[0].mxu0
      %v1433 = vadd.f32 0.0, %v1432
      %v1434 = vpop.f32.mrb[0].mxu0
      %1435 = vmatprep.mubr.f32.mxu0 0.0
      %1436 = vmatmul.mubr.f32.gmra.mrb[0].mxu0 %v1355
      %v1437 = vpop.f32.mrb[0].mxu0
      %v1438 = vadd.f32 0.0, %v1437
      %v1439 = vpop.f32.mrb[0].mxu0
      %1440 = vmatprep.mubr.f32.mxu0 0.0
      %1441 = vmatmul.mubr.f32.gmra.mrb[0].mxu0 %v1358
      %v1442 = vpop.f32.mrb[0].mxu0
      %v1443 = vadd.f32 0.0, %v1442
      %v1444 = vpop.f32.mrb[0].mxu0
      %1445 = vmatprep.mubr.f32.mxu0 0.0
      %1446 = vmatmul.mubr.f32.gmra.mrb[0].mxu0 %v1361
      %v1447 = vpop.f32.mrb[0].mxu0
      %v1448 = vadd.f32 0.0, %v1447
      %v1449 = vpop.f32.mrb[0].mxu0
      %1450 = vmatprep.mubr.f32.mxu0 0.0
      %1451 = vmatmul.mubr.f32.gmra.mrb[0].mxu0 %v1364
      %v1452 = vpop.f32.mrb[0].mxu0
      %v1453 = vadd.f32 0.0, %v1452
      %v1454 = vpop.f32.mrb[0].mxu0
      %1455 = vdwg.mxu0
      %1456 = vrot.lane.b32.xlu0 %v1127, 120
      %v1457 = vpop.permute.xlu0 %1456
      %1458 = vrot.lane.b32.xlu0 %v1132, 120
      %v1459 = vpop.permute.xlu0 %1458
      %1460 = vrot.lane.b32.xlu0 %v1137, 120
      %v1461 = vpop.permute.xlu0 %1460
      %1462 = vrot.lane.b32.xlu0 %v1142, 120
      %v1463 = vpop.permute.xlu0 %1462
      %1464 = vrot.lane.b32.xlu0 %v1147, 120
      %v1465 = vpop.permute.xlu0 %1464
      %1466 = vrot.lane.b32.xlu0 %v1127, 104
      %v1467 = vpop.permute.xlu0 %1466
      %1468 = vrot.lane.b32.xlu0 %v1132, 104
      %v1469 = vpop.permute.xlu0 %1468
      %1470 = vrot.lane.b32.xlu0 %v1137, 104
      %v1471 = vpop.permute.xlu0 %1470
      %1472 = vrot.lane.b32.xlu0 %v1142, 104
      %v1473 = vpop.permute.xlu0 %1472
      %1474 = vrot.lane.b32.xlu0 %v1147, 104
      %v1475 = vpop.permute.xlu0 %1474
      %v1476 = vsel %vm919, %v1457, 0
      %v1478 = vsel %vm919, %v1459, 0
      %v1480 = vsel %vm919, %v1461, 0
      %v1482 = vsel %vm919, %v1463, 0
      %v1484 = vsel %vm919, %v1465, 0
      %v1486 = vsel %vm919, %v1467, 0
      %v1488 = vsel %vm919, %v1469, 0
      %v1490 = vsel %vm919, %v1471, 0
      %v1492 = vsel %vm919, %v1473, 0
      %v1494 = vsel %vm919, %v1475, 0
      %1496 = vmatprep.subr.mxu0 0.0
      %1497 = vmatpush1.xpose.msra.mxu0 %v1486
      %1498 = vmatprep.subr.mxu0 0.0
      %1499 = vmatpush1.xpose.msra.mxu0 %v1488
      %1500 = vmatprep.subr.mxu0 0.0
      %1501 = vmatpush1.xpose.msra.mxu0 %v1490
      %1502 = vmatprep.subr.mxu0 0.0
      %1503 = vmatpush1.xpose.msra.mxu0 %v1492
      %1504 = vmatprep.subr.mxu0 0.0
      %1505 = vmatpush1.xpose.msra.mxu0 %v1494
      %1506 = vmatprep.subr.mxu0 0.0
      %1507 = vmatpush1.xpose.msra.mxu0 0.0
      %1508 = vmatprep.subr.mxu0 0.0
      %1509 = vmatpush1.xpose.msra.mxu0 0.0
      %1510 = vmatprep.subr.mxu0 0.0
      %1511 = vmatpush1.xpose.msra.mxu0 0.0
      %1512 = vmatprep.subr.mxu0 0.0
      %1513 = vmatpush1.xpose.msra.mxu0 0.0
      %1514 = vmatprep.subr.mxu0 0.0
      %1515 = vmatpush1.xpose.msra.mxu0 0.0
      %1516 = vmatprep.subr.mxu0 0.0
      %1517 = vmatpush1.xpose.msra.mxu0 0.0
      %1518 = vmatprep.subr.mxu0 0.0
      %1519 = vmatpush1.xpose.msra.mxu0 0.0
      %1520 = vmatprep.subr.mxu0 0.0
      %1521 = vmatpush1.xpose.msra.mxu0 0.0
      %1522 = vmatprep.subr.mxu0 0.0
      %1523 = vmatpush1.xpose.msra.mxu0 0.0
      %1524 = vmatprep.subr.mxu0 0.0
      %1525 = vmatpush1.xpose.msra.mxu0 0.0
      %1526 = vmatprep.subr.mxu0 0.0
      %1527 = vmatpush1.xpose.msra.mxu0 0.0
      %1528 = vmatprep.subr.mxu0 0.0
      %1529 = vmatpush1.xpose.msra.mxu0 0.0
      %1530 = vmatprep.subr.mxu0 0.0
      %1531 = vmatpush1.xpose.msra.mxu0 0.0
      %1532 = vmatprep.subr.mxu0 0.0
      %1533 = vmatpush1.xpose.msra.mxu0 0.0
      %1534 = vmatprep.subr.mxu0 0.0
      %1535 = vmatpush1.xpose.msra.mxu0 0.0
      %1536 = vmatprep.subr.mxu0 0.0
      %1537 = vmatpush1.xpose.msra.mxu0 0.0
      %1538 = vmatprep.subr.mxu0 0.0
      %1539 = vmatpush1.xpose.msra.mxu0 0.0
      %1540 = vmatprep.subr.mxu0 0.0
      %1541 = vmatpush1.xpose.msra.mxu0 0.0
      %1542 = vmatprep.subr.mxu0 0.0
      %1543 = vmatpush1.xpose.msra.mxu0 0.0
      %1544 = vmatprep.subr.mxu0 0.0
      %1545 = vmatpush1.xpose.msra.mxu0 0.0
      %1546 = vmatprep.subr.mxu0 0.0
      %1547 = vmatpush1.xpose.msra.mxu0 0.0
      %1548 = vmatprep.subr.mxu0 0.0
      %1549 = vmatpush1.xpose.msra.mxu0 0.0
      %1550 = vmatprep.subr.mxu0 0.0
      %1551 = vmatpush1.xpose.msra.mxu0 0.0
      %1552 = vmatprep.subr.mxu0 0.0
      %1553 = vmatpush1.xpose.msra.mxu0 0.0
      %1554 = vmatprep.subr.mxu0 0.0
      %1555 = vmatpush1.xpose.msra.mxu0 0.0
      %1556 = vmatprep.subr.mxu0 0.0
      %1557 = vmatpush1.xpose.msra.mxu0 0.0
      %1558 = vmatprep.subr.mxu0 0.0
      %1559 = vmatpush1.xpose.msra.mxu0 0.0
      %1560 = vmatprep.mubr.f32.mxu0 0.0
      %1561 = vmatmul.mubr.f32.gmra.mrb[0].mxu0 %v1476
      %v1562 = vpop.f32.mrb[0].mxu0
      %v1563 = vadd.f32 %v1150, %v1562
      %v1564 = vpop.f32.mrb[0].mxu0
      %1565 = vmatprep.mubr.f32.mxu0 0.0
      %1566 = vmatmul.mubr.f32.gmra.mrb[0].mxu0 %v1478
      %v1567 = vpop.f32.mrb[0].mxu0
      %v1568 = vadd.f32 %v1151, %v1567
      %v1569 = vpop.f32.mrb[0].mxu0
      %1570 = vmatprep.mubr.f32.mxu0 0.0
      %1571 = vmatmul.mubr.f32.gmra.mrb[0].mxu0 %v1480
      %v1572 = vpop.f32.mrb[0].mxu0
      %v1573 = vadd.f32 %v1152, %v1572
      %v1574 = vpop.f32.mrb[0].mxu0
      %1575 = vmatprep.mubr.f32.mxu0 0.0
      %1576 = vmatmul.mubr.f32.gmra.mrb[0].mxu0 %v1482
      %v1577 = vpop.f32.mrb[0].mxu0
      %v1578 = vadd.f32 %v1153, %v1577
      %v1579 = vpop.f32.mrb[0].mxu0
      %1580 = vmatprep.mubr.f32.mxu0 0.0
      %1581 = vmatmul.mubr.f32.gmra.mrb[0].mxu0 %v1484
      %v1582 = vpop.f32.mrb[0].mxu0
      %v1583 = vadd.f32 %v1154, %v1582
      %v1584 = vpop.f32.mrb[0].mxu0
      %1585 = vdwg.mxu0
      %v1586 = vsel %vm1280, %v1563, -inf
      %1587 = vmax.xlane.f32.xlu0 %v1586
      %v1588 = vpop.xlane.xlu0 %1587
      %v1589 = vsel %vm1280, %v1568, -inf
      %1590 = vmax.xlane.f32.xlu0 %v1589
      %v1591 = vpop.xlane.xlu0 %1590
      %v1592 = vsel %vm1280, %v1573, -inf
      %1593 = vmax.xlane.f32.xlu0 %v1592
      %v1594 = vpop.xlane.xlu0 %1593
      %v1595 = vsel %vm1280, %v1578, -inf
      %1596 = vmax.xlane.f32.xlu0 %v1595
      %v1597 = vpop.xlane.xlu0 %1596
      %v1598 = vsel %vm1280, %v1583, -inf
      %1599 = vmax.xlane.f32.xlu0 %v1598
      %v1600 = vpop.xlane.xlu0 %1599
      %v1601 = vsub.f32 %v1563, %v1588
      %v1602 = vsub.f32 %v1568, %v1591
      %v1603 = vsub.f32 %v1573, %v1594
      %v1604 = vsub.f32 %v1578, %v1597
      %v1605 = vsub.f32 %v1583, %v1600
      %v1606 = vmul.f32 %v1601, 1.442695
      %v1607 = vpow.pop %v1606
      %v1608 = vmul.f32 %v1602, 1.442695
      %v1609 = vpow.pop %v1608
      %v1610 = vmul.f32 %v1603, 1.442695
      %v1611 = vpow.pop %v1610
      %v1612 = vmul.f32 %v1604, 1.442695
      %v1613 = vpow.pop %v1612
      %v1614 = vmul.f32 %v1605, 1.442695
      %v1615 = vpow.pop %v1614
      %v1616 = vsel %vm1280, %v1607, 0.0
      %1617 = vadd.xlane.f32.xlu0 %v1616
      %v1618 = vpop.xlane.xlu0 %1617
      %v1619 = vsel %vm1280, %v1609, 0.0
      %1620 = vadd.xlane.f32.xlu0 %v1619
      %v1621 = vpop.xlane.xlu0 %1620
      %v1622 = vsel %vm1280, %v1611, 0.0
      %1623 = vadd.xlane.f32.xlu0 %v1622
      %v1624 = vpop.xlane.xlu0 %1623
      %v1625 = vsel %vm1280, %v1613, 0.0
      %1626 = vadd.xlane.f32.xlu0 %v1625
      %v1627 = vpop.xlane.xlu0 %1626
      %v1628 = vsel %vm1280, %v1615, 0.0
      %1629 = vadd.xlane.f32.xlu0 %v1628
      %v1630 = vpop.xlane.xlu0 %1629
      %v1631 = vrcp.pop %v1618
      %v1632 = vrcp.pop %v1621
      %v1633 = vrcp.pop %v1624
      %v1634 = vrcp.pop %v1627
      %v1635 = vrcp.pop %v1630
      %v1636 = vmul.f32 %v1607, %v1631
      %v1637 = vmul.f32 %v1609, %v1632
      %v1638 = vmul.f32 %v1611, %v1633
      %v1639 = vmul.f32 %v1613, %v1634
      %v1640 = vmul.f32 %v1615, %v1635
      %1641 = vrot.lane.b32.xlu0 %v1127, 88
      %v1642 = vpop.permute.xlu0 %1641
      %1643 = vrot.lane.b32.xlu0 %v1132, 88
      %v1644 = vpop.permute.xlu0 %1643
      %1645 = vrot.lane.b32.xlu0 %v1137, 88
      %v1646 = vpop.permute.xlu0 %1645
      %1647 = vrot.lane.b32.xlu0 %v1142, 88
      %v1648 = vpop.permute.xlu0 %1647
      %1649 = vrot.lane.b32.xlu0 %v1147, 88
      %v1650 = vpop.permute.xlu0 %1649
      %v1657 = vsel %vm1280, %v1636, 0
      %v1660 = vsel %vm1280, %v1637, 0
      %v1663 = vsel %vm1280, %v1638, 0
      %v1666 = vsel %vm1280, %v1639, 0
      %v1669 = vsel %vm1280, %v1640, 0
      %1671 = vmatprep.subr.mxu0 0.0
      %1672 = vmatpush1.msra.mxu0 %v1642
      %1673 = vmatprep.subr.mxu0 0.0
      %1674 = vmatpush1.msra.mxu0 %v1644
      %1675 = vmatprep.subr.mxu0 0.0
      %1676 = vmatpush1.msra.mxu0 %v1646
      %1677 = vmatprep.subr.mxu0 0.0
      %1678 = vmatpush1.msra.mxu0 %v1648
      %1679 = vmatprep.subr.mxu0 0.0
      %1680 = vmatpush1.msra.mxu0 %v1650
      %1681 = vmatprep.subr.mxu0 0.0
      %1682 = vmatpush1.msra.mxu0 0.0
      %1683 = vmatprep.subr.mxu0 0.0
      %1684 = vmatpush1.msra.mxu0 0.0
      %1685 = vmatprep.subr.mxu0 0.0
      %1686 = vmatpush1.msra.mxu0 0.0
      %1687 = vmatprep.subr.mxu0 0.0
      %1688 = vmatpush1.msra.mxu0 0.0
      %1689 = vmatprep.subr.mxu0 0.0
      %1690 = vmatpush1.msra.mxu0 0.0
      %1691 = vmatprep.subr.mxu0 0.0
      %1692 = vmatpush1.msra.mxu0 0.0
      %1693 = vmatprep.subr.mxu0 0.0
      %1694 = vmatpush1.msra.mxu0 0.0
      %1695 = vmatprep.subr.mxu0 0.0
      %1696 = vmatpush1.msra.mxu0 0.0
      %1697 = vmatprep.subr.mxu0 0.0
      %1698 = vmatpush1.msra.mxu0 0.0
      %1699 = vmatprep.subr.mxu0 0.0
      %1700 = vmatpush1.msra.mxu0 0.0
      %1701 = vmatprep.subr.mxu0 0.0
      %1702 = vmatpush1.msra.mxu0 0.0
      %1703 = vmatprep.subr.mxu0 0.0
      %1704 = vmatpush1.msra.mxu0 0.0
      %1705 = vmatprep.subr.mxu0 0.0
      %1706 = vmatpush1.msra.mxu0 0.0
      %1707 = vmatprep.subr.mxu0 0.0
      %1708 = vmatpush1.msra.mxu0 0.0
      %1709 = vmatprep.subr.mxu0 0.0
      %1710 = vmatpush1.msra.mxu0 0.0
      %1711 = vmatprep.subr.mxu0 0.0
      %1712 = vmatpush1.msra.mxu0 0.0
      %1713 = vmatprep.subr.mxu0 0.0
      %1714 = vmatpush1.msra.mxu0 0.0
      %1715 = vmatprep.subr.mxu0 0.0
      %1716 = vmatpush1.msra.mxu0 0.0
      %1717 = vmatprep.subr.mxu0 0.0
      %1718 = vmatpush1.msra.mxu0 0.0
      %1719 = vmatprep.subr.mxu0 0.0
      %1720 = vmatpush1.msra.mxu0 0.0
      %1721 = vmatprep.subr.mxu0 0.0
      %1722 = vmatpush1.msra.mxu0 0.0
      %1723 = vmatprep.subr.mxu0 0.0
      %1724 = vmatpush1.msra.mxu0 0.0
      %1725 = vmatprep.subr.mxu0 0.0
      %1726 = vmatpush1.msra.mxu0 0.0
      %1727 = vmatprep.subr.mxu0 0.0
      %1728 = vmatpush1.msra.mxu0 0.0
      %1729 = vmatprep.subr.mxu0 0.0
      %1730 = vmatpush1.msra.mxu0 0.0
      %1731 = vmatprep.subr.mxu0 0.0
      %1732 = vmatpush1.msra.mxu0 0.0
      %1733 = vmatprep.subr.mxu0 0.0
      %1734 = vmatpush1.msra.mxu0 0.0
      %1735 = vmatprep.mubr.f32.mxu0 0.0
      %1736 = vmatmul.mubr.f32.gmra.mrb[0].mxu0 %v1657
      %v1737 = vpop.f32.mrb[0].mxu0
      %v1738 = vadd.f32 0.0, %v1737
      %v1739 = vpop.f32.mrb[0].mxu0
      %1740 = vmatprep.mubr.f32.mxu0 0.0
      %1741 = vmatmul.mubr.f32.gmra.mrb[0].mxu0 %v1660
      %v1742 = vpop.f32.mrb[0].mxu0
      %v1743 = vadd.f32 0.0, %v1742
      %v1744 = vpop.f32.mrb[0].mxu0
      %1745 = vmatprep.mubr.f32.mxu0 0.0
      %1746 = vmatmul.mubr.f32.gmra.mrb[0].mxu0 %v1663
      %v1747 = vpop.f32.mrb[0].mxu0
      %v1748 = vadd.f32 0.0, %v1747
      %v1749 = vpop.f32.mrb[0].mxu0
      %1750 = vmatprep.mubr.f32.mxu0 0.0
      %1751 = vmatmul.mubr.f32.gmra.mrb[0].mxu0 %v1666
      %v1752 = vpop.f32.mrb[0].mxu0
      %v1753 = vadd.f32 0.0, %v1752
      %v1754 = vpop.f32.mrb[0].mxu0
      %1755 = vmatprep.mubr.f32.mxu0 0.0
      %1756 = vmatmul.mubr.f32.gmra.mrb[0].mxu0 %v1669
      %v1757 = vpop.f32.mrb[0].mxu0
      %v1758 = vadd.f32 0.0, %v1757
      %v1759 = vpop.f32.mrb[0].mxu0
      %1760 = vdwg.mxu0
      %1766 = vrot.lane.b32.xlu0 %v1738, 8
      %v1767 = vpop.permute.xlu0 %1766
      %1768 = vrot.lane.b32.xlu0 %v1743, 8
      %v1769 = vpop.permute.xlu0 %1768
      %1770 = vrot.lane.b32.xlu0 %v1748, 8
      %v1771 = vpop.permute.xlu0 %1770
      %1772 = vrot.lane.b32.xlu0 %v1753, 8
      %v1773 = vpop.permute.xlu0 %1772
      %1774 = vrot.lane.b32.xlu0 %v1758, 8
      %v1775 = vpop.permute.xlu0 %1774
      %v1781 = vsel %vm919, %v1433, %v1767
      %v1782 = vsel %vm919, %v1438, %v1769
      %v1783 = vsel %vm919, %v1443, %v1771
      %v1784 = vsel %vm919, %v1448, %v1773
      %v1785 = vsel %vm919, %v1453, %v1775
      %v1786 = vld [vmem:[%s856] sm:$0xff]
      %v1787 = vld [vmem:[%s856 + $0x8] sm:$0xff]
      %v1788 = vld [vmem:[%s859] sm:$0x1]
      %v1790 = vlaneseq
      %v1791 = vshrl.u32 %v1790, 7
      %v1792 = vsub.s32 0, %v1791
      %v1793 = vrot.slane %v1788, %v1792
      %v1796 = vsel %vm1044, %v1781, 0
      %v1799 = vsel %vm1044, %v1782, 0
      %v1802 = vsel %vm1044, %v1783, 0
      %v1805 = vsel %vm1044, %v1784, 0
      %v1808 = vsel %vm1044, %v1785, 0
      %1810 = vmatprep.subr.mxu0 0.0
      %1811 = vmatpush1.msra.mxu0 %v1786
      %1812 = vmatprep.subr.mxu0 0.0
      %1813 = vmatpush1.msra.mxu0 %v1787
      %1814 = vmatprep.subr.mxu0 0.0
      %1815 = vmatpush1.msra.mxu0 0.0
      %1816 = vmatprep.subr.mxu0 0.0
      %1817 = vmatpush1.msra.mxu0 0.0
      %1818 = vmatprep.subr.mxu0 0.0
      %1819 = vmatpush1.msra.mxu0 0.0
      %1820 = vmatprep.subr.mxu0 0.0
      %1821 = vmatpush1.msra.mxu0 0.0
      %1822 = vmatprep.subr.mxu0 0.0
      %1823 = vmatpush1.msra.mxu0 0.0
      %1824 = vmatprep.subr.mxu0 0.0
      %1825 = vmatpush1.msra.mxu0 0.0
      %1826 = vmatprep.subr.mxu0 0.0
      %1827 = vmatpush1.msra.mxu0 0.0
      %1828 = vmatprep.subr.mxu0 0.0
      %1829 = vmatpush1.msra.mxu0 0.0
      %1830 = vmatprep.subr.mxu0 0.0
      %1831 = vmatpush1.msra.mxu0 0.0
      %1832 = vmatprep.subr.mxu0 0.0
      %1833 = vmatpush1.msra.mxu0 0.0
      %1834 = vmatprep.subr.mxu0 0.0
      %1835 = vmatpush1.msra.mxu0 0.0
      %1836 = vmatprep.subr.mxu0 0.0
      %1837 = vmatpush1.msra.mxu0 0.0
      %1838 = vmatprep.subr.mxu0 0.0
      %1839 = vmatpush1.msra.mxu0 0.0
      %1840 = vmatprep.subr.mxu0 0.0
      %1841 = vmatpush1.msra.mxu0 0.0
      %1842 = vmatprep.subr.mxu0 0.0
      %1843 = vmatpush1.msra.mxu0 0.0
      %1844 = vmatprep.subr.mxu0 0.0
      %1845 = vmatpush1.msra.mxu0 0.0
      %1846 = vmatprep.subr.mxu0 0.0
      %1847 = vmatpush1.msra.mxu0 0.0
      %1848 = vmatprep.subr.mxu0 0.0
      %1849 = vmatpush1.msra.mxu0 0.0
      %1850 = vmatprep.subr.mxu0 0.0
      %1851 = vmatpush1.msra.mxu0 0.0
      %1852 = vmatprep.subr.mxu0 0.0
      %1853 = vmatpush1.msra.mxu0 0.0
      %1854 = vmatprep.subr.mxu0 0.0
      %1855 = vmatpush1.msra.mxu0 0.0
      %1856 = vmatprep.subr.mxu0 0.0
      %1857 = vmatpush1.msra.mxu0 0.0
      %1858 = vmatprep.subr.mxu0 0.0
      %1859 = vmatpush1.msra.mxu0 0.0
      %1860 = vmatprep.subr.mxu0 0.0
      %1861 = vmatpush1.msra.mxu0 0.0
      %1862 = vmatprep.subr.mxu0 0.0
      %1863 = vmatpush1.msra.mxu0 0.0
      %1864 = vmatprep.subr.mxu0 0.0
      %1865 = vmatpush1.msra.mxu0 0.0
      %1866 = vmatprep.subr.mxu0 0.0
      %1867 = vmatpush1.msra.mxu0 0.0
      %1868 = vmatprep.subr.mxu0 0.0
      %1869 = vmatpush1.msra.mxu0 0.0
      %1870 = vmatprep.subr.mxu0 0.0
      %1871 = vmatpush1.msra.mxu0 0.0
      %1872 = vmatprep.subr.mxu0 0.0
      %1873 = vmatpush1.msra.mxu0 0.0
      %1874 = vmatprep.mubr.f32.mxu0 0.0
      %1875 = vmatmul.mubr.f32.gmra.mrb[0].mxu0 %v1796
      %v1876 = vpop.f32.mrb[0].mxu0
      %v1877 = vadd.f32 %v1793, %v1876
      %v1878 = vpop.f32.mrb[0].mxu0
      %1879 = vmatprep.mubr.f32.mxu0 0.0
      %1880 = vmatmul.mubr.f32.gmra.mrb[0].mxu0 %v1799
      %v1881 = vpop.f32.mrb[0].mxu0
      %v1882 = vadd.f32 %v1793, %v1881
      %v1883 = vpop.f32.mrb[0].mxu0
      %1884 = vmatprep.mubr.f32.mxu0 0.0
      %1885 = vmatmul.mubr.f32.gmra.mrb[0].mxu0 %v1802
      %v1886 = vpop.f32.mrb[0].mxu0
      %v1887 = vadd.f32 %v1793, %v1886
      %v1888 = vpop.f32.mrb[0].mxu0
      %1889 = vmatprep.mubr.f32.mxu0 0.0
      %1890 = vmatmul.mubr.f32.gmra.mrb[0].mxu0 %v1805
      %v1891 = vpop.f32.mrb[0].mxu0
      %v1892 = vadd.f32 %v1793, %v1891
      %v1893 = vpop.f32.mrb[0].mxu0
      %1894 = vmatprep.mubr.f32.mxu0 0.0
      %1895 = vmatmul.mubr.f32.gmra.mrb[0].mxu0 %v1808
      %v1896 = vpop.f32.mrb[0].mxu0
      %v1897 = vadd.f32 %v1793, %v1896
      %v1898 = vpop.f32.mrb[0].mxu0
      %1899 = vdwg.mxu0
      %v1900 = vadd.f32 %v1030, %v1877
      %v1901 = vadd.f32 %v1031, %v1882
      %v1902 = vadd.f32 %v1032, %v1887
      %v1903 = vadd.f32 %v1033, %v1892
      %v1904 = vadd.f32 %v1034, %v1897
      %v1905 = vld [vmem:[%s862] sm:$0x1]
      %v1906 = vld [vmem:[%s865] sm:$0x1]
      %v1907 = vsel %vm1044, %v1900, 0.0
      %1908 = vadd.xlane.f32.xlu0 %v1907
      %v1909 = vpop.xlane.xlu0 %1908
      %v1910 = vsel %vm1044, %v1901, 0.0
      %1911 = vadd.xlane.f32.xlu0 %v1910
      %v1912 = vpop.xlane.xlu0 %1911
      %v1913 = vsel %vm1044, %v1902, 0.0
      %1914 = vadd.xlane.f32.xlu0 %v1913
      %v1915 = vpop.xlane.xlu0 %1914
      %v1916 = vsel %vm1044, %v1903, 0.0
      %1917 = vadd.xlane.f32.xlu0 %v1916
      %v1918 = vpop.xlane.xlu0 %1917
      %v1919 = vsel %vm1044, %v1904, 0.0
      %1920 = vadd.xlane.f32.xlu0 %v1919
      %v1921 = vpop.xlane.xlu0 %1920
      %v1922 = vrcp.pop 16.0
      %v1923 = vmul.f32 %v1909, %v1922
      %v1924 = vmul.f32 %v1912, %v1922
      %v1925 = vmul.f32 %v1915, %v1922
      %v1926 = vmul.f32 %v1918, %v1922
      %v1927 = vmul.f32 %v1921, %v1922
      %v1928 = vsub.f32 %v1900, %v1923
      %v1929 = vsub.f32 %v1901, %v1924
      %v1930 = vsub.f32 %v1902, %v1925
      %v1931 = vsub.f32 %v1903, %v1926
      %v1932 = vsub.f32 %v1904, %v1927
      %v1933 = vmul.f32 %v1928, %v1928
      %v1934 = vmul.f32 %v1929, %v1929
      %v1935 = vmul.f32 %v1930, %v1930
      %v1936 = vmul.f32 %v1931, %v1931
      %v1937 = vmul.f32 %v1932, %v1932
      %v1938 = vsel %vm1044, %v1933, 0.0
      %1939 = vadd.xlane.f32.xlu0 %v1938
      %v1940 = vpop.xlane.xlu0 %1939
      %v1941 = vsel %vm1044, %v1934, 0.0
      %1942 = vadd.xlane.f32.xlu0 %v1941
      %v1943 = vpop.xlane.xlu0 %1942
      %v1944 = vsel %vm1044, %v1935, 0.0
      %1945 = vadd.xlane.f32.xlu0 %v1944
      %v1946 = vpop.xlane.xlu0 %1945
      %v1947 = vsel %vm1044, %v1936, 0.0
      %1948 = vadd.xlane.f32.xlu0 %v1947
      %v1949 = vpop.xlane.xlu0 %1948
      %v1950 = vsel %vm1044, %v1937, 0.0
      %1951 = vadd.xlane.f32.xlu0 %v1950
      %v1952 = vpop.xlane.xlu0 %1951
      %v1953 = vmul.f32 %v1940, %v1922
      %v1954 = vmul.f32 %v1943, %v1922
      %v1955 = vmul.f32 %v1946, %v1922
      %v1956 = vmul.f32 %v1949, %v1922
      %v1957 = vmul.f32 %v1952, %v1922
      %v1958 = vadd.f32 %v1953, 1e-05
      %v1959 = vadd.f32 %v1954, 1e-05
      %v1960 = vadd.f32 %v1955, 1e-05
      %v1961 = vadd.f32 %v1956, 1e-05
      %v1962 = vadd.f32 %v1957, 1e-05
      %v1963 = vrsqrt.pop %v1958
      %v1964 = vrsqrt.pop %v1959
      %v1965 = vrsqrt.pop %v1960
      %v1966 = vrsqrt.pop %v1961
      %v1967 = vrsqrt.pop %v1962
      %v1968 = vmul.f32 %v1928, %v1963
      %v1969 = vmul.f32 %v1929, %v1964
      %v1970 = vmul.f32 %v1930, %v1965
      %v1971 = vmul.f32 %v1931, %v1966
      %v1972 = vmul.f32 %v1932, %v1967
      %v1974 = vlaneseq
      %v1975 = vshrl.u32 %v1974, 7
      %v1976 = vsub.s32 0, %v1975
      %v1977 = vrot.slane %v1905, %v1976
      %v1979 = vmul.f32 %v1968, %v1977
      %v1980 = vmul.f32 %v1969, %v1977
      %v1981 = vmul.f32 %v1970, %v1977
      %v1982 = vmul.f32 %v1971, %v1977
      %v1983 = vmul.f32 %v1972, %v1977
      %v1985 = vlaneseq
      %v1986 = vshrl.u32 %v1985, 7
      %v1987 = vsub.s32 0, %v1986
      %v1988 = vrot.slane %v1906, %v1987
      %v1990 = vadd.f32 %v1979, %v1988
      %v1991 = vadd.f32 %v1980, %v1988
      %v1992 = vadd.f32 %v1981, %v1988
      %v1993 = vadd.f32 %v1982, %v1988
      %v1994 = vadd.f32 %v1983, %v1988
      %v1995 = vpack.c.bf16 %v1991, %v1990
      %v1996 = vpack.c.bf16 %v1993, %v1992
      %v1997 = vpack.c.bf16 %v1994, %v1994
      %v1998 = vld [vmem:[%s882] sm:$0x1]
      %v2000 = vlaneseq
      %v2001 = vshrl.u32 %v2000, 7
      %v2002 = vsub.s32 0, %v2001
      %v2003 = vrot.slane %v1998, %v2002
      %v2005 = vadd.f32 %v2003, 0.0
      %v2006 = vld [vmem:[%s870] sm:$0xff]
      %v2007 = vld [vmem:[%s870 + $0x8] sm:$0xff]
      %v2008 = vld [vmem:[%s870 + $0x10] sm:$0xff]
      %v2009 = vld [vmem:[%s870 + $0x18] sm:$0xff]
      %v2010 = vld [vmem:[%s874] sm:$0xf]
      %v2012 = vlaneseq
      %v2013 = vshrl.u32 %v2012, 7
      %v2014 = vsub.s32 0, %v2013
      %v2015 = vrot.slane %v2010, %v2014
      %v2016 = vlaneseq
      %v2017 = vshrl.u32 %v2016, 7
      %v2018 = vsub.s32 1, %v2017
      %v2019 = vrot.slane %v2010, %v2018
      %v2020 = vlaneseq
      %v2021 = vshrl.u32 %v2020, 7
      %v2022 = vsub.s32 2, %v2021
      %v2023 = vrot.slane %v2010, %v2022
      %v2024 = vlaneseq
      %v2025 = vshrl.u32 %v2024, 7
      %v2026 = vsub.s32 3, %v2025
      %v2027 = vrot.slane %v2010, %v2026
      %v2036 = vunpack.c.l.b16 %v2006
      %v2037 = vunpack.c.h.b16 %v2006
      %v2038 = vunpack.c.l.b16 %v2007
      %v2039 = vunpack.c.h.b16 %v2007
      %v2040 = vunpack.c.l.b16 %v2008
      %v2041 = vunpack.c.h.b16 %v2008
      %v2042 = vunpack.c.l.b16 %v2009
      %v2043 = vunpack.c.h.b16 %v2009
      %v2044 = vpack.c.b16 %v2040, %v2036
      %v2045 = vpack.c.b16 %v2041, %v2037
      %v2046 = vpack.c.b16 %v2042, %v2038
      %v2047 = vpack.c.b16 %v2043, %v2039
      %v2053 = vsel %vm1044, %v1995, 0
      %v2056 = vsel %vm1044, %v1996, 0
      %v2059 = vsel %vm1044, %v1997, 0
      %2061 = vmatprep.subr.bf16.mxu0 %v2045
      %2062 = vmatpush1.bf16.msra.mxu0 %v2044
      %2063 = vmatprep.subr.bf16.mxu0 0
      %2064 = vmatpush1.bf16.msra.mxu0 0
      %2065 = vmatprep.subr.bf16.mxu0 0
      %2066 = vmatpush1.bf16.msra.mxu0 0
      %2067 = vmatprep.subr.bf16.mxu0 0
      %2068 = vmatpush1.bf16.msra.mxu0 0
      %2069 = vmatprep.subr.bf16.mxu0 0
      %2070 = vmatpush1.bf16.msra.mxu0 0
      %2071 = vmatprep.subr.bf16.mxu0 0
      %2072 = vmatpush1.bf16.msra.mxu0 0
      %2073 = vmatprep.subr.bf16.mxu0 0
      %2074 = vmatpush1.bf16.msra.mxu0 0
      %2075 = vmatprep.subr.bf16.mxu0 0
      %2076 = vmatpush1.bf16.msra.mxu0 0
      %2077 = vmatprep.subr.bf16.mxu0 0
      %2078 = vmatpush1.bf16.msra.mxu0 0
      %2079 = vmatprep.subr.bf16.mxu0 0
      %2080 = vmatpush1.bf16.msra.mxu0 0
      %2081 = vmatprep.subr.bf16.mxu0 0
      %2082 = vmatpush1.bf16.msra.mxu0 0
      %2083 = vmatprep.subr.bf16.mxu0 0
      %2084 = vmatpush1.bf16.msra.mxu0 0
      %2085 = vmatprep.subr.bf16.mxu0 0
      %2086 = vmatpush1.bf16.msra.mxu0 0
      %2087 = vmatprep.subr.bf16.mxu0 0
      %2088 = vmatpush1.bf16.msra.mxu0 0
      %2089 = vmatprep.subr.bf16.mxu0 0
      %2090 = vmatpush1.bf16.msra.mxu0 0
      %2091 = vmatprep.subr.bf16.mxu0 0
      %2092 = vmatpush1.bf16.msra.mxu0 0
      %2093 = vmatprep.mubr.bf16.mxu0 0
      %2094 = vmatmul.mubr.bf16.gmra.mrb[0].mxu0 %v2053
      %v2095 = vpop.f32.mrb[0].mxu0
      %v2096 = vadd.f32 %v2015, %v2095
      %v2097 = vpop.f32.mrb[0].mxu0
      %v2098 = vadd.f32 %v2019, %v2097
      %v2099 = vpop.f32.mrb[0].mxu0
      %v2100 = vadd.f32 %v2015, %v2099
      %v2101 = vpop.f32.mrb[0].mxu0
      %v2102 = vadd.f32 %v2019, %v2101
      %2103 = vmatprep.mubr.bf16.mxu0 0
      %2104 = vmatmul.mubr.bf16.gmra.mrb[0].mxu0 %v2056
      %v2105 = vpop.f32.mrb[0].mxu0
      %v2106 = vadd.f32 %v2015, %v2105
      %v2107 = vpop.f32.mrb[0].mxu0
      %v2108 = vadd.f32 %v2019, %v2107
      %v2109 = vpop.f32.mrb[0].mxu0
      %v2110 = vadd.f32 %v2015, %v2109
      %v2111 = vpop.f32.mrb[0].mxu0
      %v2112 = vadd.f32 %v2019, %v2111
      %2113 = vmatprep.mubr.bf16.mxu0 0
      %2114 = vmatmul.mubr.bf16.gmra.mrb[0].mxu0 %v2059
      %v2115 = vpop.f32.mrb[0].mxu0
      %v2116 = vadd.f32 %v2015, %v2115
      %v2117 = vpop.f32.mrb[0].mxu0
      %v2118 = vadd.f32 %v2019, %v2117
      %v2119 = vpop.f32.mrb[0].mxu0
      %v2120 = vpop.f32.mrb[0].mxu0
      %2121 = vdwg.mxu0
      %2122 = vmatprep.subr.bf16.mxu0 %v2047
      %2123 = vmatpush1.bf16.msra.mxu0 %v2046
      %2124 = vmatprep.subr.bf16.mxu0 0
      %2125 = vmatpush1.bf16.msra.mxu0 0
      %2126 = vmatprep.subr.bf16.mxu0 0
      %2127 = vmatpush1.bf16.msra.mxu0 0
      %2128 = vmatprep.subr.bf16.mxu0 0
      %2129 = vmatpush1.bf16.msra.mxu0 0
      %2130 = vmatprep.subr.bf16.mxu0 0
      %2131 = vmatpush1.bf16.msra.mxu0 0
      %2132 = vmatprep.subr.bf16.mxu0 0
      %2133 = vmatpush1.bf16.msra.mxu0 0
      %2134 = vmatprep.subr.bf16.mxu0 0
      %2135 = vmatpush1.bf16.msra.mxu0 0
      %2136 = vmatprep.subr.bf16.mxu0 0
      %2137 = vmatpush1.bf16.msra.mxu0 0
      %2138 = vmatprep.subr.bf16.mxu0 0
      %2139 = vmatpush1.bf16.msra.mxu0 0
      %2140 = vmatprep.subr.bf16.mxu0 0
      %2141 = vmatpush1.bf16.msra.mxu0 0
      %2142 = vmatprep.subr.bf16.mxu0 0
      %2143 = vmatpush1.bf16.msra.mxu0 0
      %2144 = vmatprep.subr.bf16.mxu0 0
      %2145 = vmatpush1.bf16.msra.mxu0 0
      %2146 = vmatprep.subr.bf16.mxu0 0
      %2147 = vmatpush1.bf16.msra.mxu0 0
      %2148 = vmatprep.subr.bf16.mxu0 0
      %2149 = vmatpush1.bf16.msra.mxu0 0
      %2150 = vmatprep.subr.bf16.mxu0 0
      %2151 = vmatpush1.bf16.msra.mxu0 0
      %2152 = vmatprep.subr.bf16.mxu0 0
      %2153 = vmatpush1.bf16.msra.mxu0 0
      %2154 = vmatprep.mubr.bf16.mxu0 0
      %2155 = vmatmul.mubr.bf16.gmra.mrb[0].mxu0 %v2053
      %v2156 = vpop.f32.mrb[0].mxu0
      %v2157 = vadd.f32 %v2023, %v2156
      %v2158 = vpop.f32.mrb[0].mxu0
      %v2159 = vadd.f32 %v2027, %v2158
      %v2160 = vpop.f32.mrb[0].mxu0
      %v2161 = vadd.f32 %v2023, %v2160
      %v2162 = vpop.f32.mrb[0].mxu0
      %v2163 = vadd.f32 %v2027, %v2162
      %2164 = vmatprep.mubr.bf16.mxu0 0
      %2165 = vmatmul.mubr.bf16.gmra.mrb[0].mxu0 %v2056
      %v2166 = vpop.f32.mrb[0].mxu0
      %v2167 = vadd.f32 %v2023, %v2166
      %v2168 = vpop.f32.mrb[0].mxu0
      %v2169 = vadd.f32 %v2027, %v2168
      %v2170 = vpop.f32.mrb[0].mxu0
      %v2171 = vadd.f32 %v2023, %v2170
      %v2172 = vpop.f32.mrb[0].mxu0
      %v2173 = vadd.f32 %v2027, %v2172
      %2174 = vmatprep.mubr.bf16.mxu0 0
      %2175 = vmatmul.mubr.bf16.gmra.mrb[0].mxu0 %v2059
      %v2176 = vpop.f32.mrb[0].mxu0
      %v2177 = vadd.f32 %v2023, %v2176
      %v2178 = vpop.f32.mrb[0].mxu0
      %v2179 = vadd.f32 %v2027, %v2178
      %v2180 = vpop.f32.mrb[0].mxu0
      %v2181 = vpop.f32.mrb[0].mxu0
      %2182 = vdwg.mxu0
      %v2183 = vmax.f32 %v2096, 0.0
      %v2184 = vmax.f32 %v2098, 0.0
      %v2185 = vmax.f32 %v2157, 0.0
      %v2186 = vmax.f32 %v2159, 0.0
      %v2187 = vmax.f32 %v2100, 0.0
      %v2188 = vmax.f32 %v2102, 0.0
      %v2189 = vmax.f32 %v2161, 0.0
      %v2190 = vmax.f32 %v2163, 0.0
      %v2191 = vmax.f32 %v2106, 0.0
      %v2192 = vmax.f32 %v2108, 0.0
      %v2193 = vmax.f32 %v2167, 0.0
      %v2194 = vmax.f32 %v2169, 0.0
      %v2195 = vmax.f32 %v2110, 0.0
      %v2196 = vmax.f32 %v2112, 0.0
      %v2197 = vmax.f32 %v2171, 0.0
      %v2198 = vmax.f32 %v2173, 0.0
      %v2199 = vmax.f32 %v2116, 0.0
      %v2200 = vmax.f32 %v2118, 0.0
      %v2201 = vmax.f32 %v2177, 0.0
      %v2202 = vmax.f32 %v2179, 0.0
      %v2203 = vpack.c.bf16 %v2187, %v2183
      %v2204 = vpack.c.bf16 %v2188, %v2184
      %v2205 = vpack.c.bf16 %v2189, %v2185
      %v2206 = vpack.c.bf16 %v2190, %v2186
      %v2207 = vpack.c.bf16 %v2195, %v2191
      %v2208 = vpack.c.bf16 %v2196, %v2192
      %v2209 = vpack.c.bf16 %v2197, %v2193
      %v2210 = vpack.c.bf16 %v2198, %v2194
      %v2211 = vpack.c.bf16 %v2199, %v2199
      %v2212 = vpack.c.bf16 %v2200, %v2200
      %v2213 = vpack.c.bf16 %v2201, %v2201
      %v2214 = vpack.c.bf16 %v2202, %v2202
      %v2215 = vld [vmem:[%s879] sm:$0xf]
      %v2216 = vld [vmem:[%s879 + $0x4] sm:$0xf]
      %v2217 = vld [vmem:[%s879 + $0x8] sm:$0xf]
      %v2218 = vld [vmem:[%s879 + $0xc] sm:$0xf]
      %v2219 = vld [vmem:[%s879 + $0x10] sm:$0xf]
      %v2220 = vld [vmem:[%s879 + $0x14] sm:$0xf]
      %v2221 = vld [vmem:[%s879 + $0x18] sm:$0xf]
      %v2222 = vld [vmem:[%s879 + $0x1c] sm:$0xf]
      %v2223 = vld [vmem:[%s879 + $0x20] sm:$0xf]
      %v2224 = vld [vmem:[%s879 + $0x24] sm:$0xf]
      %v2225 = vld [vmem:[%s879 + $0x28] sm:$0xf]
      %v2226 = vld [vmem:[%s879 + $0x2c] sm:$0xf]
      %v2227 = vld [vmem:[%s879 + $0x30] sm:$0xf]
      %v2228 = vld [vmem:[%s879 + $0x34] sm:$0xf]
      %v2229 = vld [vmem:[%s879 + $0x38] sm:$0xf]
      %v2230 = vld [vmem:[%s879 + $0x3c] sm:$0xf]
      %v2231 = vld [vmem:[%s879 + $0x40] sm:$0xf]
      %v2232 = vld [vmem:[%s879 + $0x44] sm:$0xf]
      %v2233 = vld [vmem:[%s879 + $0x48] sm:$0xf]
      %v2234 = vld [vmem:[%s879 + $0x4c] sm:$0xf]
      %v2235 = vld [vmem:[%s879 + $0x50] sm:$0xf]
      %v2236 = vld [vmem:[%s879 + $0x54] sm:$0xf]
      %v2237 = vld [vmem:[%s879 + $0x58] sm:$0xf]
      %v2238 = vld [vmem:[%s879 + $0x5c] sm:$0xf]
      %v2239 = vld [vmem:[%s879 + $0x60] sm:$0xf]
      %v2240 = vld [vmem:[%s879 + $0x64] sm:$0xf]
      %v2241 = vld [vmem:[%s879 + $0x68] sm:$0xf]
      %v2242 = vld [vmem:[%s879 + $0x6c] sm:$0xf]
      %v2243 = vld [vmem:[%s879 + $0x70] sm:$0xf]
      %v2244 = vld [vmem:[%s879 + $0x74] sm:$0xf]
      %v2245 = vld [vmem:[%s879 + $0x78] sm:$0xf]
      %v2246 = vld [vmem:[%s879 + $0x7c] sm:$0xf]
      %v2247 = vld [vmem:[%s879 + $0x80] sm:$0xf]
      %v2248 = vld [vmem:[%s879 + $0x84] sm:$0xf]
      %v2249 = vld [vmem:[%s879 + $0x88] sm:$0xf]
      %v2250 = vld [vmem:[%s879 + $0x8c] sm:$0xf]
      %v2251 = vld [vmem:[%s879 + $0x90] sm:$0xf]
      %v2252 = vld [vmem:[%s879 + $0x94] sm:$0xf]
      %v2253 = vld [vmem:[%s879 + $0x98] sm:$0xf]
      %v2254 = vld [vmem:[%s879 + $0x9c] sm:$0xf]
      %v2255 = vld [vmem:[%s879 + $0xa0] sm:$0xf]
      %v2256 = vld [vmem:[%s879 + $0xa4] sm:$0xf]
      %v2257 = vld [vmem:[%s879 + $0xa8] sm:$0xf]
      %v2258 = vld [vmem:[%s879 + $0xac] sm:$0xf]
      %v2259 = vld [vmem:[%s879 + $0xb0] sm:$0xf]
      %v2260 = vld [vmem:[%s879 + $0xb4] sm:$0xf]
      %v2261 = vld [vmem:[%s879 + $0xb8] sm:$0xf]
      %v2262 = vld [vmem:[%s879 + $0xbc] sm:$0xf]
      %v2263 = vld [vmem:[%s879 + $0xc0] sm:$0xf]
      %v2264 = vld [vmem:[%s879 + $0xc4] sm:$0xf]
      %v2265 = vld [vmem:[%s879 + $0xc8] sm:$0xf]
      %v2266 = vld [vmem:[%s879 + $0xcc] sm:$0xf]
      %v2267 = vld [vmem:[%s879 + $0xd0] sm:$0xf]
      %v2268 = vld [vmem:[%s879 + $0xd4] sm:$0xf]
      %v2269 = vld [vmem:[%s879 + $0xd8] sm:$0xf]
      %v2270 = vld [vmem:[%s879 + $0xdc] sm:$0xf]
      %v2271 = vld [vmem:[%s879 + $0xe0] sm:$0xf]
      %v2272 = vld [vmem:[%s879 + $0xe4] sm:$0xf]
      %v2273 = vld [vmem:[%s879 + $0xe8] sm:$0xf]
      %v2274 = vld [vmem:[%s879 + $0xec] sm:$0xf]
      %v2275 = vld [vmem:[%s879 + $0xf0] sm:$0xf]
      %v2276 = vld [vmem:[%s879 + $0xf4] sm:$0xf]
      %v2277 = vld [vmem:[%s879 + $0xf8] sm:$0xf]
      %v2278 = vld [vmem:[%s879 + $0xfc] sm:$0xf]
      %v2343 = vunpack.c.l.b16 %v2215
      %v2344 = vunpack.c.l.b16 %v2216
      %v2345 = vunpack.c.l.b16 %v2217
      %v2346 = vunpack.c.l.b16 %v2218
      %v2347 = vunpack.c.l.b16 %v2219
      %v2348 = vunpack.c.l.b16 %v2220
      %v2349 = vunpack.c.l.b16 %v2221
      %v2350 = vunpack.c.l.b16 %v2222
      %v2351 = vunpack.c.l.b16 %v2223
      %v2352 = vunpack.c.l.b16 %v2224
      %v2353 = vunpack.c.l.b16 %v2225
      %v2354 = vunpack.c.l.b16 %v2226
      %v2355 = vunpack.c.l.b16 %v2227
      %v2356 = vunpack.c.l.b16 %v2228
      %v2357 = vunpack.c.l.b16 %v2229
      %v2358 = vunpack.c.l.b16 %v2230
      %v2359 = vunpack.c.l.b16 %v2231
      %v2360 = vunpack.c.l.b16 %v2232
      %v2361 = vunpack.c.l.b16 %v2233
      %v2362 = vunpack.c.l.b16 %v2234
      %v2363 = vunpack.c.l.b16 %v2235
      %v2364 = vunpack.c.l.b16 %v2236
      %v2365 = vunpack.c.l.b16 %v2237
      %v2366 = vunpack.c.l.b16 %v2238
      %v2367 = vunpack.c.l.b16 %v2239
      %v2368 = vunpack.c.l.b16 %v2240
      %v2369 = vunpack.c.l.b16 %v2241
      %v2370 = vunpack.c.l.b16 %v2242
      %v2371 = vunpack.c.l.b16 %v2243
      %v2372 = vunpack.c.l.b16 %v2244
      %v2373 = vunpack.c.l.b16 %v2245
      %v2374 = vunpack.c.l.b16 %v2246
      %v2375 = vunpack.c.l.b16 %v2247
      %v2376 = vunpack.c.l.b16 %v2248
      %v2377 = vunpack.c.l.b16 %v2249
      %v2378 = vunpack.c.l.b16 %v2250
      %v2379 = vunpack.c.l.b16 %v2251
      %v2380 = vunpack.c.l.b16 %v2252
      %v2381 = vunpack.c.l.b16 %v2253
      %v2382 = vunpack.c.l.b16 %v2254
      %v2383 = vunpack.c.l.b16 %v2255
      %v2384 = vunpack.c.l.b16 %v2256
      %v2385 = vunpack.c.l.b16 %v2257
      %v2386 = vunpack.c.l.b16 %v2258
      %v2387 = vunpack.c.l.b16 %v2259
      %v2388 = vunpack.c.l.b16 %v2260
      %v2389 = vunpack.c.l.b16 %v2261
      %v2390 = vunpack.c.l.b16 %v2262
      %v2391 = vunpack.c.l.b16 %v2263
      %v2392 = vunpack.c.l.b16 %v2264
      %v2393 = vunpack.c.l.b16 %v2265
      %v2394 = vunpack.c.l.b16 %v2266
      %v2395 = vunpack.c.l.b16 %v2267
      %v2396 = vunpack.c.l.b16 %v2268
      %v2397 = vunpack.c.l.b16 %v2269
      %v2398 = vunpack.c.l.b16 %v2270
      %v2399 = vunpack.c.l.b16 %v2271
      %v2400 = vunpack.c.l.b16 %v2272
      %v2401 = vunpack.c.l.b16 %v2273
      %v2402 = vunpack.c.l.b16 %v2274
      %v2403 = vunpack.c.l.b16 %v2275
      %v2404 = vunpack.c.l.b16 %v2276
      %v2405 = vunpack.c.l.b16 %v2277
      %v2406 = vunpack.c.l.b16 %v2278
      %v2407 = vpack.c.b16 %v2344, %v2343
      %v2408 = vpack.c.b16 %v2346, %v2345
      %v2409 = vpack.c.b16 %v2348, %v2347
      %v2410 = vpack.c.b16 %v2350, %v2349
      %v2411 = vpack.c.b16 %v2352, %v2351
      %v2412 = vpack.c.b16 %v2354, %v2353
      %v2413 = vpack.c.b16 %v2356, %v2355
      %v2414 = vpack.c.b16 %v2358, %v2357
      %v2415 = vpack.c.b16 %v2360, %v2359
      %v2416 = vpack.c.b16 %v2362, %v2361
      %v2417 = vpack.c.b16 %v2364, %v2363
      %v2418 = vpack.c.b16 %v2366, %v2365
      %v2419 = vpack.c.b16 %v2368, %v2367
      %v2420 = vpack.c.b16 %v2370, %v2369
      %v2421 = vpack.c.b16 %v2372, %v2371
      %v2422 = vpack.c.b16 %v2374, %v2373
      %v2423 = vpack.c.b16 %v2376, %v2375
      %v2424 = vpack.c.b16 %v2378, %v2377
      %v2425 = vpack.c.b16 %v2380, %v2379
      %v2426 = vpack.c.b16 %v2382, %v2381
      %v2427 = vpack.c.b16 %v2384, %v2383
      %v2428 = vpack.c.b16 %v2386, %v2385
      %v2429 = vpack.c.b16 %v2388, %v2387
      %v2430 = vpack.c.b16 %v2390, %v2389
      %v2431 = vpack.c.b16 %v2392, %v2391
      %v2432 = vpack.c.b16 %v2394, %v2393
      %v2433 = vpack.c.b16 %v2396, %v2395
      %v2434 = vpack.c.b16 %v2398, %v2397
      %v2435 = vpack.c.b16 %v2400, %v2399
      %v2436 = vpack.c.b16 %v2402, %v2401
      %v2437 = vpack.c.b16 %v2404, %v2403
      %v2438 = vpack.c.b16 %v2406, %v2405
      %2471 = vmatprep.subr.bf16.mxu0 0
      %2472 = vmatpush1.bf16.msra.mxu0 %v2407
      %2473 = vmatprep.subr.bf16.mxu0 0
      %2474 = vmatpush1.bf16.msra.mxu0 %v2408
      %2475 = vmatprep.subr.bf16.mxu0 0
      %2476 = vmatpush1.bf16.msra.mxu0 %v2409
      %2477 = vmatprep.subr.bf16.mxu0 0
      %2478 = vmatpush1.bf16.msra.mxu0 %v2410
      %2479 = vmatprep.subr.bf16.mxu0 0
      %2480 = vmatpush1.bf16.msra.mxu0 %v2411
      %2481 = vmatprep.subr.bf16.mxu0 0
      %2482 = vmatpush1.bf16.msra.mxu0 %v2412
      %2483 = vmatprep.subr.bf16.mxu0 0
      %2484 = vmatpush1.bf16.msra.mxu0 %v2413
      %2485 = vmatprep.subr.bf16.mxu0 0
      %2486 = vmatpush1.bf16.msra.mxu0 %v2414
      %2487 = vmatprep.subr.bf16.mxu0 0
      %2488 = vmatpush1.bf16.msra.mxu0 %v2415
      %2489 = vmatprep.subr.bf16.mxu0 0
      %2490 = vmatpush1.bf16.msra.mxu0 %v2416
      %2491 = vmatprep.subr.bf16.mxu0 0
      %2492 = vmatpush1.bf16.msra.mxu0 %v2417
      %2493 = vmatprep.subr.bf16.mxu0 0
      %2494 = vmatpush1.bf16.msra.mxu0 %v2418
      %2495 = vmatprep.subr.bf16.mxu0 0
      %2496 = vmatpush1.bf16.msra.mxu0 %v2419
      %2497 = vmatprep.subr.bf16.mxu0 0
      %2498 = vmatpush1.bf16.msra.mxu0 %v2420
      %2499 = vmatprep.subr.bf16.mxu0 0
      %2500 = vmatpush1.bf16.msra.mxu0 %v2421
      %2501 = vmatprep.subr.bf16.mxu0 0
      %2502 = vmatpush1.bf16.msra.mxu0 %v2422
      %2503 = vmatprep.mubr.bf16.mxu0 %v2204
      %2504 = vmatmul.mubr.bf16.gmra.mrb[0].mxu0 %v2203
      %v2505 = vpop.f32.mrb[0].mxu0
      %v2506 = vadd.f32 0.0, %v2505
      %v2507 = vpop.f32.mrb[0].mxu0
      %v2508 = vpop.f32.mrb[0].mxu0
      %v2509 = vadd.f32 0.0, %v2508
      %v2510 = vpop.f32.mrb[0].mxu0
      %2511 = vmatprep.mubr.bf16.mxu0 %v2208
      %2512 = vmatmul.mubr.bf16.gmra.mrb[0].mxu0 %v2207
      %v2513 = vpop.f32.mrb[0].mxu0
      %v2514 = vadd.f32 0.0, %v2513
      %v2515 = vpop.f32.mrb[0].mxu0
      %v2516 = vpop.f32.mrb[0].mxu0
      %v2517 = vadd.f32 0.0, %v2516
      %v2518 = vpop.f32.mrb[0].mxu0
      %2519 = vmatprep.mubr.bf16.mxu0 %v2212
      %2520 = vmatmul.mubr.bf16.gmra.mrb[0].mxu0 %v2211
      %v2521 = vpop.f32.mrb[0].mxu0
      %v2522 = vadd.f32 0.0, %v2521
      %v2523 = vpop.f32.mrb[0].mxu0
      %v2524 = vpop.f32.mrb[0].mxu0
      %v2525 = vpop.f32.mrb[0].mxu0
      %2526 = vdwg.mxu0
      %2527 = vmatprep.subr.bf16.mxu0 0
      %2528 = vmatpush1.bf16.msra.mxu0 %v2423
      %2529 = vmatprep.subr.bf16.mxu0 0
      %2530 = vmatpush1.bf16.msra.mxu0 %v2424
      %2531 = vmatprep.subr.bf16.mxu0 0
      %2532 = vmatpush1.bf16.msra.mxu0 %v2425
      %2533 = vmatprep.subr.bf16.mxu0 0
      %2534 = vmatpush1.bf16.msra.mxu0 %v2426
      %2535 = vmatprep.subr.bf16.mxu0 0
      %2536 = vmatpush1.bf16.msra.mxu0 %v2427
      %2537 = vmatprep.subr.bf16.mxu0 0
      %2538 = vmatpush1.bf16.msra.mxu0 %v2428
      %2539 = vmatprep.subr.bf16.mxu0 0
      %2540 = vmatpush1.bf16.msra.mxu0 %v2429
      %2541 = vmatprep.subr.bf16.mxu0 0
      %2542 = vmatpush1.bf16.msra.mxu0 %v2430
      %2543 = vmatprep.subr.bf16.mxu0 0
      %2544 = vmatpush1.bf16.msra.mxu0 %v2431
      %2545 = vmatprep.subr.bf16.mxu0 0
      %2546 = vmatpush1.bf16.msra.mxu0 %v2432
      %2547 = vmatprep.subr.bf16.mxu0 0
      %2548 = vmatpush1.bf16.msra.mxu0 %v2433
      %2549 = vmatprep.subr.bf16.mxu0 0
      %2550 = vmatpush1.bf16.msra.mxu0 %v2434
      %2551 = vmatprep.subr.bf16.mxu0 0
      %2552 = vmatpush1.bf16.msra.mxu0 %v2435
      %2553 = vmatprep.subr.bf16.mxu0 0
      %2554 = vmatpush1.bf16.msra.mxu0 %v2436
      %2555 = vmatprep.subr.bf16.mxu0 0
      %2556 = vmatpush1.bf16.msra.mxu0 %v2437
      %2557 = vmatprep.subr.bf16.mxu0 0
      %2558 = vmatpush1.bf16.msra.mxu0 %v2438
      %2559 = vmatprep.mubr.bf16.mxu0 %v2206
      %2560 = vmatmul.mubr.bf16.gmra.mrb[0].mxu0 %v2205
      %v2561 = vpop.f32.mrb[0].mxu0
      %v2562 = vadd.f32 %v2506, %v2561
      %v2563 = vpop.f32.mrb[0].mxu0
      %v2564 = vpop.f32.mrb[0].mxu0
      %v2565 = vadd.f32 %v2509, %v2564
      %v2566 = vpop.f32.mrb[0].mxu0
      %2567 = vmatprep.mubr.bf16.mxu0 %v2210
      %2568 = vmatmul.mubr.bf16.gmra.mrb[0].mxu0 %v2209
      %v2569 = vpop.f32.mrb[0].mxu0
      %v2570 = vadd.f32 %v2514, %v2569
      %v2571 = vpop.f32.mrb[0].mxu0
      %v2572 = vpop.f32.mrb[0].mxu0
      %v2573 = vadd.f32 %v2517, %v2572
      %v2574 = vpop.f32.mrb[0].mxu0
      %2575 = vmatprep.mubr.bf16.mxu0 %v2214
      %2576 = vmatmul.mubr.bf16.gmra.mrb[0].mxu0 %v2213
      %v2577 = vpop.f32.mrb[0].mxu0
      %v2578 = vadd.f32 %v2522, %v2577
      %v2579 = vpop.f32.mrb[0].mxu0
      %v2580 = vpop.f32.mrb[0].mxu0
      %v2581 = vpop.f32.mrb[0].mxu0
      %2582 = vdwg.mxu0
      %v2583 = vadd.f32 %v2005, %v2562
      %v2584 = vadd.f32 %v2005, %v2565
      %v2585 = vadd.f32 %v2005, %v2570
      %v2586 = vadd.f32 %v2005, %v2573
      %v2587 = vadd.f32 %v2005, %v2578
      %s2588 = scalar_lea.vmem %s870, 32
      %v2589 = vld [vmem:[%s2588] sm:$0xff]
      %v2590 = vld [vmem:[%s2588 + $0x8] sm:$0xff]
      %v2591 = vld [vmem:[%s2588 + $0x10] sm:$0xff]
      %v2592 = vld [vmem:[%s2588 + $0x18] sm:$0xff]
      %s2593 = scalar_lea.vmem %s874, 4
      %v2594 = vld [vmem:[%s2593] sm:$0xf]
      %v2596 = vlaneseq
      %v2597 = vshrl.u32 %v2596, 7
      %v2598 = vsub.s32 0, %v2597
      %v2599 = vrot.slane %v2594, %v2598
      %v2600 = vlaneseq
      %v2601 = vshrl.u32 %v2600, 7
      %v2602 = vsub.s32 1, %v2601
      %v2603 = vrot.slane %v2594, %v2602
      %v2604 = vlaneseq
      %v2605 = vshrl.u32 %v2604, 7
      %v2606 = vsub.s32 2, %v2605
      %v2607 = vrot.slane %v2594, %v2606
      %v2608 = vlaneseq
      %v2609 = vshrl.u32 %v2608, 7
      %v2610 = vsub.s32 3, %v2609
      %v2611 = vrot.slane %v2594, %v2610
      %v2620 = vunpack.c.l.b16 %v2589
      %v2621 = vunpack.c.h.b16 %v2589
      %v2622 = vunpack.c.l.b16 %v2590
      %v2623 = vunpack.c.h.b16 %v2590
      %v2624 = vunpack.c.l.b16 %v2591
      %v2625 = vunpack.c.h.b16 %v2591
      %v2626 = vunpack.c.l.b16 %v2592
      %v2627 = vunpack.c.h.b16 %v2592
      %v2628 = vpack.c.b16 %v2624, %v2620
      %v2629 = vpack.c.b16 %v2625, %v2621
      %v2630 = vpack.c.b16 %v2626, %v2622
      %v2631 = vpack.c.b16 %v2627, %v2623
      %2636 = vmatprep.subr.bf16.mxu0 %v2629
      %2637 = vmatpush1.bf16.msra.mxu0 %v2628
      %2638 = vmatprep.subr.bf16.mxu0 0
      %2639 = vmatpush1.bf16.msra.mxu0 0
      %2640 = vmatprep.subr.bf16.mxu0 0
      %2641 = vmatpush1.bf16.msra.mxu0 0
      %2642 = vmatprep.subr.bf16.mxu0 0
      %2643 = vmatpush1.bf16.msra.mxu0 0
      %2644 = vmatprep.subr.bf16.mxu0 0
      %2645 = vmatpush1.bf16.msra.mxu0 0
      %2646 = vmatprep.subr.bf16.mxu0 0
      %2647 = vmatpush1.bf16.msra.mxu0 0
      %2648 = vmatprep.subr.bf16.mxu0 0
      %2649 = vmatpush1.bf16.msra.mxu0 0
      %2650 = vmatprep.subr.bf16.mxu0 0
      %2651 = vmatpush1.bf16.msra.mxu0 0
      %2652 = vmatprep.subr.bf16.mxu0 0
      %2653 = vmatpush1.bf16.msra.mxu0 0
      %2654 = vmatprep.subr.bf16.mxu0 0
      %2655 = vmatpush1.bf16.msra.mxu0 0
      %2656 = vmatprep.subr.bf16.mxu0 0
      %2657 = vmatpush1.bf16.msra.mxu0 0
      %2658 = vmatprep.subr.bf16.mxu0 0
      %2659 = vmatpush1.bf16.msra.mxu0 0
      %2660 = vmatprep.subr.bf16.mxu0 0
      %2661 = vmatpush1.bf16.msra.mxu0 0
      %2662 = vmatprep.subr.bf16.mxu0 0
      %2663 = vmatpush1.bf16.msra.mxu0 0
      %2664 = vmatprep.subr.bf16.mxu0 0
      %2665 = vmatpush1.bf16.msra.mxu0 0
      %2666 = vmatprep.subr.bf16.mxu0 0
      %2667 = vmatpush1.bf16.msra.mxu0 0
      %2668 = vmatprep.mubr.bf16.mxu0 0
      %2669 = vmatmul.mubr.bf16.gmra.mrb[0].mxu0 %v2053
      %v2670 = vpop.f32.mrb[0].mxu0
      %v2671 = vadd.f32 %v2599, %v2670
      %v2672 = vpop.f32.mrb[0].mxu0
      %v2673 = vadd.f32 %v2603, %v2672
      %v2674 = vpop.f32.mrb[0].mxu0
      %v2675 = vadd.f32 %v2599, %v2674
      %v2676 = vpop.f32.mrb[0].mxu0
      %v2677 = vadd.f32 %v2603, %v2676
      %2678 = vmatprep.mubr.bf16.mxu0 0
      %2679 = vmatmul.mubr.bf16.gmra.mrb[0].mxu0 %v2056
      %v2680 = vpop.f32.mrb[0].mxu0
      %v2681 = vadd.f32 %v2599, %v2680
      %v2682 = vpop.f32.mrb[0].mxu0
      %v2683 = vadd.f32 %v2603, %v2682
      %v2684 = vpop.f32.mrb[0].mxu0
      %v2685 = vadd.f32 %v2599, %v2684
      %v2686 = vpop.f32.mrb[0].mxu0
      %v2687 = vadd.f32 %v2603, %v2686
      %2688 = vmatprep.mubr.bf16.mxu0 0
      %2689 = vmatmul.mubr.bf16.gmra.mrb[0].mxu0 %v2059
      %v2690 = vpop.f32.mrb[0].mxu0
      %v2691 = vadd.f32 %v2599, %v2690
      %v2692 = vpop.f32.mrb[0].mxu0
      %v2693 = vadd.f32 %v2603, %v2692
      %v2694 = vpop.f32.mrb[0].mxu0
      %v2695 = vpop.f32.mrb[0].mxu0
      %2696 = vdwg.mxu0
      %2697 = vmatprep.subr.bf16.mxu0 %v2631
      %2698 = vmatpush1.bf16.msra.mxu0 %v2630
      %2699 = vmatprep.subr.bf16.mxu0 0
      %2700 = vmatpush1.bf16.msra.mxu0 0
      %2701 = vmatprep.subr.bf16.mxu0 0
      %2702 = vmatpush1.bf16.msra.mxu0 0
      %2703 = vmatprep.subr.bf16.mxu0 0
      %2704 = vmatpush1.bf16.msra.mxu0 0
      %2705 = vmatprep.subr.bf16.mxu0 0
      %2706 = vmatpush1.bf16.msra.mxu0 0
      %2707 = vmatprep.subr.bf16.mxu0 0
      %2708 = vmatpush1.bf16.msra.mxu0 0
      %2709 = vmatprep.subr.bf16.mxu0 0
      %2710 = vmatpush1.bf16.msra.mxu0 0
      %2711 = vmatprep.subr.bf16.mxu0 0
      %2712 = vmatpush1.bf16.msra.mxu0 0
      %2713 = vmatprep.subr.bf16.mxu0 0
      %2714 = vmatpush1.bf16.msra.mxu0 0
      %2715 = vmatprep.subr.bf16.mxu0 0
      %2716 = vmatpush1.bf16.msra.mxu0 0
      %2717 = vmatprep.subr.bf16.mxu0 0
      %2718 = vmatpush1.bf16.msra.mxu0 0
      %2719 = vmatprep.subr.bf16.mxu0 0
      %2720 = vmatpush1.bf16.msra.mxu0 0
      %2721 = vmatprep.subr.bf16.mxu0 0
      %2722 = vmatpush1.bf16.msra.mxu0 0
      %2723 = vmatprep.subr.bf16.mxu0 0
      %2724 = vmatpush1.bf16.msra.mxu0 0
      %2725 = vmatprep.subr.bf16.mxu0 0
      %2726 = vmatpush1.bf16.msra.mxu0 0
      %2727 = vmatprep.subr.bf16.mxu0 0
      %2728 = vmatpush1.bf16.msra.mxu0 0
      %2729 = vmatprep.mubr.bf16.mxu0 0
      %2730 = vmatmul.mubr.bf16.gmra.mrb[0].mxu0 %v2053
      %v2731 = vpop.f32.mrb[0].mxu0
      %v2732 = vadd.f32 %v2607, %v2731
      %v2733 = vpop.f32.mrb[0].mxu0
      %v2734 = vadd.f32 %v2611, %v2733
      %v2735 = vpop.f32.mrb[0].mxu0
      %v2736 = vadd.f32 %v2607, %v2735
      %v2737 = vpop.f32.mrb[0].mxu0
      %v2738 = vadd.f32 %v2611, %v2737
      %2739 = vmatprep.mubr.bf16.mxu0 0
      %2740 = vmatmul.mubr.bf16.gmra.mrb[0].mxu0 %v2056
      %v2741 = vpop.f32.mrb[0].mxu0
      %v2742 = vadd.f32 %v2607, %v2741
      %v2743 = vpop.f32.mrb[0].mxu0
      %v2744 = vadd.f32 %v2611, %v2743
      %v2745 = vpop.f32.mrb[0].mxu0
      %v2746 = vadd.f32 %v2607, %v2745
      %v2747 = vpop.f32.mrb[0].mxu0
      %v2748 = vadd.f32 %v2611, %v2747
      %2749 = vmatprep.mubr.bf16.mxu0 0
      %2750 = vmatmul.mubr.bf16.gmra.mrb[0].mxu0 %v2059
      %v2751 = vpop.f32.mrb[0].mxu0
      %v2752 = vadd.f32 %v2607, %v2751
      %v2753 = vpop.f32.mrb[0].mxu0
      %v2754 = vadd.f32 %v2611, %v2753
      %v2755 = vpop.f32.mrb[0].mxu0
      %v2756 = vpop.f32.mrb[0].mxu0
      %2757 = vdwg.mxu0
      %v2758 = vmax.f32 %v2671, 0.0
      %v2759 = vmax.f32 %v2673, 0.0
      %v2760 = vmax.f32 %v2732, 0.0
      %v2761 = vmax.f32 %v2734, 0.0
      %v2762 = vmax.f32 %v2675, 0.0
      %v2763 = vmax.f32 %v2677, 0.0
      %v2764 = vmax.f32 %v2736, 0.0
      %v2765 = vmax.f32 %v2738, 0.0
      %v2766 = vmax.f32 %v2681, 0.0
      %v2767 = vmax.f32 %v2683, 0.0
      %v2768 = vmax.f32 %v2742, 0.0
      %v2769 = vmax.f32 %v2744, 0.0
      %v2770 = vmax.f32 %v2685, 0.0
      %v2771 = vmax.f32 %v2687, 0.0
      %v2772 = vmax.f32 %v2746, 0.0
      %v2773 = vmax.f32 %v2748, 0.0
      %v2774 = vmax.f32 %v2691, 0.0
      %v2775 = vmax.f32 %v2693, 0.0
      %v2776 = vmax.f32 %v2752, 0.0
      %v2777 = vmax.f32 %v2754, 0.0
      %v2778 = vpack.c.bf16 %v2762, %v2758
      %v2779 = vpack.c.bf16 %v2763, %v2759
      %v2780 = vpack.c.bf16 %v2764, %v2760
      %v2781 = vpack.c.bf16 %v2765, %v2761
      %v2782 = vpack.c.bf16 %v2770, %v2766
      %v2783 = vpack.c.bf16 %v2771, %v2767
      %v2784 = vpack.c.bf16 %v2772, %v2768
      %v2785 = vpack.c.bf16 %v2773, %v2769
      %v2786 = vpack.c.bf16 %v2774, %v2774
      %v2787 = vpack.c.bf16 %v2775, %v2775
      %v2788 = vpack.c.bf16 %v2776, %v2776
      %v2789 = vpack.c.bf16 %v2777, %v2777
      %s2790 = scalar_lea.vmem %s879, 256
      %v2791 = vld [vmem:[%s2790] sm:$0xf]
      %v2792 = vld [vmem:[%s2790 + $0x4] sm:$0xf]
      %v2793 = vld [vmem:[%s2790 + $0x8] sm:$0xf]
      %v2794 = vld [vmem:[%s2790 + $0xc] sm:$0xf]
      %v2795 = vld [vmem:[%s2790 + $0x10] sm:$0xf]
      %v2796 = vld [vmem:[%s2790 + $0x14] sm:$0xf]
      %v2797 = vld [vmem:[%s2790 + $0x18] sm:$0xf]
      %v2798 = vld [vmem:[%s2790 + $0x1c] sm:$0xf]
      %v2799 = vld [vmem:[%s2790 + $0x20] sm:$0xf]
      %v2800 = vld [vmem:[%s2790 + $0x24] sm:$0xf]
      %v2801 = vld [vmem:[%s2790 + $0x28] sm:$0xf]
      %v2802 = vld [vmem:[%s2790 + $0x2c] sm:$0xf]
      %v2803 = vld [vmem:[%s2790 + $0x30] sm:$0xf]
      %v2804 = vld [vmem:[%s2790 + $0x34] sm:$0xf]
      %v2805 = vld [vmem:[%s2790 + $0x38] sm:$0xf]
      %v2806 = vld [vmem:[%s2790 + $0x3c] sm:$0xf]
      %v2807 = vld [vmem:[%s2790 + $0x40] sm:$0xf]
      %v2808 = vld [vmem:[%s2790 + $0x44] sm:$0xf]
      %v2809 = vld [vmem:[%s2790 + $0x48] sm:$0xf]
      %v2810 = vld [vmem:[%s2790 + $0x4c] sm:$0xf]
      %v2811 = vld [vmem:[%s2790 + $0x50] sm:$0xf]
      %v2812 = vld [vmem:[%s2790 + $0x54] sm:$0xf]
      %v2813 = vld [vmem:[%s2790 + $0x58] sm:$0xf]
      %v2814 = vld [vmem:[%s2790 + $0x5c] sm:$0xf]
      %v2815 = vld [vmem:[%s2790 + $0x60] sm:$0xf]
      %v2816 = vld [vmem:[%s2790 + $0x64] sm:$0xf]
      %v2817 = vld [vmem:[%s2790 + $0x68] sm:$0xf]
      %v2818 = vld [vmem:[%s2790 + $0x6c] sm:$0xf]
      %v2819 = vld [vmem:[%s2790 + $0x70] sm:$0xf]
      %v2820 = vld [vmem:[%s2790 + $0x74] sm:$0xf]
      %v2821 = vld [vmem:[%s2790 + $0x78] sm:$0xf]
      %v2822 = vld [vmem:[%s2790 + $0x7c] sm:$0xf]
      %v2823 = vld [vmem:[%s2790 + $0x80] sm:$0xf]
      %v2824 = vld [vmem:[%s2790 + $0x84] sm:$0xf]
      %v2825 = vld [vmem:[%s2790 + $0x88] sm:$0xf]
      %v2826 = vld [vmem:[%s2790 + $0x8c] sm:$0xf]
      %v2827 = vld [vmem:[%s2790 + $0x90] sm:$0xf]
      %v2828 = vld [vmem:[%s2790 + $0x94] sm:$0xf]
      %v2829 = vld [vmem:[%s2790 + $0x98] sm:$0xf]
      %v2830 = vld [vmem:[%s2790 + $0x9c] sm:$0xf]
      %v2831 = vld [vmem:[%s2790 + $0xa0] sm:$0xf]
      %v2832 = vld [vmem:[%s2790 + $0xa4] sm:$0xf]
      %v2833 = vld [vmem:[%s2790 + $0xa8] sm:$0xf]
      %v2834 = vld [vmem:[%s2790 + $0xac] sm:$0xf]
      %v2835 = vld [vmem:[%s2790 + $0xb0] sm:$0xf]
      %v2836 = vld [vmem:[%s2790 + $0xb4] sm:$0xf]
      %v2837 = vld [vmem:[%s2790 + $0xb8] sm:$0xf]
      %v2838 = vld [vmem:[%s2790 + $0xbc] sm:$0xf]
      %v2839 = vld [vmem:[%s2790 + $0xc0] sm:$0xf]
      %v2840 = vld [vmem:[%s2790 + $0xc4] sm:$0xf]
      %v2841 = vld [vmem:[%s2790 + $0xc8] sm:$0xf]
      %v2842 = vld [vmem:[%s2790 + $0xcc] sm:$0xf]
      %v2843 = vld [vmem:[%s2790 + $0xd0] sm:$0xf]
      %v2844 = vld [vmem:[%s2790 + $0xd4] sm:$0xf]
      %v2845 = vld [vmem:[%s2790 + $0xd8] sm:$0xf]
      %v2846 = vld [vmem:[%s2790 + $0xdc] sm:$0xf]
      %v2847 = vld [vmem:[%s2790 + $0xe0] sm:$0xf]
      %v2848 = vld [vmem:[%s2790 + $0xe4] sm:$0xf]
      %v2849 = vld [vmem:[%s2790 + $0xe8] sm:$0xf]
      %v2850 = vld [vmem:[%s2790 + $0xec] sm:$0xf]
      %v2851 = vld [vmem:[%s2790 + $0xf0] sm:$0xf]
      %v2852 = vld [vmem:[%s2790 + $0xf4] sm:$0xf]
      %v2853 = vld [vmem:[%s2790 + $0xf8] sm:$0xf]
      %v2854 = vld [vmem:[%s2790 + $0xfc] sm:$0xf]
      %v2919 = vunpack.c.l.b16 %v2791
      %v2920 = vunpack.c.l.b16 %v2792
      %v2921 = vunpack.c.l.b16 %v2793
      %v2922 = vunpack.c.l.b16 %v2794
      %v2923 = vunpack.c.l.b16 %v2795
      %v2924 = vunpack.c.l.b16 %v2796
      %v2925 = vunpack.c.l.b16 %v2797
      %v2926 = vunpack.c.l.b16 %v2798
      %v2927 = vunpack.c.l.b16 %v2799
      %v2928 = vunpack.c.l.b16 %v2800
      %v2929 = vunpack.c.l.b16 %v2801
      %v2930 = vunpack.c.l.b16 %v2802
      %v2931 = vunpack.c.l.b16 %v2803
      %v2932 = vunpack.c.l.b16 %v2804
      %v2933 = vunpack.c.l.b16 %v2805
      %v2934 = vunpack.c.l.b16 %v2806
      %v2935 = vunpack.c.l.b16 %v2807
      %v2936 = vunpack.c.l.b16 %v2808
      %v2937 = vunpack.c.l.b16 %v2809
      %v2938 = vunpack.c.l.b16 %v2810
      %v2939 = vunpack.c.l.b16 %v2811
      %v2940 = vunpack.c.l.b16 %v2812
      %v2941 = vunpack.c.l.b16 %v2813
      %v2942 = vunpack.c.l.b16 %v2814
      %v2943 = vunpack.c.l.b16 %v2815
      %v2944 = vunpack.c.l.b16 %v2816
      %v2945 = vunpack.c.l.b16 %v2817
      %v2946 = vunpack.c.l.b16 %v2818
      %v2947 = vunpack.c.l.b16 %v2819
      %v2948 = vunpack.c.l.b16 %v2820
      %v2949 = vunpack.c.l.b16 %v2821
      %v2950 = vunpack.c.l.b16 %v2822
      %v2951 = vunpack.c.l.b16 %v2823
      %v2952 = vunpack.c.l.b16 %v2824
      %v2953 = vunpack.c.l.b16 %v2825
      %v2954 = vunpack.c.l.b16 %v2826
      %v2955 = vunpack.c.l.b16 %v2827
      %v2956 = vunpack.c.l.b16 %v2828
      %v2957 = vunpack.c.l.b16 %v2829
      %v2958 = vunpack.c.l.b16 %v2830
      %v2959 = vunpack.c.l.b16 %v2831
      %v2960 = vunpack.c.l.b16 %v2832
      %v2961 = vunpack.c.l.b16 %v2833
      %v2962 = vunpack.c.l.b16 %v2834
      %v2963 = vunpack.c.l.b16 %v2835
      %v2964 = vunpack.c.l.b16 %v2836
      %v2965 = vunpack.c.l.b16 %v2837
      %v2966 = vunpack.c.l.b16 %v2838
      %v2967 = vunpack.c.l.b16 %v2839
      %v2968 = vunpack.c.l.b16 %v2840
      %v2969 = vunpack.c.l.b16 %v2841
      %v2970 = vunpack.c.l.b16 %v2842
      %v2971 = vunpack.c.l.b16 %v2843
      %v2972 = vunpack.c.l.b16 %v2844
      %v2973 = vunpack.c.l.b16 %v2845
      %v2974 = vunpack.c.l.b16 %v2846
      %v2975 = vunpack.c.l.b16 %v2847
      %v2976 = vunpack.c.l.b16 %v2848
      %v2977 = vunpack.c.l.b16 %v2849
      %v2978 = vunpack.c.l.b16 %v2850
      %v2979 = vunpack.c.l.b16 %v2851
      %v2980 = vunpack.c.l.b16 %v2852
      %v2981 = vunpack.c.l.b16 %v2853
      %v2982 = vunpack.c.l.b16 %v2854
      %v2983 = vpack.c.b16 %v2920, %v2919
      %v2984 = vpack.c.b16 %v2922, %v2921
      %v2985 = vpack.c.b16 %v2924, %v2923
      %v2986 = vpack.c.b16 %v2926, %v2925
      %v2987 = vpack.c.b16 %v2928, %v2927
      %v2988 = vpack.c.b16 %v2930, %v2929
      %v2989 = vpack.c.b16 %v2932, %v2931
      %v2990 = vpack.c.b16 %v2934, %v2933
      %v2991 = vpack.c.b16 %v2936, %v2935
      %v2992 = vpack.c.b16 %v2938, %v2937
      %v2993 = vpack.c.b16 %v2940, %v2939
      %v2994 = vpack.c.b16 %v2942, %v2941
      %v2995 = vpack.c.b16 %v2944, %v2943
      %v2996 = vpack.c.b16 %v2946, %v2945
      %v2997 = vpack.c.b16 %v2948, %v2947
      %v2998 = vpack.c.b16 %v2950, %v2949
      %v2999 = vpack.c.b16 %v2952, %v2951
      %v3000 = vpack.c.b16 %v2954, %v2953
      %v3001 = vpack.c.b16 %v2956, %v2955
      %v3002 = vpack.c.b16 %v2958, %v2957
      %v3003 = vpack.c.b16 %v2960, %v2959
      %v3004 = vpack.c.b16 %v2962, %v2961
      %v3005 = vpack.c.b16 %v2964, %v2963
      %v3006 = vpack.c.b16 %v2966, %v2965
      %v3007 = vpack.c.b16 %v2968, %v2967
      %v3008 = vpack.c.b16 %v2970, %v2969
      %v3009 = vpack.c.b16 %v2972, %v2971
      %v3010 = vpack.c.b16 %v2974, %v2973
      %v3011 = vpack.c.b16 %v2976, %v2975
      %v3012 = vpack.c.b16 %v2978, %v2977
      %v3013 = vpack.c.b16 %v2980, %v2979
      %v3014 = vpack.c.b16 %v2982, %v2981
      %3047 = vmatprep.subr.bf16.mxu0 0
      %3048 = vmatpush1.bf16.msra.mxu0 %v2983
      %3049 = vmatprep.subr.bf16.mxu0 0
      %3050 = vmatpush1.bf16.msra.mxu0 %v2984
      %3051 = vmatprep.subr.bf16.mxu0 0
      %3052 = vmatpush1.bf16.msra.mxu0 %v2985
      %3053 = vmatprep.subr.bf16.mxu0 0
      %3054 = vmatpush1.bf16.msra.mxu0 %v2986
      %3055 = vmatprep.subr.bf16.mxu0 0
      %3056 = vmatpush1.bf16.msra.mxu0 %v2987
      %3057 = vmatprep.subr.bf16.mxu0 0
      %3058 = vmatpush1.bf16.msra.mxu0 %v2988
      %3059 = vmatprep.subr.bf16.mxu0 0
      %3060 = vmatpush1.bf16.msra.mxu0 %v2989
      %3061 = vmatprep.subr.bf16.mxu0 0
      %3062 = vmatpush1.bf16.msra.mxu0 %v2990
      %3063 = vmatprep.subr.bf16.mxu0 0
      %3064 = vmatpush1.bf16.msra.mxu0 %v2991
      %3065 = vmatprep.subr.bf16.mxu0 0
      %3066 = vmatpush1.bf16.msra.mxu0 %v2992
      %3067 = vmatprep.subr.bf16.mxu0 0
      %3068 = vmatpush1.bf16.msra.mxu0 %v2993
      %3069 = vmatprep.subr.bf16.mxu0 0
      %3070 = vmatpush1.bf16.msra.mxu0 %v2994
      %3071 = vmatprep.subr.bf16.mxu0 0
      %3072 = vmatpush1.bf16.msra.mxu0 %v2995
      %3073 = vmatprep.subr.bf16.mxu0 0
      %3074 = vmatpush1.bf16.msra.mxu0 %v2996
      %3075 = vmatprep.subr.bf16.mxu0 0
      %3076 = vmatpush1.bf16.msra.mxu0 %v2997
      %3077 = vmatprep.subr.bf16.mxu0 0
      %3078 = vmatpush1.bf16.msra.mxu0 %v2998
      %3079 = vmatprep.mubr.bf16.mxu0 %v2779
      %3080 = vmatmul.mubr.bf16.gmra.mrb[0].mxu0 %v2778
      %v3081 = vpop.f32.mrb[0].mxu0
      %v3082 = vadd.f32 0.0, %v3081
      %v3083 = vpop.f32.mrb[0].mxu0
      %v3084 = vpop.f32.mrb[0].mxu0
      %v3085 = vadd.f32 0.0, %v3084
      %v3086 = vpop.f32.mrb[0].mxu0
      %3087 = vmatprep.mubr.bf16.mxu0 %v2783
      %3088 = vmatmul.mubr.bf16.gmra.mrb[0].mxu0 %v2782
      %v3089 = vpop.f32.mrb[0].mxu0
      %v3090 = vadd.f32 0.0, %v3089
      %v3091 = vpop.f32.mrb[0].mxu0
      %v3092 = vpop.f32.mrb[0].mxu0
      %v3093 = vadd.f32 0.0, %v3092
      %v3094 = vpop.f32.mrb[0].mxu0
      %3095 = vmatprep.mubr.bf16.mxu0 %v2787
      %3096 = vmatmul.mubr.bf16.gmra.mrb[0].mxu0 %v2786
      %v3097 = vpop.f32.mrb[0].mxu0
      %v3098 = vadd.f32 0.0, %v3097
      %v3099 = vpop.f32.mrb[0].mxu0
      %v3100 = vpop.f32.mrb[0].mxu0
      %v3101 = vpop.f32.mrb[0].mxu0
      %3102 = vdwg.mxu0
      %3103 = vmatprep.subr.bf16.mxu0 0
      %3104 = vmatpush1.bf16.msra.mxu0 %v2999
      %3105 = vmatprep.subr.bf16.mxu0 0
      %3106 = vmatpush1.bf16.msra.mxu0 %v3000
      %3107 = vmatprep.subr.bf16.mxu0 0
      %3108 = vmatpush1.bf16.msra.mxu0 %v3001
      %3109 = vmatprep.subr.bf16.mxu0 0
      %3110 = vmatpush1.bf16.msra.mxu0 %v3002
      %3111 = vmatprep.subr.bf16.mxu0 0
      %3112 = vmatpush1.bf16.msra.mxu0 %v3003
      %3113 = vmatprep.subr.bf16.mxu0 0
      %3114 = vmatpush1.bf16.msra.mxu0 %v3004
      %3115 = vmatprep.subr.bf16.mxu0 0
      %3116 = vmatpush1.bf16.msra.mxu0 %v3005
      %3117 = vmatprep.subr.bf16.mxu0 0
      %3118 = vmatpush1.bf16.msra.mxu0 %v3006
      %3119 = vmatprep.subr.bf16.mxu0 0
      %3120 = vmatpush1.bf16.msra.mxu0 %v3007
      %3121 = vmatprep.subr.bf16.mxu0 0
      %3122 = vmatpush1.bf16.msra.mxu0 %v3008
      %3123 = vmatprep.subr.bf16.mxu0 0
      %3124 = vmatpush1.bf16.msra.mxu0 %v3009
      %3125 = vmatprep.subr.bf16.mxu0 0
      %3126 = vmatpush1.bf16.msra.mxu0 %v3010
      %3127 = vmatprep.subr.bf16.mxu0 0
      %3128 = vmatpush1.bf16.msra.mxu0 %v3011
      %3129 = vmatprep.subr.bf16.mxu0 0
      %3130 = vmatpush1.bf16.msra.mxu0 %v3012
      %3131 = vmatprep.subr.bf16.mxu0 0
      %3132 = vmatpush1.bf16.msra.mxu0 %v3013
      %3133 = vmatprep.subr.bf16.mxu0 0
      %3134 = vmatpush1.bf16.msra.mxu0 %v3014
      %3135 = vmatprep.mubr.bf16.mxu0 %v2781
      %3136 = vmatmul.mubr.bf16.gmra.mrb[0].mxu0 %v2780
      %v3137 = vpop.f32.mrb[0].mxu0
      %v3138 = vadd.f32 %v3082, %v3137
      %v3139 = vpop.f32.mrb[0].mxu0
      %v3140 = vpop.f32.mrb[0].mxu0
      %v3141 = vadd.f32 %v3085, %v3140
      %v3142 = vpop.f32.mrb[0].mxu0
      %3143 = vmatprep.mubr.bf16.mxu0 %v2785
      %3144 = vmatmul.mubr.bf16.gmra.mrb[0].mxu0 %v2784
      %v3145 = vpop.f32.mrb[0].mxu0
      %v3146 = vadd.f32 %v3090, %v3145
      %v3147 = vpop.f32.mrb[0].mxu0
      %v3148 = vpop.f32.mrb[0].mxu0
      %v3149 = vadd.f32 %v3093, %v3148
      %v3150 = vpop.f32.mrb[0].mxu0
      %3151 = vmatprep.mubr.bf16.mxu0 %v2789
      %3152 = vmatmul.mubr.bf16.gmra.mrb[0].mxu0 %v2788
      %v3153 = vpop.f32.mrb[0].mxu0
      %v3154 = vadd.f32 %v3098, %v3153
      %v3155 = vpop.f32.mrb[0].mxu0
      %v3156 = vpop.f32.mrb[0].mxu0
      %v3157 = vpop.f32.mrb[0].mxu0
      %3158 = vdwg.mxu0
      %v3159 = vadd.f32 %v2583, %v3138
      %v3160 = vadd.f32 %v2584, %v3141
      %v3161 = vadd.f32 %v2585, %v3146
      %v3162 = vadd.f32 %v2586, %v3149
      %v3163 = vadd.f32 %v2587, %v3154
      %s3164 = scalar_lea.vmem %s870, 64
      %v3165 = vld [vmem:[%s3164] sm:$0xff]
      %v3166 = vld [vmem:[%s3164 + $0x8] sm:$0xff]
      %v3167 = vld [vmem:[%s3164 + $0x10] sm:$0xff]
      %v3168 = vld [vmem:[%s3164 + $0x18] sm:$0xff]
      %s3169 = scalar_lea.vmem %s874, 8
      %v3170 = vld [vmem:[%s3169] sm:$0xf]
      %v3172 = vlaneseq
      %v3173 = vshrl.u32 %v3172, 7
      %v3174 = vsub.s32 0, %v3173
      %v3175 = vrot.slane %v3170, %v3174
      %v3176 = vlaneseq
      %v3177 = vshrl.u32 %v3176, 7
      %v3178 = vsub.s32 1, %v3177
      %v3179 = vrot.slane %v3170, %v3178
      %v3180 = vlaneseq
      %v3181 = vshrl.u32 %v3180, 7
      %v3182 = vsub.s32 2, %v3181
      %v3183 = vrot.slane %v3170, %v3182
      %v3184 = vlaneseq
      %v3185 = vshrl.u32 %v3184, 7
      %v3186 = vsub.s32 3, %v3185
      %v3187 = vrot.slane %v3170, %v3186
      %v3196 = vunpack.c.l.b16 %v3165
      %v3197 = vunpack.c.h.b16 %v3165
      %v3198 = vunpack.c.l.b16 %v3166
      %v3199 = vunpack.c.h.b16 %v3166
      %v3200 = vunpack.c.l.b16 %v3167
      %v3201 = vunpack.c.h.b16 %v3167
      %v3202 = vunpack.c.l.b16 %v3168
      %v3203 = vunpack.c.h.b16 %v3168
      %v3204 = vpack.c.b16 %v3200, %v3196
      %v3205 = vpack.c.b16 %v3201, %v3197
      %v3206 = vpack.c.b16 %v3202, %v3198
      %v3207 = vpack.c.b16 %v3203, %v3199
      %3212 = vmatprep.subr.bf16.mxu0 %v3205
      %3213 = vmatpush1.bf16.msra.mxu0 %v3204
      %3214 = vmatprep.subr.bf16.mxu0 0
      %3215 = vmatpush1.bf16.msra.mxu0 0
      %3216 = vmatprep.subr.bf16.mxu0 0
      %3217 = vmatpush1.bf16.msra.mxu0 0
      %3218 = vmatprep.subr.bf16.mxu0 0
      %3219 = vmatpush1.bf16.msra.mxu0 0
      %3220 = vmatprep.subr.bf16.mxu0 0
      %3221 = vmatpush1.bf16.msra.mxu0 0
      %3222 = vmatprep.subr.bf16.mxu0 0
      %3223 = vmatpush1.bf16.msra.mxu0 0
      %3224 = vmatprep.subr.bf16.mxu0 0
      %3225 = vmatpush1.bf16.msra.mxu0 0
      %3226 = vmatprep.subr.bf16.mxu0 0
      %3227 = vmatpush1.bf16.msra.mxu0 0
      %3228 = vmatprep.subr.bf16.mxu0 0
      %3229 = vmatpush1.bf16.msra.mxu0 0
      %3230 = vmatprep.subr.bf16.mxu0 0
      %3231 = vmatpush1.bf16.msra.mxu0 0
      %3232 = vmatprep.subr.bf16.mxu0 0
      %3233 = vmatpush1.bf16.msra.mxu0 0
      %3234 = vmatprep.subr.bf16.mxu0 0
      %3235 = vmatpush1.bf16.msra.mxu0 0
      %3236 = vmatprep.subr.bf16.mxu0 0
      %3237 = vmatpush1.bf16.msra.mxu0 0
      %3238 = vmatprep.subr.bf16.mxu0 0
      %3239 = vmatpush1.bf16.msra.mxu0 0
      %3240 = vmatprep.subr.bf16.mxu0 0
      %3241 = vmatpush1.bf16.msra.mxu0 0
      %3242 = vmatprep.subr.bf16.mxu0 0
      %3243 = vmatpush1.bf16.msra.mxu0 0
      %3244 = vmatprep.mubr.bf16.mxu0 0
      %3245 = vmatmul.mubr.bf16.gmra.mrb[0].mxu0 %v2053
      %v3246 = vpop.f32.mrb[0].mxu0
      %v3247 = vadd.f32 %v3175, %v3246
      %v3248 = vpop.f32.mrb[0].mxu0
      %v3249 = vadd.f32 %v3179, %v3248
      %v3250 = vpop.f32.mrb[0].mxu0
      %v3251 = vadd.f32 %v3175, %v3250
      %v3252 = vpop.f32.mrb[0].mxu0
      %v3253 = vadd.f32 %v3179, %v3252
      %3254 = vmatprep.mubr.bf16.mxu0 0
      %3255 = vmatmul.mubr.bf16.gmra.mrb[0].mxu0 %v2056
      %v3256 = vpop.f32.mrb[0].mxu0
      %v3257 = vadd.f32 %v3175, %v3256
      %v3258 = vpop.f32.mrb[0].mxu0
      %v3259 = vadd.f32 %v3179, %v3258
      %v3260 = vpop.f32.mrb[0].mxu0
      %v3261 = vadd.f32 %v3175, %v3260
      %v3262 = vpop.f32.mrb[0].mxu0
      %v3263 = vadd.f32 %v3179, %v3262
      %3264 = vmatprep.mubr.bf16.mxu0 0
      %3265 = vmatmul.mubr.bf16.gmra.mrb[0].mxu0 %v2059
      %v3266 = vpop.f32.mrb[0].mxu0
      %v3267 = vadd.f32 %v3175, %v3266
      %v3268 = vpop.f32.mrb[0].mxu0
      %v3269 = vadd.f32 %v3179, %v3268
      %v3270 = vpop.f32.mrb[0].mxu0
      %v3271 = vpop.f32.mrb[0].mxu0
      %3272 = vdwg.mxu0
      %3273 = vmatprep.subr.bf16.mxu0 %v3207
      %3274 = vmatpush1.bf16.msra.mxu0 %v3206
      %3275 = vmatprep.subr.bf16.mxu0 0
      %3276 = vmatpush1.bf16.msra.mxu0 0
      %3277 = vmatprep.subr.bf16.mxu0 0
      %3278 = vmatpush1.bf16.msra.mxu0 0
      %3279 = vmatprep.subr.bf16.mxu0 0
      %3280 = vmatpush1.bf16.msra.mxu0 0
      %3281 = vmatprep.subr.bf16.mxu0 0
      %3282 = vmatpush1.bf16.msra.mxu0 0
      %3283 = vmatprep.subr.bf16.mxu0 0
      %3284 = vmatpush1.bf16.msra.mxu0 0
      %3285 = vmatprep.subr.bf16.mxu0 0
      %3286 = vmatpush1.bf16.msra.mxu0 0
      %3287 = vmatprep.subr.bf16.mxu0 0
      %3288 = vmatpush1.bf16.msra.mxu0 0
      %3289 = vmatprep.subr.bf16.mxu0 0
      %3290 = vmatpush1.bf16.msra.mxu0 0
      %3291 = vmatprep.subr.bf16.mxu0 0
      %3292 = vmatpush1.bf16.msra.mxu0 0
      %3293 = vmatprep.subr.bf16.mxu0 0
      %3294 = vmatpush1.bf16.msra.mxu0 0
      %3295 = vmatprep.subr.bf16.mxu0 0
      %3296 = vmatpush1.bf16.msra.mxu0 0
      %3297 = vmatprep.subr.bf16.mxu0 0
      %3298 = vmatpush1.bf16.msra.mxu0 0
      %3299 = vmatprep.subr.bf16.mxu0 0
      %3300 = vmatpush1.bf16.msra.mxu0 0
      %3301 = vmatprep.subr.bf16.mxu0 0
      %3302 = vmatpush1.bf16.msra.mxu0 0
      %3303 = vmatprep.subr.bf16.mxu0 0
      %3304 = vmatpush1.bf16.msra.mxu0 0
      %3305 = vmatprep.mubr.bf16.mxu0 0
      %3306 = vmatmul.mubr.bf16.gmra.mrb[0].mxu0 %v2053
      %v3307 = vpop.f32.mrb[0].mxu0
      %v3308 = vadd.f32 %v3183, %v3307
      %v3309 = vpop.f32.mrb[0].mxu0
      %v3310 = vadd.f32 %v3187, %v3309
      %v3311 = vpop.f32.mrb[0].mxu0
      %v3312 = vadd.f32 %v3183, %v3311
      %v3313 = vpop.f32.mrb[0].mxu0
      %v3314 = vadd.f32 %v3187, %v3313
      %3315 = vmatprep.mubr.bf16.mxu0 0
      %3316 = vmatmul.mubr.bf16.gmra.mrb[0].mxu0 %v2056
      %v3317 = vpop.f32.mrb[0].mxu0
      %v3318 = vadd.f32 %v3183, %v3317
      %v3319 = vpop.f32.mrb[0].mxu0
      %v3320 = vadd.f32 %v3187, %v3319
      %v3321 = vpop.f32.mrb[0].mxu0
      %v3322 = vadd.f32 %v3183, %v3321
      %v3323 = vpop.f32.mrb[0].mxu0
      %v3324 = vadd.f32 %v3187, %v3323
      %3325 = vmatprep.mubr.bf16.mxu0 0
      %3326 = vmatmul.mubr.bf16.gmra.mrb[0].mxu0 %v2059
      %v3327 = vpop.f32.mrb[0].mxu0
      %v3328 = vadd.f32 %v3183, %v3327
      %v3329 = vpop.f32.mrb[0].mxu0
      %v3330 = vadd.f32 %v3187, %v3329
      %v3331 = vpop.f32.mrb[0].mxu0
      %v3332 = vpop.f32.mrb[0].mxu0
      %3333 = vdwg.mxu0
      %v3334 = vmax.f32 %v3247, 0.0
      %v3335 = vmax.f32 %v3249, 0.0
      %v3336 = vmax.f32 %v3308, 0.0
      %v3337 = vmax.f32 %v3310, 0.0
      %v3338 = vmax.f32 %v3251, 0.0
      %v3339 = vmax.f32 %v3253, 0.0
      %v3340 = vmax.f32 %v3312, 0.0
      %v3341 = vmax.f32 %v3314, 0.0
      %v3342 = vmax.f32 %v3257, 0.0
      %v3343 = vmax.f32 %v3259, 0.0
      %v3344 = vmax.f32 %v3318, 0.0
      %v3345 = vmax.f32 %v3320, 0.0
      %v3346 = vmax.f32 %v3261, 0.0
      %v3347 = vmax.f32 %v3263, 0.0
      %v3348 = vmax.f32 %v3322, 0.0
      %v3349 = vmax.f32 %v3324, 0.0
      %v3350 = vmax.f32 %v3267, 0.0
      %v3351 = vmax.f32 %v3269, 0.0
      %v3352 = vmax.f32 %v3328, 0.0
      %v3353 = vmax.f32 %v3330, 0.0
      %v3354 = vpack.c.bf16 %v3338, %v3334
      %v3355 = vpack.c.bf16 %v3339, %v3335
      %v3356 = vpack.c.bf16 %v3340, %v3336
      %v3357 = vpack.c.bf16 %v3341, %v3337
      %v3358 = vpack.c.bf16 %v3346, %v3342
      %v3359 = vpack.c.bf16 %v3347, %v3343
      %v3360 = vpack.c.bf16 %v3348, %v3344
      %v3361 = vpack.c.bf16 %v3349, %v3345
      %v3362 = vpack.c.bf16 %v3350, %v3350
      %v3363 = vpack.c.bf16 %v3351, %v3351
      %v3364 = vpack.c.bf16 %v3352, %v3352
      %v3365 = vpack.c.bf16 %v3353, %v3353
      %s3366 = scalar_lea.vmem %s879, 512
      %v3367 = vld [vmem:[%s3366] sm:$0xf]
      %v3368 = vld [vmem:[%s3366 + $0x4] sm:$0xf]
      %v3369 = vld [vmem:[%s3366 + $0x8] sm:$0xf]
      %v3370 = vld [vmem:[%s3366 + $0xc] sm:$0xf]
      %v3371 = vld [vmem:[%s3366 + $0x10] sm:$0xf]
      %v3372 = vld [vmem:[%s3366 + $0x14] sm:$0xf]
      %v3373 = vld [vmem:[%s3366 + $0x18] sm:$0xf]
      %v3374 = vld [vmem:[%s3366 + $0x1c] sm:$0xf]
      %v3375 = vld [vmem:[%s3366 + $0x20] sm:$0xf]
      %v3376 = vld [vmem:[%s3366 + $0x24] sm:$0xf]
      %v3377 = vld [vmem:[%s3366 + $0x28] sm:$0xf]
      %v3378 = vld [vmem:[%s3366 + $0x2c] sm:$0xf]
      %v3379 = vld [vmem:[%s3366 + $0x30] sm:$0xf]
      %v3380 = vld [vmem:[%s3366 + $0x34] sm:$0xf]
      %v3381 = vld [vmem:[%s3366 + $0x38] sm:$0xf]
      %v3382 = vld [vmem:[%s3366 + $0x3c] sm:$0xf]
      %v3383 = vld [vmem:[%s3366 + $0x40] sm:$0xf]
      %v3384 = vld [vmem:[%s3366 + $0x44] sm:$0xf]
      %v3385 = vld [vmem:[%s3366 + $0x48] sm:$0xf]
      %v3386 = vld [vmem:[%s3366 + $0x4c] sm:$0xf]
      %v3387 = vld [vmem:[%s3366 + $0x50] sm:$0xf]
      %v3388 = vld [vmem:[%s3366 + $0x54] sm:$0xf]
      %v3389 = vld [vmem:[%s3366 + $0x58] sm:$0xf]
      %v3390 = vld [vmem:[%s3366 + $0x5c] sm:$0xf]
      %v3391 = vld [vmem:[%s3366 + $0x60] sm:$0xf]
      %v3392 = vld [vmem:[%s3366 + $0x64] sm:$0xf]
      %v3393 = vld [vmem:[%s3366 + $0x68] sm:$0xf]
      %v3394 = vld [vmem:[%s3366 + $0x6c] sm:$0xf]
      %v3395 = vld [vmem:[%s3366 + $0x70] sm:$0xf]
      %v3396 = vld [vmem:[%s3366 + $0x74] sm:$0xf]
      %v3397 = vld [vmem:[%s3366 + $0x78] sm:$0xf]
      %v3398 = vld [vmem:[%s3366 + $0x7c] sm:$0xf]
      %v3399 = vld [vmem:[%s3366 + $0x80] sm:$0xf]
      %v3400 = vld [vmem:[%s3366 + $0x84] sm:$0xf]
      %v3401 = vld [vmem:[%s3366 + $0x88] sm:$0xf]
      %v3402 = vld [vmem:[%s3366 + $0x8c] sm:$0xf]
      %v3403 = vld [vmem:[%s3366 + $0x90] sm:$0xf]
      %v3404 = vld [vmem:[%s3366 + $0x94] sm:$0xf]
      %v3405 = vld [vmem:[%s3366 + $0x98] sm:$0xf]
      %v3406 = vld [vmem:[%s3366 + $0x9c] sm:$0xf]
      %v3407 = vld [vmem:[%s3366 + $0xa0] sm:$0xf]
      %v3408 = vld [vmem:[%s3366 + $0xa4] sm:$0xf]
      %v3409 = vld [vmem:[%s3366 + $0xa8] sm:$0xf]
      %v3410 = vld [vmem:[%s3366 + $0xac] sm:$0xf]
      %v3411 = vld [vmem:[%s3366 + $0xb0] sm:$0xf]
      %v3412 = vld [vmem:[%s3366 + $0xb4] sm:$0xf]
      %v3413 = vld [vmem:[%s3366 + $0xb8] sm:$0xf]
      %v3414 = vld [vmem:[%s3366 + $0xbc] sm:$0xf]
      %v3415 = vld [vmem:[%s3366 + $0xc0] sm:$0xf]
      %v3416 = vld [vmem:[%s3366 + $0xc4] sm:$0xf]
      %v3417 = vld [vmem:[%s3366 + $0xc8] sm:$0xf]
      %v3418 = vld [vmem:[%s3366 + $0xcc] sm:$0xf]
      %v3419 = vld [vmem:[%s3366 + $0xd0] sm:$0xf]
      %v3420 = vld [vmem:[%s3366 + $0xd4] sm:$0xf]
      %v3421 = vld [vmem:[%s3366 + $0xd8] sm:$0xf]
      %v3422 = vld [vmem:[%s3366 + $0xdc] sm:$0xf]
      %v3423 = vld [vmem:[%s3366 + $0xe0] sm:$0xf]
      %v3424 = vld [vmem:[%s3366 + $0xe4] sm:$0xf]
      %v3425 = vld [vmem:[%s3366 + $0xe8] sm:$0xf]
      %v3426 = vld [vmem:[%s3366 + $0xec] sm:$0xf]
      %v3427 = vld [vmem:[%s3366 + $0xf0] sm:$0xf]
      %v3428 = vld [vmem:[%s3366 + $0xf4] sm:$0xf]
      %v3429 = vld [vmem:[%s3366 + $0xf8] sm:$0xf]
      %v3430 = vld [vmem:[%s3366 + $0xfc] sm:$0xf]
      %v3495 = vunpack.c.l.b16 %v3367
      %v3496 = vunpack.c.l.b16 %v3368
      %v3497 = vunpack.c.l.b16 %v3369
      %v3498 = vunpack.c.l.b16 %v3370
      %v3499 = vunpack.c.l.b16 %v3371
      %v3500 = vunpack.c.l.b16 %v3372
      %v3501 = vunpack.c.l.b16 %v3373
      %v3502 = vunpack.c.l.b16 %v3374
      %v3503 = vunpack.c.l.b16 %v3375
      %v3504 = vunpack.c.l.b16 %v3376
      %v3505 = vunpack.c.l.b16 %v3377
      %v3506 = vunpack.c.l.b16 %v3378
      %v3507 = vunpack.c.l.b16 %v3379
      %v3508 = vunpack.c.l.b16 %v3380
      %v3509 = vunpack.c.l.b16 %v3381
      %v3510 = vunpack.c.l.b16 %v3382
      %v3511 = vunpack.c.l.b16 %v3383
      %v3512 = vunpack.c.l.b16 %v3384
      %v3513 = vunpack.c.l.b16 %v3385
      %v3514 = vunpack.c.l.b16 %v3386
      %v3515 = vunpack.c.l.b16 %v3387
      %v3516 = vunpack.c.l.b16 %v3388
      %v3517 = vunpack.c.l.b16 %v3389
      %v3518 = vunpack.c.l.b16 %v3390
      %v3519 = vunpack.c.l.b16 %v3391
      %v3520 = vunpack.c.l.b16 %v3392
      %v3521 = vunpack.c.l.b16 %v3393
      %v3522 = vunpack.c.l.b16 %v3394
      %v3523 = vunpack.c.l.b16 %v3395
      %v3524 = vunpack.c.l.b16 %v3396
      %v3525 = vunpack.c.l.b16 %v3397
      %v3526 = vunpack.c.l.b16 %v3398
      %v3527 = vunpack.c.l.b16 %v3399
      %v3528 = vunpack.c.l.b16 %v3400
      %v3529 = vunpack.c.l.b16 %v3401
      %v3530 = vunpack.c.l.b16 %v3402
      %v3531 = vunpack.c.l.b16 %v3403
      %v3532 = vunpack.c.l.b16 %v3404
      %v3533 = vunpack.c.l.b16 %v3405
      %v3534 = vunpack.c.l.b16 %v3406
      %v3535 = vunpack.c.l.b16 %v3407
      %v3536 = vunpack.c.l.b16 %v3408
      %v3537 = vunpack.c.l.b16 %v3409
      %v3538 = vunpack.c.l.b16 %v3410
      %v3539 = vunpack.c.l.b16 %v3411
      %v3540 = vunpack.c.l.b16 %v3412
      %v3541 = vunpack.c.l.b16 %v3413
      %v3542 = vunpack.c.l.b16 %v3414
      %v3543 = vunpack.c.l.b16 %v3415
      %v3544 = vunpack.c.l.b16 %v3416
      %v3545 = vunpack.c.l.b16 %v3417
      %v3546 = vunpack.c.l.b16 %v3418
      %v3547 = vunpack.c.l.b16 %v3419
      %v3548 = vunpack.c.l.b16 %v3420
      %v3549 = vunpack.c.l.b16 %v3421
      %v3550 = vunpack.c.l.b16 %v3422
      %v3551 = vunpack.c.l.b16 %v3423
      %v3552 = vunpack.c.l.b16 %v3424
      %v3553 = vunpack.c.l.b16 %v3425
      %v3554 = vunpack.c.l.b16 %v3426
      %v3555 = vunpack.c.l.b16 %v3427
      %v3556 = vunpack.c.l.b16 %v3428
      %v3557 = vunpack.c.l.b16 %v3429
      %v3558 = vunpack.c.l.b16 %v3430
      %v3559 = vpack.c.b16 %v3496, %v3495
      %v3560 = vpack.c.b16 %v3498, %v3497
      %v3561 = vpack.c.b16 %v3500, %v3499
      %v3562 = vpack.c.b16 %v3502, %v3501
      %v3563 = vpack.c.b16 %v3504, %v3503
      %v3564 = vpack.c.b16 %v3506, %v3505
      %v3565 = vpack.c.b16 %v3508, %v3507
      %v3566 = vpack.c.b16 %v3510, %v3509
      %v3567 = vpack.c.b16 %v3512, %v3511
      %v3568 = vpack.c.b16 %v3514, %v3513
      %v3569 = vpack.c.b16 %v3516, %v3515
      %v3570 = vpack.c.b16 %v3518, %v3517
      %v3571 = vpack.c.b16 %v3520, %v3519
      %v3572 = vpack.c.b16 %v3522, %v3521
      %v3573 = vpack.c.b16 %v3524, %v3523
      %v3574 = vpack.c.b16 %v3526, %v3525
      %v3575 = vpack.c.b16 %v3528, %v3527
      %v3576 = vpack.c.b16 %v3530, %v3529
      %v3577 = vpack.c.b16 %v3532, %v3531
      %v3578 = vpack.c.b16 %v3534, %v3533
      %v3579 = vpack.c.b16 %v3536, %v3535
      %v3580 = vpack.c.b16 %v3538, %v3537
      %v3581 = vpack.c.b16 %v3540, %v3539
      %v3582 = vpack.c.b16 %v3542, %v3541
      %v3583 = vpack.c.b16 %v3544, %v3543
      %v3584 = vpack.c.b16 %v3546, %v3545
      %v3585 = vpack.c.b16 %v3548, %v3547
      %v3586 = vpack.c.b16 %v3550, %v3549
      %v3587 = vpack.c.b16 %v3552, %v3551
      %v3588 = vpack.c.b16 %v3554, %v3553
      %v3589 = vpack.c.b16 %v3556, %v3555
      %v3590 = vpack.c.b16 %v3558, %v3557
      %3623 = vmatprep.subr.bf16.mxu0 0
      %3624 = vmatpush1.bf16.msra.mxu0 %v3559
      %3625 = vmatprep.subr.bf16.mxu0 0
      %3626 = vmatpush1.bf16.msra.mxu0 %v3560
      %3627 = vmatprep.subr.bf16.mxu0 0
      %3628 = vmatpush1.bf16.msra.mxu0 %v3561
      %3629 = vmatprep.subr.bf16.mxu0 0
      %3630 = vmatpush1.bf16.msra.mxu0 %v3562
      %3631 = vmatprep.subr.bf16.mxu0 0
      %3632 = vmatpush1.bf16.msra.mxu0 %v3563
      %3633 = vmatprep.subr.bf16.mxu0 0
      %3634 = vmatpush1.bf16.msra.mxu0 %v3564
      %3635 = vmatprep.subr.bf16.mxu0 0
      %3636 = vmatpush1.bf16.msra.mxu0 %v3565
      %3637 = vmatprep.subr.bf16.mxu0 0
      %3638 = vmatpush1.bf16.msra.mxu0 %v3566
      %3639 = vmatprep.subr.bf16.mxu0 0
      %3640 = vmatpush1.bf16.msra.mxu0 %v3567
      %3641 = vmatprep.subr.bf16.mxu0 0
      %3642 = vmatpush1.bf16.msra.mxu0 %v3568
      %3643 = vmatprep.subr.bf16.mxu0 0
      %3644 = vmatpush1.bf16.msra.mxu0 %v3569
      %3645 = vmatprep.subr.bf16.mxu0 0
      %3646 = vmatpush1.bf16.msra.mxu0 %v3570
      %3647 = vmatprep.subr.bf16.mxu0 0
      %3648 = vmatpush1.bf16.msra.mxu0 %v3571
      %3649 = vmatprep.subr.bf16.mxu0 0
      %3650 = vmatpush1.bf16.msra.mxu0 %v3572
      %3651 = vmatprep.subr.bf16.mxu0 0
      %3652 = vmatpush1.bf16.msra.mxu0 %v3573
      %3653 = vmatprep.subr.bf16.mxu0 0
      %3654 = vmatpush1.bf16.msra.mxu0 %v3574
      %3655 = vmatprep.mubr.bf16.mxu0 %v3355
      %3656 = vmatmul.mubr.bf16.gmra.mrb[0].mxu0 %v3354
      %v3657 = vpop.f32.mrb[0].mxu0
      %v3658 = vadd.f32 0.0, %v3657
      %v3659 = vpop.f32.mrb[0].mxu0
      %v3660 = vpop.f32.mrb[0].mxu0
      %v3661 = vadd.f32 0.0, %v3660
      %v3662 = vpop.f32.mrb[0].mxu0
      %3663 = vmatprep.mubr.bf16.mxu0 %v3359
      %3664 = vmatmul.mubr.bf16.gmra.mrb[0].mxu0 %v3358
      %v3665 = vpop.f32.mrb[0].mxu0
      %v3666 = vadd.f32 0.0, %v3665
      %v3667 = vpop.f32.mrb[0].mxu0
      %v3668 = vpop.f32.mrb[0].mxu0
      %v3669 = vadd.f32 0.0, %v3668
      %v3670 = vpop.f32.mrb[0].mxu0
      %3671 = vmatprep.mubr.bf16.mxu0 %v3363
      %3672 = vmatmul.mubr.bf16.gmra.mrb[0].mxu0 %v3362
      %v3673 = vpop.f32.mrb[0].mxu0
      %v3674 = vadd.f32 0.0, %v3673
      %v3675 = vpop.f32.mrb[0].mxu0
      %v3676 = vpop.f32.mrb[0].mxu0
      %v3677 = vpop.f32.mrb[0].mxu0
      %3678 = vdwg.mxu0
      %3679 = vmatprep.subr.bf16.mxu0 0
      %3680 = vmatpush1.bf16.msra.mxu0 %v3575
      %3681 = vmatprep.subr.bf16.mxu0 0
      %3682 = vmatpush1.bf16.msra.mxu0 %v3576
      %3683 = vmatprep.subr.bf16.mxu0 0
      %3684 = vmatpush1.bf16.msra.mxu0 %v3577
      %3685 = vmatprep.subr.bf16.mxu0 0
      %3686 = vmatpush1.bf16.msra.mxu0 %v3578
      %3687 = vmatprep.subr.bf16.mxu0 0
      %3688 = vmatpush1.bf16.msra.mxu0 %v3579
      %3689 = vmatprep.subr.bf16.mxu0 0
      %3690 = vmatpush1.bf16.msra.mxu0 %v3580
      %3691 = vmatprep.subr.bf16.mxu0 0
      %3692 = vmatpush1.bf16.msra.mxu0 %v3581
      %3693 = vmatprep.subr.bf16.mxu0 0
      %3694 = vmatpush1.bf16.msra.mxu0 %v3582
      %3695 = vmatprep.subr.bf16.mxu0 0
      %3696 = vmatpush1.bf16.msra.mxu0 %v3583
      %3697 = vmatprep.subr.bf16.mxu0 0
      %3698 = vmatpush1.bf16.msra.mxu0 %v3584
      %3699 = vmatprep.subr.bf16.mxu0 0
      %3700 = vmatpush1.bf16.msra.mxu0 %v3585
      %3701 = vmatprep.subr.bf16.mxu0 0
      %3702 = vmatpush1.bf16.msra.mxu0 %v3586
      %3703 = vmatprep.subr.bf16.mxu0 0
      %3704 = vmatpush1.bf16.msra.mxu0 %v3587
      %3705 = vmatprep.subr.bf16.mxu0 0
      %3706 = vmatpush1.bf16.msra.mxu0 %v3588
      %3707 = vmatprep.subr.bf16.mxu0 0
      %3708 = vmatpush1.bf16.msra.mxu0 %v3589
      %3709 = vmatprep.subr.bf16.mxu0 0
      %3710 = vmatpush1.bf16.msra.mxu0 %v3590
      %3711 = vmatprep.mubr.bf16.mxu0 %v3357
      %3712 = vmatmul.mubr.bf16.gmra.mrb[0].mxu0 %v3356
      %v3713 = vpop.f32.mrb[0].mxu0
      %v3714 = vadd.f32 %v3658, %v3713
      %v3715 = vpop.f32.mrb[0].mxu0
      %v3716 = vpop.f32.mrb[0].mxu0
      %v3717 = vadd.f32 %v3661, %v3716
      %v3718 = vpop.f32.mrb[0].mxu0
      %3719 = vmatprep.mubr.bf16.mxu0 %v3361
      %3720 = vmatmul.mubr.bf16.gmra.mrb[0].mxu0 %v3360
      %v3721 = vpop.f32.mrb[0].mxu0
      %v3722 = vadd.f32 %v3666, %v3721
      %v3723 = vpop.f32.mrb[0].mxu0
      %v3724 = vpop.f32.mrb[0].mxu0
      %v3725 = vadd.f32 %v3669, %v3724
      %v3726 = vpop.f32.mrb[0].mxu0
      %3727 = vmatprep.mubr.bf16.mxu0 %v3365
      %3728 = vmatmul.mubr.bf16.gmra.mrb[0].mxu0 %v3364
      %v3729 = vpop.f32.mrb[0].mxu0
      %v3730 = vadd.f32 %v3674, %v3729
      %v3731 = vpop.f32.mrb[0].mxu0
      %v3732 = vpop.f32.mrb[0].mxu0
      %v3733 = vpop.f32.mrb[0].mxu0
      %3734 = vdwg.mxu0
      %v3735 = vadd.f32 %v3159, %v3714
      %v3736 = vadd.f32 %v3160, %v3717
      %v3737 = vadd.f32 %v3161, %v3722
      %v3738 = vadd.f32 %v3162, %v3725
      %v3739 = vadd.f32 %v3163, %v3730
      %s3740 = scalar_lea.vmem %s870, 96
      %v3741 = vld [vmem:[%s3740] sm:$0xff]
      %v3742 = vld [vmem:[%s3740 + $0x8] sm:$0xff]
      %v3743 = vld [vmem:[%s3740 + $0x10] sm:$0xff]
      %v3744 = vld [vmem:[%s3740 + $0x18] sm:$0xff]
      %s3745 = scalar_lea.vmem %s874, 12
      %v3746 = vld [vmem:[%s3745] sm:$0xf]
      %v3748 = vlaneseq
      %v3749 = vshrl.u32 %v3748, 7
      %v3750 = vsub.s32 0, %v3749
      %v3751 = vrot.slane %v3746, %v3750
      %v3752 = vlaneseq
      %v3753 = vshrl.u32 %v3752, 7
      %v3754 = vsub.s32 1, %v3753
      %v3755 = vrot.slane %v3746, %v3754
      %v3756 = vlaneseq
      %v3757 = vshrl.u32 %v3756, 7
      %v3758 = vsub.s32 2, %v3757
      %v3759 = vrot.slane %v3746, %v3758
      %v3760 = vlaneseq
      %v3761 = vshrl.u32 %v3760, 7
      %v3762 = vsub.s32 3, %v3761
      %v3763 = vrot.slane %v3746, %v3762
      %v3772 = vunpack.c.l.b16 %v3741
      %v3773 = vunpack.c.h.b16 %v3741
      %v3774 = vunpack.c.l.b16 %v3742
      %v3775 = vunpack.c.h.b16 %v3742
      %v3776 = vunpack.c.l.b16 %v3743
      %v3777 = vunpack.c.h.b16 %v3743
      %v3778 = vunpack.c.l.b16 %v3744
      %v3779 = vunpack.c.h.b16 %v3744
      %v3780 = vpack.c.b16 %v3776, %v3772
      %v3781 = vpack.c.b16 %v3777, %v3773
      %v3782 = vpack.c.b16 %v3778, %v3774
      %v3783 = vpack.c.b16 %v3779, %v3775
      %3788 = vmatprep.subr.bf16.mxu0 %v3781
      %3789 = vmatpush1.bf16.msra.mxu0 %v3780
      %3790 = vmatprep.subr.bf16.mxu0 0
      %3791 = vmatpush1.bf16.msra.mxu0 0
      %3792 = vmatprep.subr.bf16.mxu0 0
      %3793 = vmatpush1.bf16.msra.mxu0 0
      %3794 = vmatprep.subr.bf16.mxu0 0
      %3795 = vmatpush1.bf16.msra.mxu0 0
      %3796 = vmatprep.subr.bf16.mxu0 0
      %3797 = vmatpush1.bf16.msra.mxu0 0
      %3798 = vmatprep.subr.bf16.mxu0 0
      %3799 = vmatpush1.bf16.msra.mxu0 0
      %3800 = vmatprep.subr.bf16.mxu0 0
      %3801 = vmatpush1.bf16.msra.mxu0 0
      %3802 = vmatprep.subr.bf16.mxu0 0
      %3803 = vmatpush1.bf16.msra.mxu0 0
      %3804 = vmatprep.subr.bf16.mxu0 0
      %3805 = vmatpush1.bf16.msra.mxu0 0
      %3806 = vmatprep.subr.bf16.mxu0 0
      %3807 = vmatpush1.bf16.msra.mxu0 0
      %3808 = vmatprep.subr.bf16.mxu0 0
      %3809 = vmatpush1.bf16.msra.mxu0 0
      %3810 = vmatprep.subr.bf16.mxu0 0
      %3811 = vmatpush1.bf16.msra.mxu0 0
      %3812 = vmatprep.subr.bf16.mxu0 0
      %3813 = vmatpush1.bf16.msra.mxu0 0
      %3814 = vmatprep.subr.bf16.mxu0 0
      %3815 = vmatpush1.bf16.msra.mxu0 0
      %3816 = vmatprep.subr.bf16.mxu0 0
      %3817 = vmatpush1.bf16.msra.mxu0 0
      %3818 = vmatprep.subr.bf16.mxu0 0
      %3819 = vmatpush1.bf16.msra.mxu0 0
      %3820 = vmatprep.mubr.bf16.mxu0 0
      %3821 = vmatmul.mubr.bf16.gmra.mrb[0].mxu0 %v2053
      %v3822 = vpop.f32.mrb[0].mxu0
      %v3823 = vadd.f32 %v3751, %v3822
      %v3824 = vpop.f32.mrb[0].mxu0
      %v3825 = vadd.f32 %v3755, %v3824
      %v3826 = vpop.f32.mrb[0].mxu0
      %v3827 = vadd.f32 %v3751, %v3826
      %v3828 = vpop.f32.mrb[0].mxu0
      %v3829 = vadd.f32 %v3755, %v3828
      %3830 = vmatprep.mubr.bf16.mxu0 0
      %3831 = vmatmul.mubr.bf16.gmra.mrb[0].mxu0 %v2056
      %v3832 = vpop.f32.mrb[0].mxu0
      %v3833 = vadd.f32 %v3751, %v3832
      %v3834 = vpop.f32.mrb[0].mxu0
      %v3835 = vadd.f32 %v3755, %v3834
      %v3836 = vpop.f32.mrb[0].mxu0
      %v3837 = vadd.f32 %v3751, %v3836
      %v3838 = vpop.f32.mrb[0].mxu0
      %v3839 = vadd.f32 %v3755, %v3838
      %3840 = vmatprep.mubr.bf16.mxu0 0
      %3841 = vmatmul.mubr.bf16.gmra.mrb[0].mxu0 %v2059
      %v3842 = vpop.f32.mrb[0].mxu0
      %v3843 = vadd.f32 %v3751, %v3842
      %v3844 = vpop.f32.mrb[0].mxu0
      %v3845 = vadd.f32 %v3755, %v3844
      %v3846 = vpop.f32.mrb[0].mxu0
      %v3847 = vpop.f32.mrb[0].mxu0
      %3848 = vdwg.mxu0
      %3849 = vmatprep.subr.bf16.mxu0 %v3783
      %3850 = vmatpush1.bf16.msra.mxu0 %v3782
      %3851 = vmatprep.subr.bf16.mxu0 0
      %3852 = vmatpush1.bf16.msra.mxu0 0
      %3853 = vmatprep.subr.bf16.mxu0 0
      %3854 = vmatpush1.bf16.msra.mxu0 0
      %3855 = vmatprep.subr.bf16.mxu0 0
      %3856 = vmatpush1.bf16.msra.mxu0 0
      %3857 = vmatprep.subr.bf16.mxu0 0
      %3858 = vmatpush1.bf16.msra.mxu0 0
      %3859 = vmatprep.subr.bf16.mxu0 0
      %3860 = vmatpush1.bf16.msra.mxu0 0
      %3861 = vmatprep.subr.bf16.mxu0 0
      %3862 = vmatpush1.bf16.msra.mxu0 0
      %3863 = vmatprep.subr.bf16.mxu0 0
      %3864 = vmatpush1.bf16.msra.mxu0 0
      %3865 = vmatprep.subr.bf16.mxu0 0
      %3866 = vmatpush1.bf16.msra.mxu0 0
      %3867 = vmatprep.subr.bf16.mxu0 0
      %3868 = vmatpush1.bf16.msra.mxu0 0
      %3869 = vmatprep.subr.bf16.mxu0 0
      %3870 = vmatpush1.bf16.msra.mxu0 0
      %3871 = vmatprep.subr.bf16.mxu0 0
      %3872 = vmatpush1.bf16.msra.mxu0 0
      %3873 = vmatprep.subr.bf16.mxu0 0
      %3874 = vmatpush1.bf16.msra.mxu0 0
      %3875 = vmatprep.subr.bf16.mxu0 0
      %3876 = vmatpush1.bf16.msra.mxu0 0
      %3877 = vmatprep.subr.bf16.mxu0 0
      %3878 = vmatpush1.bf16.msra.mxu0 0
      %3879 = vmatprep.subr.bf16.mxu0 0
      %3880 = vmatpush1.bf16.msra.mxu0 0
      %3881 = vmatprep.mubr.bf16.mxu0 0
      %3882 = vmatmul.mubr.bf16.gmra.mrb[0].mxu0 %v2053
      %v3883 = vpop.f32.mrb[0].mxu0
      %v3884 = vadd.f32 %v3759, %v3883
      %v3885 = vpop.f32.mrb[0].mxu0
      %v3886 = vadd.f32 %v3763, %v3885
      %v3887 = vpop.f32.mrb[0].mxu0
      %v3888 = vadd.f32 %v3759, %v3887
      %v3889 = vpop.f32.mrb[0].mxu0
      %v3890 = vadd.f32 %v3763, %v3889
      %3891 = vmatprep.mubr.bf16.mxu0 0
      %3892 = vmatmul.mubr.bf16.gmra.mrb[0].mxu0 %v2056
      %v3893 = vpop.f32.mrb[0].mxu0
      %v3894 = vadd.f32 %v3759, %v3893
      %v3895 = vpop.f32.mrb[0].mxu0
      %v3896 = vadd.f32 %v3763, %v3895
      %v3897 = vpop.f32.mrb[0].mxu0
      %v3898 = vadd.f32 %v3759, %v3897
      %v3899 = vpop.f32.mrb[0].mxu0
      %v3900 = vadd.f32 %v3763, %v3899
      %3901 = vmatprep.mubr.bf16.mxu0 0
      %3902 = vmatmul.mubr.bf16.gmra.mrb[0].mxu0 %v2059
      %v3903 = vpop.f32.mrb[0].mxu0
      %v3904 = vadd.f32 %v3759, %v3903
      %v3905 = vpop.f32.mrb[0].mxu0
      %v3906 = vadd.f32 %v3763, %v3905
      %v3907 = vpop.f32.mrb[0].mxu0
      %v3908 = vpop.f32.mrb[0].mxu0
      %3909 = vdwg.mxu0
      %v3910 = vmax.f32 %v3823, 0.0
      %v3911 = vmax.f32 %v3825, 0.0
      %v3912 = vmax.f32 %v3884, 0.0
      %v3913 = vmax.f32 %v3886, 0.0
      %v3914 = vmax.f32 %v3827, 0.0
      %v3915 = vmax.f32 %v3829, 0.0
      %v3916 = vmax.f32 %v3888, 0.0
      %v3917 = vmax.f32 %v3890, 0.0
      %v3918 = vmax.f32 %v3833, 0.0
      %v3919 = vmax.f32 %v3835, 0.0
      %v3920 = vmax.f32 %v3894, 0.0
      %v3921 = vmax.f32 %v3896, 0.0
      %v3922 = vmax.f32 %v3837, 0.0
      %v3923 = vmax.f32 %v3839, 0.0
      %v3924 = vmax.f32 %v3898, 0.0
      %v3925 = vmax.f32 %v3900, 0.0
      %v3926 = vmax.f32 %v3843, 0.0
      %v3927 = vmax.f32 %v3845, 0.0
      %v3928 = vmax.f32 %v3904, 0.0
      %v3929 = vmax.f32 %v3906, 0.0
      %v3930 = vpack.c.bf16 %v3914, %v3910
      %v3931 = vpack.c.bf16 %v3915, %v3911
      %v3932 = vpack.c.bf16 %v3916, %v3912
      %v3933 = vpack.c.bf16 %v3917, %v3913
      %v3934 = vpack.c.bf16 %v3922, %v3918
      %v3935 = vpack.c.bf16 %v3923, %v3919
      %v3936 = vpack.c.bf16 %v3924, %v3920
      %v3937 = vpack.c.bf16 %v3925, %v3921
      %v3938 = vpack.c.bf16 %v3926, %v3926
      %v3939 = vpack.c.bf16 %v3927, %v3927
      %v3940 = vpack.c.bf16 %v3928, %v3928
      %v3941 = vpack.c.bf16 %v3929, %v3929
      %s3942 = scalar_lea.vmem %s879, 768
      %v3943 = vld [vmem:[%s3942] sm:$0xf]
      %v3944 = vld [vmem:[%s3942 + $0x4] sm:$0xf]
      %v3945 = vld [vmem:[%s3942 + $0x8] sm:$0xf]
      %v3946 = vld [vmem:[%s3942 + $0xc] sm:$0xf]
      %v3947 = vld [vmem:[%s3942 + $0x10] sm:$0xf]
      %v3948 = vld [vmem:[%s3942 + $0x14] sm:$0xf]
      %v3949 = vld [vmem:[%s3942 + $0x18] sm:$0xf]
      %v3950 = vld [vmem:[%s3942 + $0x1c] sm:$0xf]
      %v3951 = vld [vmem:[%s3942 + $0x20] sm:$0xf]
      %v3952 = vld [vmem:[%s3942 + $0x24] sm:$0xf]
      %v3953 = vld [vmem:[%s3942 + $0x28] sm:$0xf]
      %v3954 = vld [vmem:[%s3942 + $0x2c] sm:$0xf]
      %v3955 = vld [vmem:[%s3942 + $0x30] sm:$0xf]
      %v3956 = vld [vmem:[%s3942 + $0x34] sm:$0xf]
      %v3957 = vld [vmem:[%s3942 + $0x38] sm:$0xf]
      %v3958 = vld [vmem:[%s3942 + $0x3c] sm:$0xf]
      %v3959 = vld [vmem:[%s3942 + $0x40] sm:$0xf]
      %v3960 = vld [vmem:[%s3942 + $0x44] sm:$0xf]
      %v3961 = vld [vmem:[%s3942 + $0x48] sm:$0xf]
      %v3962 = vld [vmem:[%s3942 + $0x4c] sm:$0xf]
      %v3963 = vld [vmem:[%s3942 + $0x50] sm:$0xf]
      %v3964 = vld [vmem:[%s3942 + $0x54] sm:$0xf]
      %v3965 = vld [vmem:[%s3942 + $0x58] sm:$0xf]
      %v3966 = vld [vmem:[%s3942 + $0x5c] sm:$0xf]
      %v3967 = vld [vmem:[%s3942 + $0x60] sm:$0xf]
      %v3968 = vld [vmem:[%s3942 + $0x64] sm:$0xf]
      %v3969 = vld [vmem:[%s3942 + $0x68] sm:$0xf]
      %v3970 = vld [vmem:[%s3942 + $0x6c] sm:$0xf]
      %v3971 = vld [vmem:[%s3942 + $0x70] sm:$0xf]
      %v3972 = vld [vmem:[%s3942 + $0x74] sm:$0xf]
      %v3973 = vld [vmem:[%s3942 + $0x78] sm:$0xf]
      %v3974 = vld [vmem:[%s3942 + $0x7c] sm:$0xf]
      %v3975 = vld [vmem:[%s3942 + $0x80] sm:$0xf]
      %v3976 = vld [vmem:[%s3942 + $0x84] sm:$0xf]
      %v3977 = vld [vmem:[%s3942 + $0x88] sm:$0xf]
      %v3978 = vld [vmem:[%s3942 + $0x8c] sm:$0xf]
      %v3979 = vld [vmem:[%s3942 + $0x90] sm:$0xf]
      %v3980 = vld [vmem:[%s3942 + $0x94] sm:$0xf]
      %v3981 = vld [vmem:[%s3942 + $0x98] sm:$0xf]
      %v3982 = vld [vmem:[%s3942 + $0x9c] sm:$0xf]
      %v3983 = vld [vmem:[%s3942 + $0xa0] sm:$0xf]
      %v3984 = vld [vmem:[%s3942 + $0xa4] sm:$0xf]
      %v3985 = vld [vmem:[%s3942 + $0xa8] sm:$0xf]
      %v3986 = vld [vmem:[%s3942 + $0xac] sm:$0xf]
      %v3987 = vld [vmem:[%s3942 + $0xb0] sm:$0xf]
      %v3988 = vld [vmem:[%s3942 + $0xb4] sm:$0xf]
      %v3989 = vld [vmem:[%s3942 + $0xb8] sm:$0xf]
      %v3990 = vld [vmem:[%s3942 + $0xbc] sm:$0xf]
      %v3991 = vld [vmem:[%s3942 + $0xc0] sm:$0xf]
      %v3992 = vld [vmem:[%s3942 + $0xc4] sm:$0xf]
      %v3993 = vld [vmem:[%s3942 + $0xc8] sm:$0xf]
      %v3994 = vld [vmem:[%s3942 + $0xcc] sm:$0xf]
      %v3995 = vld [vmem:[%s3942 + $0xd0] sm:$0xf]
      %v3996 = vld [vmem:[%s3942 + $0xd4] sm:$0xf]
      %v3997 = vld [vmem:[%s3942 + $0xd8] sm:$0xf]
      %v3998 = vld [vmem:[%s3942 + $0xdc] sm:$0xf]
      %v3999 = vld [vmem:[%s3942 + $0xe0] sm:$0xf]
      %v4000 = vld [vmem:[%s3942 + $0xe4] sm:$0xf]
      %v4001 = vld [vmem:[%s3942 + $0xe8] sm:$0xf]
      %v4002 = vld [vmem:[%s3942 + $0xec] sm:$0xf]
      %v4003 = vld [vmem:[%s3942 + $0xf0] sm:$0xf]
      %v4004 = vld [vmem:[%s3942 + $0xf4] sm:$0xf]
      %v4005 = vld [vmem:[%s3942 + $0xf8] sm:$0xf]
      %v4006 = vld [vmem:[%s3942 + $0xfc] sm:$0xf]
      %v4071 = vunpack.c.l.b16 %v3943
      %v4072 = vunpack.c.l.b16 %v3944
      %v4073 = vunpack.c.l.b16 %v3945
      %v4074 = vunpack.c.l.b16 %v3946
      %v4075 = vunpack.c.l.b16 %v3947
      %v4076 = vunpack.c.l.b16 %v3948
      %v4077 = vunpack.c.l.b16 %v3949
      %v4078 = vunpack.c.l.b16 %v3950
      %v4079 = vunpack.c.l.b16 %v3951
      %v4080 = vunpack.c.l.b16 %v3952
      %v4081 = vunpack.c.l.b16 %v3953
      %v4082 = vunpack.c.l.b16 %v3954
      %v4083 = vunpack.c.l.b16 %v3955
      %v4084 = vunpack.c.l.b16 %v3956
      %v4085 = vunpack.c.l.b16 %v3957
      %v4086 = vunpack.c.l.b16 %v3958
      %v4087 = vunpack.c.l.b16 %v3959
      %v4088 = vunpack.c.l.b16 %v3960
      %v4089 = vunpack.c.l.b16 %v3961
      %v4090 = vunpack.c.l.b16 %v3962
      %v4091 = vunpack.c.l.b16 %v3963
      %v4092 = vunpack.c.l.b16 %v3964
      %v4093 = vunpack.c.l.b16 %v3965
      %v4094 = vunpack.c.l.b16 %v3966
      %v4095 = vunpack.c.l.b16 %v3967
      %v4096 = vunpack.c.l.b16 %v3968
      %v4097 = vunpack.c.l.b16 %v3969
      %v4098 = vunpack.c.l.b16 %v3970
      %v4099 = vunpack.c.l.b16 %v3971
      %v4100 = vunpack.c.l.b16 %v3972
      %v4101 = vunpack.c.l.b16 %v3973
      %v4102 = vunpack.c.l.b16 %v3974
      %v4103 = vunpack.c.l.b16 %v3975
      %v4104 = vunpack.c.l.b16 %v3976
      %v4105 = vunpack.c.l.b16 %v3977
      %v4106 = vunpack.c.l.b16 %v3978
      %v4107 = vunpack.c.l.b16 %v3979
      %v4108 = vunpack.c.l.b16 %v3980
      %v4109 = vunpack.c.l.b16 %v3981
      %v4110 = vunpack.c.l.b16 %v3982
      %v4111 = vunpack.c.l.b16 %v3983
      %v4112 = vunpack.c.l.b16 %v3984
      %v4113 = vunpack.c.l.b16 %v3985
      %v4114 = vunpack.c.l.b16 %v3986
      %v4115 = vunpack.c.l.b16 %v3987
      %v4116 = vunpack.c.l.b16 %v3988
      %v4117 = vunpack.c.l.b16 %v3989
      %v4118 = vunpack.c.l.b16 %v3990
      %v4119 = vunpack.c.l.b16 %v3991
      %v4120 = vunpack.c.l.b16 %v3992
      %v4121 = vunpack.c.l.b16 %v3993
      %v4122 = vunpack.c.l.b16 %v3994
      %v4123 = vunpack.c.l.b16 %v3995
      %v4124 = vunpack.c.l.b16 %v3996
      %v4125 = vunpack.c.l.b16 %v3997
      %v4126 = vunpack.c.l.b16 %v3998
      %v4127 = vunpack.c.l.b16 %v3999
      %v4128 = vunpack.c.l.b16 %v4000
      %v4129 = vunpack.c.l.b16 %v4001
      %v4130 = vunpack.c.l.b16 %v4002
      %v4131 = vunpack.c.l.b16 %v4003
      %v4132 = vunpack.c.l.b16 %v4004
      %v4133 = vunpack.c.l.b16 %v4005
      %v4134 = vunpack.c.l.b16 %v4006
      %v4135 = vpack.c.b16 %v4072, %v4071
      %v4136 = vpack.c.b16 %v4074, %v4073
      %v4137 = vpack.c.b16 %v4076, %v4075
      %v4138 = vpack.c.b16 %v4078, %v4077
      %v4139 = vpack.c.b16 %v4080, %v4079
      %v4140 = vpack.c.b16 %v4082, %v4081
      %v4141 = vpack.c.b16 %v4084, %v4083
      %v4142 = vpack.c.b16 %v4086, %v4085
      %v4143 = vpack.c.b16 %v4088, %v4087
      %v4144 = vpack.c.b16 %v4090, %v4089
      %v4145 = vpack.c.b16 %v4092, %v4091
      %v4146 = vpack.c.b16 %v4094, %v4093
      %v4147 = vpack.c.b16 %v4096, %v4095
      %v4148 = vpack.c.b16 %v4098, %v4097
      %v4149 = vpack.c.b16 %v4100, %v4099
      %v4150 = vpack.c.b16 %v4102, %v4101
      %v4151 = vpack.c.b16 %v4104, %v4103
      %v4152 = vpack.c.b16 %v4106, %v4105
      %v4153 = vpack.c.b16 %v4108, %v4107
      %v4154 = vpack.c.b16 %v4110, %v4109
      %v4155 = vpack.c.b16 %v4112, %v4111
      %v4156 = vpack.c.b16 %v4114, %v4113
      %v4157 = vpack.c.b16 %v4116, %v4115
      %v4158 = vpack.c.b16 %v4118, %v4117
      %v4159 = vpack.c.b16 %v4120, %v4119
      %v4160 = vpack.c.b16 %v4122, %v4121
      %v4161 = vpack.c.b16 %v4124, %v4123
      %v4162 = vpack.c.b16 %v4126, %v4125
      %v4163 = vpack.c.b16 %v4128, %v4127
      %v4164 = vpack.c.b16 %v4130, %v4129
      %v4165 = vpack.c.b16 %v4132, %v4131
      %v4166 = vpack.c.b16 %v4134, %v4133
      %4199 = vmatprep.subr.bf16.mxu0 0
      %4200 = vmatpush1.bf16.msra.mxu0 %v4135
      %4201 = vmatprep.subr.bf16.mxu0 0
      %4202 = vmatpush1.bf16.msra.mxu0 %v4136
      %4203 = vmatprep.subr.bf16.mxu0 0
      %4204 = vmatpush1.bf16.msra.mxu0 %v4137
      %4205 = vmatprep.subr.bf16.mxu0 0
      %4206 = vmatpush1.bf16.msra.mxu0 %v4138
      %4207 = vmatprep.subr.bf16.mxu0 0
      %4208 = vmatpush1.bf16.msra.mxu0 %v4139
      %4209 = vmatprep.subr.bf16.mxu0 0
      %4210 = vmatpush1.bf16.msra.mxu0 %v4140
      %4211 = vmatprep.subr.bf16.mxu0 0
      %4212 = vmatpush1.bf16.msra.mxu0 %v4141
      %4213 = vmatprep.subr.bf16.mxu0 0
      %4214 = vmatpush1.bf16.msra.mxu0 %v4142
      %4215 = vmatprep.subr.bf16.mxu0 0
      %4216 = vmatpush1.bf16.msra.mxu0 %v4143
      %4217 = vmatprep.subr.bf16.mxu0 0
      %4218 = vmatpush1.bf16.msra.mxu0 %v4144
      %4219 = vmatprep.subr.bf16.mxu0 0
      %4220 = vmatpush1.bf16.msra.mxu0 %v4145
      %4221 = vmatprep.subr.bf16.mxu0 0
      %4222 = vmatpush1.bf16.msra.mxu0 %v4146
      %4223 = vmatprep.subr.bf16.mxu0 0
      %4224 = vmatpush1.bf16.msra.mxu0 %v4147
      %4225 = vmatprep.subr.bf16.mxu0 0
      %4226 = vmatpush1.bf16.msra.mxu0 %v4148
      %4227 = vmatprep.subr.bf16.mxu0 0
      %4228 = vmatpush1.bf16.msra.mxu0 %v4149
      %4229 = vmatprep.subr.bf16.mxu0 0
      %4230 = vmatpush1.bf16.msra.mxu0 %v4150
      %4231 = vmatprep.mubr.bf16.mxu0 %v3931
      %4232 = vmatmul.mubr.bf16.gmra.mrb[0].mxu0 %v3930
      %v4233 = vpop.f32.mrb[0].mxu0
      %v4234 = vadd.f32 0.0, %v4233
      %v4235 = vpop.f32.mrb[0].mxu0
      %v4236 = vpop.f32.mrb[0].mxu0
      %v4237 = vadd.f32 0.0, %v4236
      %v4238 = vpop.f32.mrb[0].mxu0
      %4239 = vmatprep.mubr.bf16.mxu0 %v3935
      %4240 = vmatmul.mubr.bf16.gmra.mrb[0].mxu0 %v3934
      %v4241 = vpop.f32.mrb[0].mxu0
      %v4242 = vadd.f32 0.0, %v4241
      %v4243 = vpop.f32.mrb[0].mxu0
      %v4244 = vpop.f32.mrb[0].mxu0
      %v4245 = vadd.f32 0.0, %v4244
      %v4246 = vpop.f32.mrb[0].mxu0
      %4247 = vmatprep.mubr.bf16.mxu0 %v3939
      %4248 = vmatmul.mubr.bf16.gmra.mrb[0].mxu0 %v3938
      %v4249 = vpop.f32.mrb[0].mxu0
      %v4250 = vadd.f32 0.0, %v4249
      %v4251 = vpop.f32.mrb[0].mxu0
      %v4252 = vpop.f32.mrb[0].mxu0
      %v4253 = vpop.f32.mrb[0].mxu0
      %4254 = vdwg.mxu0
      %4255 = vmatprep.subr.bf16.mxu0 0
      %4256 = vmatpush1.bf16.msra.mxu0 %v4151
      %4257 = vmatprep.subr.bf16.mxu0 0
      %4258 = vmatpush1.bf16.msra.mxu0 %v4152
      %4259 = vmatprep.subr.bf16.mxu0 0
      %4260 = vmatpush1.bf16.msra.mxu0 %v4153
      %4261 = vmatprep.subr.bf16.mxu0 0
      %4262 = vmatpush1.bf16.msra.mxu0 %v4154
      %4263 = vmatprep.subr.bf16.mxu0 0
      %4264 = vmatpush1.bf16.msra.mxu0 %v4155
      %4265 = vmatprep.subr.bf16.mxu0 0
      %4266 = vmatpush1.bf16.msra.mxu0 %v4156
      %4267 = vmatprep.subr.bf16.mxu0 0
      %4268 = vmatpush1.bf16.msra.mxu0 %v4157
      %4269 = vmatprep.subr.bf16.mxu0 0
      %4270 = vmatpush1.bf16.msra.mxu0 %v4158
      %4271 = vmatprep.subr.bf16.mxu0 0
      %4272 = vmatpush1.bf16.msra.mxu0 %v4159
      %4273 = vmatprep.subr.bf16.mxu0 0
      %4274 = vmatpush1.bf16.msra.mxu0 %v4160
      %4275 = vmatprep.subr.bf16.mxu0 0
      %4276 = vmatpush1.bf16.msra.mxu0 %v4161
      %4277 = vmatprep.subr.bf16.mxu0 0
      %4278 = vmatpush1.bf16.msra.mxu0 %v4162
      %4279 = vmatprep.subr.bf16.mxu0 0
      %4280 = vmatpush1.bf16.msra.mxu0 %v4163
      %4281 = vmatprep.subr.bf16.mxu0 0
      %4282 = vmatpush1.bf16.msra.mxu0 %v4164
      %4283 = vmatprep.subr.bf16.mxu0 0
      %4284 = vmatpush1.bf16.msra.mxu0 %v4165
      %4285 = vmatprep.subr.bf16.mxu0 0
      %4286 = vmatpush1.bf16.msra.mxu0 %v4166
      %4287 = vmatprep.mubr.bf16.mxu0 %v3933
      %4288 = vmatmul.mubr.bf16.gmra.mrb[0].mxu0 %v3932
      %v4289 = vpop.f32.mrb[0].mxu0
      %v4290 = vadd.f32 %v4234, %v4289
      %v4291 = vpop.f32.mrb[0].mxu0
      %v4292 = vpop.f32.mrb[0].mxu0
      %v4293 = vadd.f32 %v4237, %v4292
      %v4294 = vpop.f32.mrb[0].mxu0
      %4295 = vmatprep.mubr.bf16.mxu0 %v3937
      %4296 = vmatmul.mubr.bf16.gmra.mrb[0].mxu0 %v3936
      %v4297 = vpop.f32.mrb[0].mxu0
      %v4298 = vadd.f32 %v4242, %v4297
      %v4299 = vpop.f32.mrb[0].mxu0
      %v4300 = vpop.f32.mrb[0].mxu0
      %v4301 = vadd.f32 %v4245, %v4300
      %v4302 = vpop.f32.mrb[0].mxu0
      %4303 = vmatprep.mubr.bf16.mxu0 %v3941
      %4304 = vmatmul.mubr.bf16.gmra.mrb[0].mxu0 %v3940
      %v4305 = vpop.f32.mrb[0].mxu0
      %v4306 = vadd.f32 %v4250, %v4305
      %v4307 = vpop.f32.mrb[0].mxu0
      %v4308 = vpop.f32.mrb[0].mxu0
      %v4309 = vpop.f32.mrb[0].mxu0
      %4310 = vdwg.mxu0
      %v4311 = vadd.f32 %v3735, %v4290
      %v4312 = vadd.f32 %v3736, %v4293
      %v4313 = vadd.f32 %v3737, %v4298
      %v4314 = vadd.f32 %v3738, %v4301
      %v4315 = vadd.f32 %v3739, %v4306
      %v4316 = vadd.f32 %v1990, %v4311
      %v4317 = vadd.f32 %v1991, %v4312
      %v4318 = vadd.f32 %v1992, %v4313
      %v4319 = vadd.f32 %v1993, %v4314
      %v4320 = vadd.f32 %v1994, %v4315
      %v4321 = vld [vmem:[%s885] sm:$0x1]
      %v4322 = vld [vmem:[%s888] sm:$0x1]
      %v4323 = vsel %vm1044, %v4316, 0.0
      %4324 = vadd.xlane.f32.xlu0 %v4323
      %v4325 = vpop.xlane.xlu0 %4324
      %v4326 = vsel %vm1044, %v4317, 0.0
      %4327 = vadd.xlane.f32.xlu0 %v4326
      %v4328 = vpop.xlane.xlu0 %4327
      %v4329 = vsel %vm1044, %v4318, 0.0
      %4330 = vadd.xlane.f32.xlu0 %v4329
      %v4331 = vpop.xlane.xlu0 %4330
      %v4332 = vsel %vm1044, %v4319, 0.0
      %4333 = vadd.xlane.f32.xlu0 %v4332
      %v4334 = vpop.xlane.xlu0 %4333
      %v4335 = vsel %vm1044, %v4320, 0.0
      %4336 = vadd.xlane.f32.xlu0 %v4335
      %v4337 = vpop.xlane.xlu0 %4336
      %v4338 = vmul.f32 %v4325, %v1922
      %v4339 = vmul.f32 %v4328, %v1922
      %v4340 = vmul.f32 %v4331, %v1922
      %v4341 = vmul.f32 %v4334, %v1922
      %v4342 = vmul.f32 %v4337, %v1922
      %v4343 = vsub.f32 %v4316, %v4338
      %v4344 = vsub.f32 %v4317, %v4339
      %v4345 = vsub.f32 %v4318, %v4340
      %v4346 = vsub.f32 %v4319, %v4341
      %v4347 = vsub.f32 %v4320, %v4342
      %v4348 = vmul.f32 %v4343, %v4343
      %v4349 = vmul.f32 %v4344, %v4344
      %v4350 = vmul.f32 %v4345, %v4345
      %v4351 = vmul.f32 %v4346, %v4346
      %v4352 = vmul.f32 %v4347, %v4347
      %v4353 = vsel %vm1044, %v4348, 0.0
      %4354 = vadd.xlane.f32.xlu0 %v4353
      %v4355 = vpop.xlane.xlu0 %4354
      %v4356 = vsel %vm1044, %v4349, 0.0
      %4357 = vadd.xlane.f32.xlu0 %v4356
      %v4358 = vpop.xlane.xlu0 %4357
      %v4359 = vsel %vm1044, %v4350, 0.0
      %4360 = vadd.xlane.f32.xlu0 %v4359
      %v4361 = vpop.xlane.xlu0 %4360
      %v4362 = vsel %vm1044, %v4351, 0.0
      %4363 = vadd.xlane.f32.xlu0 %v4362
      %v4364 = vpop.xlane.xlu0 %4363
      %v4365 = vsel %vm1044, %v4352, 0.0
      %4366 = vadd.xlane.f32.xlu0 %v4365
      %v4367 = vpop.xlane.xlu0 %4366
      %v4368 = vmul.f32 %v4355, %v1922
      %v4369 = vmul.f32 %v4358, %v1922
      %v4370 = vmul.f32 %v4361, %v1922
      %v4371 = vmul.f32 %v4364, %v1922
      %v4372 = vmul.f32 %v4367, %v1922
      %v4373 = vadd.f32 %v4368, 1e-05
      %v4374 = vadd.f32 %v4369, 1e-05
      %v4375 = vadd.f32 %v4370, 1e-05
      %v4376 = vadd.f32 %v4371, 1e-05
      %v4377 = vadd.f32 %v4372, 1e-05
      %v4378 = vrsqrt.pop %v4373
      %v4379 = vrsqrt.pop %v4374
      %v4380 = vrsqrt.pop %v4375
      %v4381 = vrsqrt.pop %v4376
      %v4382 = vrsqrt.pop %v4377
      %v4383 = vmul.f32 %v4343, %v4378
      %v4384 = vmul.f32 %v4344, %v4379
      %v4385 = vmul.f32 %v4345, %v4380
      %v4386 = vmul.f32 %v4346, %v4381
      %v4387 = vmul.f32 %v4347, %v4382
      %v4389 = vlaneseq
      %v4390 = vshrl.u32 %v4389, 7
      %v4391 = vsub.s32 0, %v4390
      %v4392 = vrot.slane %v4321, %v4391
      %v4394 = vmul.f32 %v4383, %v4392
      %v4395 = vmul.f32 %v4384, %v4392
      %v4396 = vmul.f32 %v4385, %v4392
      %v4397 = vmul.f32 %v4386, %v4392
      %v4398 = vmul.f32 %v4387, %v4392
      %v4400 = vlaneseq
      %v4401 = vshrl.u32 %v4400, 7
      %v4402 = vsub.s32 0, %v4401
      %v4403 = vrot.slane %v4322, %v4402
      %v4405 = vadd.f32 %v4394, %v4403
      %v4406 = vadd.f32 %v4395, %v4403
      %v4407 = vadd.f32 %v4396, %v4403
      %v4408 = vadd.f32 %v4397, %v4403
      %v4409 = vadd.f32 %v4398, %v4403
      %v4410 = vld [vmem:[%s892] sm:$0xf]
      %v4411 = vld [vmem:[%s895] sm:$0x1]
      %v4413 = vlaneseq
      %v4414 = vshrl.u32 %v4413, 7
      %v4415 = vsub.s32 0, %v4414
      %v4416 = vrot.slane %v4411, %v4415
      %4417 = vset.pattern.permute.xlu0 0
      %4418 = vperm.xlu0 %4417, %v4416
      %v4419 = vpop.permute.xlu0 %4418
      %v4422 = vsel %vm1280, %v4410, 0
      %4424 = vmatprep.subr.mxu0 0.0
      %4425 = vmatpush1.msra.mxu0 %v4405
      %4426 = vmatprep.subr.mxu0 0.0
      %4427 = vmatpush1.msra.mxu0 %v4406
      %4428 = vmatprep.subr.mxu0 0.0
      %4429 = vmatpush1.msra.mxu0 %v4407
      %4430 = vmatprep.subr.mxu0 0.0
      %4431 = vmatpush1.msra.mxu0 %v4408
      %4432 = vmatprep.subr.mxu0 0.0
      %4433 = vmatpush1.msra.mxu0 %v4409
      %4434 = vmatprep.subr.mxu0 0.0
      %4435 = vmatpush1.msra.mxu0 0.0
      %4436 = vmatprep.subr.mxu0 0.0
      %4437 = vmatpush1.msra.mxu0 0.0
      %4438 = vmatprep.subr.mxu0 0.0
      %4439 = vmatpush1.msra.mxu0 0.0
      %4440 = vmatprep.subr.mxu0 0.0
      %4441 = vmatpush1.msra.mxu0 0.0
      %4442 = vmatprep.subr.mxu0 0.0
      %4443 = vmatpush1.msra.mxu0 0.0
      %4444 = vmatprep.subr.mxu0 0.0
      %4445 = vmatpush1.msra.mxu0 0.0
      %4446 = vmatprep.subr.mxu0 0.0
      %4447 = vmatpush1.msra.mxu0 0.0
      %4448 = vmatprep.subr.mxu0 0.0
      %4449 = vmatpush1.msra.mxu0 0.0
      %4450 = vmatprep.subr.mxu0 0.0
      %4451 = vmatpush1.msra.mxu0 0.0
      %4452 = vmatprep.subr.mxu0 0.0
      %4453 = vmatpush1.msra.mxu0 0.0
      %4454 = vmatprep.subr.mxu0 0.0
      %4455 = vmatpush1.msra.mxu0 0.0
      %4456 = vmatprep.subr.mxu0 0.0
      %4457 = vmatpush1.msra.mxu0 0.0
      %4458 = vmatprep.subr.mxu0 0.0
      %4459 = vmatpush1.msra.mxu0 0.0
      %4460 = vmatprep.subr.mxu0 0.0
      %4461 = vmatpush1.msra.mxu0 0.0
      %4462 = vmatprep.subr.mxu0 0.0
      %4463 = vmatpush1.msra.mxu0 0.0
      %4464 = vmatprep.subr.mxu0 0.0
      %4465 = vmatpush1.msra.mxu0 0.0
      %4466 = vmatprep.subr.mxu0 0.0
      %4467 = vmatpush1.msra.mxu0 0.0
      %4468 = vmatprep.subr.mxu0 0.0
      %4469 = vmatpush1.msra.mxu0 0.0
      %4470 = vmatprep.subr.mxu0 0.0
      %4471 = vmatpush1.msra.mxu0 0.0
      %4472 = vmatprep.subr.mxu0 0.0
      %4473 = vmatpush1.msra.mxu0 0.0
      %4474 = vmatprep.subr.mxu0 0.0
      %4475 = vmatpush1.msra.mxu0 0.0
      %4476 = vmatprep.subr.mxu0 0.0
      %4477 = vmatpush1.msra.mxu0 0.0
      %4478 = vmatprep.subr.mxu0 0.0
      %4479 = vmatpush1.msra.mxu0 0.0
      %4480 = vmatprep.subr.mxu0 0.0
      %4481 = vmatpush1.msra.mxu0 0.0
      %4482 = vmatprep.subr.mxu0 0.0
      %4483 = vmatpush1.msra.mxu0 0.0
      %4484 = vmatprep.subr.mxu0 0.0
      %4485 = vmatpush1.msra.mxu0 0.0
      %4486 = vmatprep.subr.mxu0 0.0
      %4487 = vmatpush1.msra.mxu0 0.0
      %4488 = vmatprep.mubr.f32.mxu0 0.0
      %4489 = vmatmul.mubr.f32.gmra.mrb[0].mxu0 %v4422
      %v4490 = vpop.f32.mrb[0].mxu0
      %v4491 = vadd.f32 %v4419, %v4490
      %v4492 = vpop.f32.mrb[0].mxu0
      %4493 = vdwg.mxu0
      %v4494 = vld [vmem:[%s900] sm:$0xff]
      %v4495 = vld [vmem:[%s900 + $0x8] sm:$0xff]
      %v4497 = vsel %vm1044, %v4491, 0
      %4499 = vmatprep.subr.mxu0 0.0
      %4500 = vmatpush1.msra.mxu0 %v4494
      %4501 = vmatprep.subr.mxu0 0.0
      %4502 = vmatpush1.msra.mxu0 %v4495
      %4503 = vmatprep.subr.mxu0 0.0
      %4504 = vmatpush1.msra.mxu0 0.0
      %4505 = vmatprep.subr.mxu0 0.0
      %4506 = vmatpush1.msra.mxu0 0.0
      %4507 = vmatprep.subr.mxu0 0.0
      %4508 = vmatpush1.msra.mxu0 0.0
      %4509 = vmatprep.subr.mxu0 0.0
      %4510 = vmatpush1.msra.mxu0 0.0
      %4511 = vmatprep.subr.mxu0 0.0
      %4512 = vmatpush1.msra.mxu0 0.0
      %4513 = vmatprep.subr.mxu0 0.0
      %4514 = vmatpush1.msra.mxu0 0.0
      %4515 = vmatprep.subr.mxu0 0.0
      %4516 = vmatpush1.msra.mxu0 0.0
      %4517 = vmatprep.subr.mxu0 0.0
      %4518 = vmatpush1.msra.mxu0 0.0
      %4519 = vmatprep.subr.mxu0 0.0
      %4520 = vmatpush1.msra.mxu0 0.0
      %4521 = vmatprep.subr.mxu0 0.0
      %4522 = vmatpush1.msra.mxu0 0.0
      %4523 = vmatprep.subr.mxu0 0.0
      %4524 = vmatpush1.msra.mxu0 0.0
      %4525 = vmatprep.subr.mxu0 0.0
      %4526 = vmatpush1.msra.mxu0 0.0
      %4527 = vmatprep.subr.mxu0 0.0
      %4528 = vmatpush1.msra.mxu0 0.0
      %4529 = vmatprep.subr.mxu0 0.0
      %4530 = vmatpush1.msra.mxu0 0.0
      %4531 = vmatprep.subr.mxu0 0.0
      %4532 = vmatpush1.msra.mxu0 0.0
      %4533 = vmatprep.subr.mxu0 0.0
      %4534 = vmatpush1.msra.mxu0 0.0
      %4535 = vmatprep.subr.mxu0 0.0
      %4536 = vmatpush1.msra.mxu0 0.0
      %4537 = vmatprep.subr.mxu0 0.0
      %4538 = vmatpush1.msra.mxu0 0.0
      %4539 = vmatprep.subr.mxu0 0.0
      %4540 = vmatpush1.msra.mxu0 0.0
      %4541 = vmatprep.subr.mxu0 0.0
      %4542 = vmatpush1.msra.mxu0 0.0
      %4543 = vmatprep.subr.mxu0 0.0
      %4544 = vmatpush1.msra.mxu0 0.0
      %4545 = vmatprep.subr.mxu0 0.0
      %4546 = vmatpush1.msra.mxu0 0.0
      %4547 = vmatprep.subr.mxu0 0.0
      %4548 = vmatpush1.msra.mxu0 0.0
      %4549 = vmatprep.subr.mxu0 0.0
      %4550 = vmatpush1.msra.mxu0 0.0
      %4551 = vmatprep.subr.mxu0 0.0
      %4552 = vmatpush1.msra.mxu0 0.0
      %4553 = vmatprep.subr.mxu0 0.0
      %4554 = vmatpush1.msra.mxu0 0.0
      %4555 = vmatprep.subr.mxu0 0.0
      %4556 = vmatpush1.msra.mxu0 0.0
      %4557 = vmatprep.subr.mxu0 0.0
      %4558 = vmatpush1.msra.mxu0 0.0
      %4559 = vmatprep.subr.mxu0 0.0
      %4560 = vmatpush1.msra.mxu0 0.0
      %4561 = vmatprep.subr.mxu0 0.0
      %4562 = vmatpush1.msra.mxu0 0.0
      %4563 = vmatprep.mubr.f32.mxu0 0.0
      %4564 = vmatmul.mubr.f32.gmra.mrb[0].mxu0 %v4497
      %v4565 = vpop.f32.mrb[0].mxu0
      %v4566 = vadd.f32 0.0, %v4565
      %v4567 = vpop.f32.mrb[0].mxu0
      %4568 = vdwg.mxu0
      %vm4569 = vcmask 3072
      %4570 = vst.msk [vmem:[%s904] sm:$0xf] %vm4569, %v4566
      %p4571 = scmp.lt.s32.totalorder %s31, 2
      %s4572 = scalar_select %p4571, %s31, 2
      %s4573 = smul.addr %s4572, 4
      %s4574 = scalar_lea.vmem %s20, %s4573
      // Predicated region
      $region101: #{tpu_custom_call.1} parent=99 // pred_check
        %p4575 = pneg %p559
      $region102: #{tpu_custom_call.1} parent=99 // pred_check_branch
        %4577 = sbr.rel (%p4575) target = $region104
      $region103: #{tpu_custom_call.1} parent=99 // pred_region
        _
      $region104: #{tpu_custom_call.1} parent=99 // pred_fallthru
        _
    $region100: #{tpu_custom_call.1} parent=5 // pred_fallthru
      _
    %p4578 = scmp.le.s32.totalorder 2, %s26
    // Predicated region
    $region105: #{tpu_custom_call.1} parent=5 // pred_check
      %p4579 = pneg %p4578
    $region106: #{tpu_custom_call.1} parent=5 // pred_check_branch
      %4581 = sbr.rel (%p4579) target = $region108
    $region107: #{tpu_custom_call.1} parent=5 // pred_region
      %s4582 = ssub.s32 %s26, 2
      // Predicated region
      $region109: #{tpu_custom_call.1} parent=107 // pred_check
        %p4583 = pneg %p565
      $region110: #{tpu_custom_call.1} parent=107 // pred_check_branch
        %4585 = sbr.rel (%p4583) target = $region112
      $region111: #{tpu_custom_call.1} parent=107 // pred_region
        %p4586 = scmp.lt.s32.totalorder %s32, 2
        %s4587 = scalar_select %p4586, %s32, 2
        %s4588 = smul.addr %s4587, 4
        %s4589 = scalar_lea.vmem %s20, %s4588
      $region112: #{tpu_custom_call.1} parent=107 // pred_fallthru
        _
    $region108: #{tpu_custom_call.1} parent=5 // pred_fallthru
      _
  $region6: #{tpu_custom_call.1} parent=0 // loop_footer
    %s30 = sadd.s32 1, %s26
  $region7: #{tpu_custom_call.1} parent=0 // loop_footer_branch
    %25 = sbr.rel target = $region3
  $region8: #{tpu_custom_call.1} parent=0 // loop_exit
    _

</llo_original>
